<compile_context>
chip_gen: v5e
topology: v5e:2x2
jax: 0.10.0
libtpu: 0.0.40
codegen_flags: <defaults>
</compile_context>

<pallas_src>
import math

import jax
import jax.numpy as jnp
from jax.experimental import pallas as pl
from jax.experimental.pallas import tpu as pltpu

EMB_DIM = 512            # InceptionResnetV1 embedding size
HIDDEN = 256             # fc hidden size
B, C, H, W = 2, 4, 16, 16
D_IN = C * H * W         # 1024 flattened pixels (stand-in embedding input)
OUT_LANES = 128          # lane-dense output slab; real result lives in column 0


# ----------------------------------------------------------------------------
# Fused kernel: embed(x1), embed(x2) -> L2 normalize -> fc head -> sigmoid
# ----------------------------------------------------------------------------
def _siamese_kernel(x1_ref, x2_ref, wq_ref, w1_ref, misc_ref, o_ref):
    # --- dequantize the (stand-in) embedding weight --------------------------
    # int8 -> bf16 is exact; per-column f32 scale rounds to bf16 (weights are
    # bf16 on the MXU anyway).  Storing int8 halves the dominant weight DMA.
    scale = misc_ref[0:1, :].astype(jnp.bfloat16)                     # (1, 512)
    w_emb = wq_ref[...].astype(jnp.bfloat16) * scale                  # (D_IN, 512)

    # --- embeddings: two small matmuls against the resident w_emb ------------
    x1 = x1_ref[...].astype(jnp.bfloat16)                             # (B, D_IN)
    x2 = x2_ref[...].astype(jnp.bfloat16)
    h1 = jnp.dot(x1, w_emb, preferred_element_type=jnp.float32)       # (B, 512) f32
    h2 = jnp.dot(x2, w_emb, preferred_element_type=jnp.float32)       # (B, 512) f32

    # Row-wise L2 normalize: rsqrt(max(|h|^2, 1e-24)) == 1 / max(|h|, 1e-12),
    # matching F.normalize(p=2, dim=1, eps=1e-12).
    h1 = h1 * jax.lax.rsqrt(jnp.maximum(jnp.sum(h1 * h1, -1, keepdims=True), 1e-24))
    h2 = h2 * jax.lax.rsqrt(jnp.maximum(jnp.sum(h2 * h2, -1, keepdims=True), 1e-24))

    # --- head Linear(1024, 256): concat folded algebraically -----------------
    # cat(h1, h2, dim=1) @ W1 == h1 @ W1[:512, :] + h2 @ W1[512:, :]
    # The 512-row split of w1 is sublane-tile aligned (512 % 16 == 0 for bf16).
    b1 = misc_ref[1:2, :HIDDEN]                                       # (1, 256) f32
    z1 = (jnp.dot(h1.astype(jnp.bfloat16), w1_ref[:EMB_DIM, :],
                  preferred_element_type=jnp.float32)
          + jnp.dot(h2.astype(jnp.bfloat16), w1_ref[EMB_DIM:, :],
                    preferred_element_type=jnp.float32)
          + b1)                                                       # (B, 256) f32
    a1 = jnp.maximum(z1, 0.0)                                         # ReLU

    # --- head Linear(256, 1) on the VPU (avoid an N=1 MXU matmul) ------------
    w2 = misc_ref[1:2, HIDDEN:]                                       # (1, 256) f32
    b2 = misc_ref[2:3, 0:1]                                           # (1, 1)  f32
    z2 = jnp.sum(a1 * w2, axis=-1, keepdims=True) + b2                # (B, 1)
    y = jax.nn.sigmoid(z2)                                            # f32 epilogue

    # --- lane-dense writeback: broadcast each row's score across 128 lanes ---
    o_ref[...] = jnp.broadcast_to(y, o_ref.shape).astype(o_ref.dtype)


# ----------------------------------------------------------------------------
# Parameter init (deterministic, mirrors the PyTorch __init__):
#   fc Linear weights: xavier_uniform_, biases: zeros_.
#   embedding stand-in weight: deterministic scaled normal, quantized to int8
#   with per-column scales (dequantized in-kernel).
# ----------------------------------------------------------------------------
def init_params(key):
    k_emb, k_w1, k_w2 = jax.random.split(key, 3)

    w_emb = (jax.random.normal(k_emb, (D_IN, EMB_DIM), jnp.float32)
             / math.sqrt(D_IN))
    # Per-column symmetric int8 quantization of the stand-in embedding weight.
    scale = jnp.maximum(jnp.max(jnp.abs(w_emb), axis=0), 1e-12) / 127.0     # (512,)
    w_emb_q = jnp.clip(jnp.round(w_emb / scale[None, :]), -127, 127).astype(jnp.int8)

    # nn.Linear(1024, 256): stored transposed as (in, out); xavier_uniform_.
    bound1 = math.sqrt(6.0 / (2 * EMB_DIM + HIDDEN))
    w1 = jax.random.uniform(k_w1, (2 * EMB_DIM, HIDDEN), jnp.float32,
                            minval=-bound1, maxval=bound1).astype(jnp.bfloat16)
    b1 = jnp.zeros((HIDDEN,), jnp.float32)

    # nn.Linear(256, 1): a (256,) row for the in-kernel VPU reduction.
    bound2 = math.sqrt(6.0 / (HIDDEN + 1))
    w2 = jax.random.uniform(k_w2, (HIDDEN,), jnp.float32,
                            minval=-bound2, maxval=bound2)
    b2 = jnp.zeros((), jnp.float32)

    # Coalesce all tiny f32 params into ONE operand (fewer prologue DMAs):
    #   row 0       : w_emb dequant scale (512)
    #   row 1, :256 : b1      row 1, 256: : w2      row 2, col 0 : b2
    misc = jnp.zeros((3, EMB_DIM), jnp.float32)
    misc = misc.at[0, :].set(scale)
    misc = misc.at[1, :HIDDEN].set(b1)
    misc = misc.at[1, HIDDEN:].set(w2)
    misc = misc.at[2, 0].set(b2)

    return w_emb_q, w1, misc


@jax.jit
def siamese_forward_slab(x1, x2, w_emb_q, w1, misc):
    """Lane-dense (B, 128) output slab; column 0 holds the sigmoid score.

    Returning the slab avoids paying a second XLA launch + HBM round trip just
    to narrow the result to (B, 1); consumers that can read column 0 directly
    should use this entry point.
    """
    b = x1.shape[0]
    # NCHW -> (B, D_IN) flatten is a contiguous reshape (bitcast, no launch,
    # no concat of the two images).
    x1f = x1.reshape(b, -1)
    x2f = x2.reshape(b, -1)

    return pl.pallas_call(
        _siamese_kernel,
        out_shape=jax.ShapeDtypeStruct((b, OUT_LANES), jnp.float32),
        in_specs=[
            pl.BlockSpec(memory_space=pltpu.MemorySpace.VMEM),   # x1f  (B, 1024) f32
            pl.BlockSpec(memory_space=pltpu.MemorySpace.VMEM),   # x2f  (B, 1024) f32
            pl.BlockSpec(memory_space=pltpu.MemorySpace.VMEM),   # w_emb_q (1024, 512) int8
            pl.BlockSpec(memory_space=pltpu.MemorySpace.VMEM),   # w1   (1024, 256) bf16
            pl.BlockSpec(memory_space=pltpu.MemorySpace.VMEM),   # misc (3, 512) f32
        ],
        out_specs=pl.BlockSpec(memory_space=pltpu.MemorySpace.VMEM),
    )(x1f, x2f, w_emb_q, w1, misc)


def siamese_forward(x1, x2, w_emb_q, w1, misc):
    """PyTorch-equivalent API: (B, 1) sigmoid scores (narrowing done outside jit)."""
    return siamese_forward_slab(x1, x2, w_emb_q, w1, misc)[:, :1]


if __name__ == "__main__":
    key = jax.random.PRNGKey(0)
    k_x1, k_x2, k_p = jax.random.split(key, 3)

    x1 = jax.random.normal(k_x1, (B, C, H, W), jnp.float32)
    x2 = jax.random.normal(k_x2, (B, C, H, W), jnp.float32)
    params = init_params(k_p)

    slab = jax.block_until_ready(siamese_forward_slab(x1, x2, *params))
    out = slab[:, :1]                       # PyTorch-equivalent (B, 1) output

    assert slab.shape == (B, OUT_LANES), slab.shape
    assert out.shape == (B, 1), out.shape
    assert out.dtype == jnp.float32
    assert bool(jnp.all((out > 0.0) & (out < 1.0)))
    # Every lane of a row carries the same broadcast score.
    assert bool(jnp.all(slab == slab[:, :1]))
    print("KERNEL_OK")
</pallas_src>

<mosaic_0001>
module attributes {stable_mosaic.version = 11 : i64} {
  func.func @_siamese_kernel(%arg0: memref<2x1024xf32, #tpu.memory_space<vmem>>, %arg1: memref<2x1024xf32, #tpu.memory_space<vmem>>, %arg2: memref<1024x512xi8, #tpu.memory_space<vmem>>, %arg3: memref<1024x256xbf16, #tpu.memory_space<vmem>>, %arg4: memref<3x512xf32, #tpu.memory_space<vmem>>, %arg5: memref<2x128xf32, #tpu.memory_space<vmem>>) attributes {dimension_semantics = [], scalar_prefetch = 0 : i64, scratch_operands = 0 : i64, tpu.core_type = #tpu.core_type<tc>} {
    %c0 = arith.constant 0 : index
    %c0_0 = arith.constant 0 : index
    %0 = vector.load %arg4[%c0, %c0_0] : memref<3x512xf32, #tpu.memory_space<vmem>>, vector<1x512xf32>
    %1 = arith.truncf %0 : vector<1x512xf32> to vector<1x512xbf16>
    %c0_1 = arith.constant 0 : index
    %c0_2 = arith.constant 0 : index
    %2 = vector.load %arg2[%c0_1, %c0_2] : memref<1024x512xi8, #tpu.memory_space<vmem>>, vector<1024x512xi8>
    %3 = arith.sitofp %2 : vector<1024x512xi8> to vector<1024x512xbf16>
    %4 = vector.broadcast %1 : vector<1x512xbf16> to vector<1024x512xbf16>
    %5 = arith.mulf %3, %4 : vector<1024x512xbf16>
    %c0_3 = arith.constant 0 : index
    %c0_4 = arith.constant 0 : index
    %6 = vector.load %arg0[%c0_3, %c0_4] : memref<2x1024xf32, #tpu.memory_space<vmem>>, vector<2x1024xf32>
    %7 = arith.truncf %6 : vector<2x1024xf32> to vector<2x1024xbf16>
    %c0_5 = arith.constant 0 : index
    %c0_6 = arith.constant 0 : index
    %8 = vector.load %arg1[%c0_5, %c0_6] : memref<2x1024xf32, #tpu.memory_space<vmem>>, vector<2x1024xf32>
    %9 = arith.truncf %8 : vector<2x1024xf32> to vector<2x1024xbf16>
    %cst = arith.constant dense<0.000000e+00> : vector<2x512xf32>
    %10 = tpu.matmul %7, %5, %cst {dimension_numbers = #tpu.dot_dimension_numbers<[1], [0], [0], [1], [0, 0, 1, 1], [], []>} : vector<2x1024xbf16>, vector<1024x512xbf16>, vector<2x512xf32> -> vector<2x512xf32>
    %cst_7 = arith.constant dense<0.000000e+00> : vector<2x512xf32>
    %11 = tpu.matmul %9, %5, %cst_7 {dimension_numbers = #tpu.dot_dimension_numbers<[1], [0], [0], [1], [0, 0, 1, 1], [], []>} : vector<2x1024xbf16>, vector<1024x512xbf16>, vector<2x512xf32> -> vector<2x512xf32>
    %12 = arith.mulf %10, %10 : vector<2x512xf32>
    %cst_8 = arith.constant dense<0.000000e+00> : vector<2xf32>
    %13 = vector.multi_reduction <add>, %12, %cst_8 [1] : vector<2x512xf32> to vector<2xf32>
    %14 = vector.shape_cast %13 : vector<2xf32> to vector<2x1xf32>
    %cst_9 = arith.constant 1.000000e-24 : f32
    %15 = vector.broadcast %cst_9 : f32 to vector<2x1xf32>
    %16 = arith.maximumf %14, %15 : vector<2x1xf32>
    %17 = math.rsqrt %16 : vector<2x1xf32>
    %18 = vector.broadcast %17 : vector<2x1xf32> to vector<2x512xf32>
    %19 = arith.mulf %10, %18 : vector<2x512xf32>
    %20 = arith.mulf %11, %11 : vector<2x512xf32>
    %cst_10 = arith.constant dense<0.000000e+00> : vector<2xf32>
    %21 = vector.multi_reduction <add>, %20, %cst_10 [1] : vector<2x512xf32> to vector<2xf32>
    %22 = vector.shape_cast %21 : vector<2xf32> to vector<2x1xf32>
    %cst_11 = arith.constant 1.000000e-24 : f32
    %23 = vector.broadcast %cst_11 : f32 to vector<2x1xf32>
    %24 = arith.maximumf %22, %23 : vector<2x1xf32>
    %25 = math.rsqrt %24 : vector<2x1xf32>
    %26 = vector.broadcast %25 : vector<2x1xf32> to vector<2x512xf32>
    %27 = arith.mulf %11, %26 : vector<2x512xf32>
    %c1 = arith.constant 1 : index
    %c0_12 = arith.constant 0 : index
    %28 = vector.load %arg4[%c1, %c0_12] : memref<3x512xf32, #tpu.memory_space<vmem>>, vector<1x256xf32>
    %29 = arith.truncf %19 : vector<2x512xf32> to vector<2x512xbf16>
    %c0_13 = arith.constant 0 : index
    %c0_14 = arith.constant 0 : index
    %30 = vector.load %arg3[%c0_13, %c0_14] : memref<1024x256xbf16, #tpu.memory_space<vmem>>, vector<512x256xbf16>
    %cst_15 = arith.constant dense<0.000000e+00> : vector<2x256xf32>
    %31 = tpu.matmul %29, %30, %cst_15 {dimension_numbers = #tpu.dot_dimension_numbers<[1], [0], [0], [1], [0, 0, 1, 1], [], []>} : vector<2x512xbf16>, vector<512x256xbf16>, vector<2x256xf32> -> vector<2x256xf32>
    %32 = arith.truncf %27 : vector<2x512xf32> to vector<2x512xbf16>
    %c512 = arith.constant 512 : index
    %c0_16 = arith.constant 0 : index
    %33 = vector.load %arg3[%c512, %c0_16] : memref<1024x256xbf16, #tpu.memory_space<vmem>>, vector<512x256xbf16>
    %cst_17 = arith.constant dense<0.000000e+00> : vector<2x256xf32>
    %34 = tpu.matmul %32, %33, %cst_17 {dimension_numbers = #tpu.dot_dimension_numbers<[1], [0], [0], [1], [0, 0, 1, 1], [], []>} : vector<2x512xbf16>, vector<512x256xbf16>, vector<2x256xf32> -> vector<2x256xf32>
    %35 = arith.addf %31, %34 : vector<2x256xf32>
    %36 = vector.broadcast %28 : vector<1x256xf32> to vector<2x256xf32>
    %37 = arith.addf %35, %36 : vector<2x256xf32>
    %cst_18 = arith.constant 0.000000e+00 : f32
    %38 = vector.broadcast %cst_18 : f32 to vector<2x256xf32>
    %39 = arith.maximumf %37, %38 : vector<2x256xf32>
    %c1_19 = arith.constant 1 : index
    %c256 = arith.constant 256 : index
    %40 = vector.load %arg4[%c1_19, %c256] : memref<3x512xf32, #tpu.memory_space<vmem>>, vector<1x256xf32>
    %c2 = arith.constant 2 : index
    %c0_20 = arith.constant 0 : index
    %41 = vector.load %arg4[%c2, %c0_20] : memref<3x512xf32, #tpu.memory_space<vmem>>, vector<1x1xf32>
    %42 = vector.broadcast %40 : vector<1x256xf32> to vector<2x256xf32>
    %43 = arith.mulf %39, %42 : vector<2x256xf32>
    %cst_21 = arith.constant dense<0.000000e+00> : vector<2xf32>
    %44 = vector.multi_reduction <add>, %43, %cst_21 [1] : vector<2x256xf32> to vector<2xf32>
    %45 = vector.shape_cast %44 : vector<2xf32> to vector<2x1xf32>
    %46 = vector.broadcast %41 : vector<1x1xf32> to vector<2x1xf32>
    %47 = arith.addf %45, %46 : vector<2x1xf32>
    %48 = arith.negf %47 : vector<2x1xf32>
    %49 = math.exp %48 : vector<2x1xf32>
    %cst_22 = arith.constant 1.000000e+00 : f32
    %50 = vector.broadcast %cst_22 : f32 to vector<2x1xf32>
    %51 = arith.addf %50, %49 : vector<2x1xf32>
    %52 = arith.divf %50, %51 : vector<2x1xf32>
    %53 = vector.shape_cast %52 : vector<2x1xf32> to vector<2x1xf32>
    %54 = vector.broadcast %53 : vector<2x1xf32> to vector<2x128xf32>
    %c0_23 = arith.constant 0 : index
    %c0_24 = arith.constant 0 : index
    %55 = vector.load %arg5[%c0_23, %c0_24] : memref<2x128xf32, #tpu.memory_space<vmem>>, vector<2x128xf32>
    tpu.vector_store %arg5[%c0_23, %c0_24], %54 {strides = array<i32>} : memref<2x128xf32, #tpu.memory_space<vmem>>, vector<2x128xf32>,
    return
  }
}

</mosaic_0001>

<llo_original>
// kernel: siamese_forward_slab.1
$region0: #{siamese_forward_slab.1}
  #allocation0 [shape = 'u32[]', space=smem, size = 0x4, offset = 0x4, fixed_abs, tag = 'smem constant byte address 0x4 - core index']
  #allocation1 [shape = 'u32[72,128]{1,0:T(1,128)}', space=vmem, size = 0x9000, scoped, tag = 'internal scratch']
  %s0 = inlined_call_operand.vmem [shape: f32[2,1024], index: 0, kind: input, shape index: {}]
  %s1 = inlined_call_operand.vmem [shape: f32[2,1024], index: 1, kind: input, shape index: {}]
  %s2 = inlined_call_operand.hbm [shape: s8[1024,512], index: 2, kind: input, shape index: {}]
  %s3 = inlined_call_operand.hbm [shape: bf16[1024,256], index: 3, kind: input, shape index: {}]
  %s4 = inlined_call_operand.vmem [shape: f32[3,512], index: 4, kind: input, shape index: {}]
  %s5 = inlined_call_operand.hbm [shape: f32[2,128], index: 5, kind: output, shape index: {}]
  %s6 = sld [smem:[#allocation0]]
  $region38: #{siamese_forward_slab.1} parent=0
    _
  %s8 = ssub.s32 1, %s6
  %s9 = scalar_select 0, %s8, %s6
  $region1: #{siamese_forward_slab.1} parent=0
    #allocation2 [shape = 'u8[524288]{0}', space=vmem, size = 0x80000, scoped, tag = 'input window, operand 2, single buffered']
    #allocation3 [shape = 's32[1]{0}', space=sflag, size = 0x4, scoped, tag = 'scoped memory for siamese_forward_slab.1']
    #allocation4 [shape = 's32[1]{0}', space=sflag, size = 0x4, scoped, tag = 'scoped memory for siamese_forward_slab.1']
    #allocation5 [shape = 'u8[524288]{0}', space=vmem, size = 0x80000, scoped, tag = 'input window, operand 3, single buffered']
    #allocation6 [shape = 's32[1]{0}', space=sflag, size = 0x4, scoped, tag = 'scoped memory for siamese_forward_slab.1']
    #allocation7 [shape = 'u8[1024]{0}', space=vmem, size = 0x400, scoped, tag = 'output window, operand 0, single buffered']
    %10 = vsyncpa [#allocation3], 0
    %11 = vsyncpa [#allocation6], 0
    %12 = vsyncpa [#allocation4], 0
    // Predicated region
    $region2: #{siamese_forward_slab.1} parent=1 // pred_check
      _
    $region3: #{siamese_forward_slab.1} parent=1 // pred_check_branch
      %14 = sbr.rel (0) target = $region5
    $region4: #{siamese_forward_slab.1} parent=1 // pred_region
      _
    $region5: #{siamese_forward_slab.1} parent=1 // pred_fallthru
      _
    // Predicated region
    $region6: #{siamese_forward_slab.1} parent=1 // pred_check
      _
    $region7: #{siamese_forward_slab.1} parent=1 // pred_check_branch
      %16 = sbr.rel (0) target = $region9
    $region8: #{siamese_forward_slab.1} parent=1 // pred_region
      _
    $region9: #{siamese_forward_slab.1} parent=1 // pred_fallthru
      _
    // Predicated region
    $region10: #{siamese_forward_slab.1} parent=1 // pred_check
      _
    $region11: #{siamese_forward_slab.1} parent=1 // pred_check_branch
      %18 = sbr.rel (0) target = $region13
    $region12: #{siamese_forward_slab.1} parent=1 // pred_region
      %20 = vsyncadd [#allocation3], 0
      %s21 = sshll.u32 %s2, 4
      %s22 = int_to_ptr.hbm [resolvable:$true] %s21
      %s23 = sshll.u32 [#allocation2], 4
      %s24 = int_to_ptr.vmem [resolvable:$true] %s23
      %29 = dma.hbm_to_vmem [thread:$0]  %s22, 16384, %s24, [#allocation3], 512, 512, 32
    $region13: #{siamese_forward_slab.1} parent=1 // pred_fallthru
      _
    // Predicated region
    $region14: #{siamese_forward_slab.1} parent=1 // pred_check
      _
    $region15: #{siamese_forward_slab.1} parent=1 // pred_check_branch
      %31 = sbr.rel (0) target = $region17
    $region16: #{siamese_forward_slab.1} parent=1 // pred_region
      %33 = vsyncadd [#allocation6], 0
      %s34 = sshll.u32 %s3, 4
      %s35 = int_to_ptr.hbm [resolvable:$true] %s34
      %s36 = sshll.u32 [#allocation5], 4
      %s37 = int_to_ptr.vmem [resolvable:$true] %s36
      %42 = dma.hbm_to_vmem [thread:$0]  %s35, 16384, %s37, [#allocation6], 128, 128, 8
    $region17: #{siamese_forward_slab.1} parent=1 // pred_fallthru
      _
    // Predicated region
    $region18: #{siamese_forward_slab.1} parent=1 // pred_check
      _
    $region19: #{siamese_forward_slab.1} parent=1 // pred_check_branch
      %44 = sbr.rel (0) target = $region21
    $region20: #{siamese_forward_slab.1} parent=1 // pred_region
      _
    $region21: #{siamese_forward_slab.1} parent=1 // pred_fallthru
      _
    // Predicated region
    $region22: #{siamese_forward_slab.1} parent=1 // pred_check
      _
    $region23: #{siamese_forward_slab.1} parent=1 // pred_check_branch
      %46 = sbr.rel (0) target = $region25
    $region24: #{siamese_forward_slab.1} parent=1 // pred_region
      %48 = dma.done [#allocation3], 16384
    $region25: #{siamese_forward_slab.1} parent=1 // pred_fallthru
      _
    // Predicated region
    $region26: #{siamese_forward_slab.1} parent=1 // pred_check
      _
    $region27: #{siamese_forward_slab.1} parent=1 // pred_check_branch
      %50 = sbr.rel (0) target = $region29
    $region28: #{siamese_forward_slab.1} parent=1 // pred_region
      %52 = dma.done [#allocation6], 16384
    $region29: #{siamese_forward_slab.1} parent=1 // pred_fallthru
      _
    %v53 = vld [vmem:[%s4] ss:$4 sm:$0xf]
    %v55 = vperm.slane %v53, 0
    %v56 = vperm.slane %v53, 1
    %v57 = vperm.slane %v53, 2
    %v58 = vperm.slane %v53, 3
    %v63 = vpack.c.bf16 %v56, %v55
    %v64 = vpack.c.bf16 %v58, %v57
    %v65 = vld [vmem:[#allocation2] sm:$0xff]
    %v66 = vld [vmem:[#allocation2 + $0x8] sm:$0xff]
    %v67 = vld [vmem:[#allocation2 + $0x10] sm:$0xff]
    %v68 = vld [vmem:[#allocation2 + $0x18] sm:$0xff]
    %v69 = vld [vmem:[#allocation2 + $0x20] sm:$0xff]
    %v70 = vld [vmem:[#allocation2 + $0x28] sm:$0xff]
    %v71 = vld [vmem:[#allocation2 + $0x30] sm:$0xff]
    %v72 = vld [vmem:[#allocation2 + $0x38] sm:$0xff]
    %v73 = vld [vmem:[#allocation2 + $0x40] sm:$0xff]
    %v74 = vld [vmem:[#allocation2 + $0x48] sm:$0xff]
    %v75 = vld [vmem:[#allocation2 + $0x50] sm:$0xff]
    %v76 = vld [vmem:[#allocation2 + $0x58] sm:$0xff]
    %v77 = vld [vmem:[#allocation2 + $0x60] sm:$0xff]
    %v78 = vld [vmem:[#allocation2 + $0x68] sm:$0xff]
    %v79 = vld [vmem:[#allocation2 + $0x70] sm:$0xff]
    %v80 = vld [vmem:[#allocation2 + $0x78] sm:$0xff]
    %v81 = vld [vmem:[#allocation2 + $0x80] sm:$0xff]
    %v82 = vld [vmem:[#allocation2 + $0x88] sm:$0xff]
    %v83 = vld [vmem:[#allocation2 + $0x90] sm:$0xff]
    %v84 = vld [vmem:[#allocation2 + $0x98] sm:$0xff]
    %v85 = vld [vmem:[#allocation2 + $0xa0] sm:$0xff]
    %v86 = vld [vmem:[#allocation2 + $0xa8] sm:$0xff]
    %v87 = vld [vmem:[#allocation2 + $0xb0] sm:$0xff]
    %v88 = vld [vmem:[#allocation2 + $0xb8] sm:$0xff]
    %v89 = vld [vmem:[#allocation2 + $0xc0] sm:$0xff]
    %v90 = vld [vmem:[#allocation2 + $0xc8] sm:$0xff]
    %v91 = vld [vmem:[#allocation2 + $0xd0] sm:$0xff]
    %v92 = vld [vmem:[#allocation2 + $0xd8] sm:$0xff]
    %v93 = vld [vmem:[#allocation2 + $0xe0] sm:$0xff]
    %v94 = vld [vmem:[#allocation2 + $0xe8] sm:$0xff]
    %v95 = vld [vmem:[#allocation2 + $0xf0] sm:$0xff]
    %v96 = vld [vmem:[#allocation2 + $0xf8] sm:$0xff]
    %v97 = vld [vmem:[#allocation2 + $0x100] sm:$0xff]
    %v98 = vld [vmem:[#allocation2 + $0x108] sm:$0xff]
    %v99 = vld [vmem:[#allocation2 + $0x110] sm:$0xff]
    %v100 = vld [vmem:[#allocation2 + $0x118] sm:$0xff]
    %v101 = vld [vmem:[#allocation2 + $0x120] sm:$0xff]
    %v102 = vld [vmem:[#allocation2 + $0x128] sm:$0xff]
    %v103 = vld [vmem:[#allocation2 + $0x130] sm:$0xff]
    %v104 = vld [vmem:[#allocation2 + $0x138] sm:$0xff]
    %v105 = vld [vmem:[#allocation2 + $0x140] sm:$0xff]
    %v106 = vld [vmem:[#allocation2 + $0x148] sm:$0xff]
    %v107 = vld [vmem:[#allocation2 + $0x150] sm:$0xff]
    %v108 = vld [vmem:[#allocation2 + $0x158] sm:$0xff]
    %v109 = vld [vmem:[#allocation2 + $0x160] sm:$0xff]
    %v110 = vld [vmem:[#allocation2 + $0x168] sm:$0xff]
    %v111 = vld [vmem:[#allocation2 + $0x170] sm:$0xff]
    %v112 = vld [vmem:[#allocation2 + $0x178] sm:$0xff]
    %v113 = vld [vmem:[#allocation2 + $0x180] sm:$0xff]
    %v114 = vld [vmem:[#allocation2 + $0x188] sm:$0xff]
    %v115 = vld [vmem:[#allocation2 + $0x190] sm:$0xff]
    %v116 = vld [vmem:[#allocation2 + $0x198] sm:$0xff]
    %v117 = vld [vmem:[#allocation2 + $0x1a0] sm:$0xff]
    %v118 = vld [vmem:[#allocation2 + $0x1a8] sm:$0xff]
    %v119 = vld [vmem:[#allocation2 + $0x1b0] sm:$0xff]
    %v120 = vld [vmem:[#allocation2 + $0x1b8] sm:$0xff]
    %v121 = vld [vmem:[#allocation2 + $0x1c0] sm:$0xff]
    %v122 = vld [vmem:[#allocation2 + $0x1c8] sm:$0xff]
    %v123 = vld [vmem:[#allocation2 + $0x1d0] sm:$0xff]
    %v124 = vld [vmem:[#allocation2 + $0x1d8] sm:$0xff]
    %v125 = vld [vmem:[#allocation2 + $0x1e0] sm:$0xff]
    %v126 = vld [vmem:[#allocation2 + $0x1e8] sm:$0xff]
    %v127 = vld [vmem:[#allocation2 + $0x1f0] sm:$0xff]
    %v128 = vld [vmem:[#allocation2 + $0x1f8] sm:$0xff]
    %v129 = vld [vmem:[#allocation2 + $0x200] sm:$0xff]
    %v130 = vld [vmem:[#allocation2 + $0x208] sm:$0xff]
    %v131 = vld [vmem:[#allocation2 + $0x210] sm:$0xff]
    %v132 = vld [vmem:[#allocation2 + $0x218] sm:$0xff]
    %v133 = vld [vmem:[#allocation2 + $0x220] sm:$0xff]
    %v134 = vld [vmem:[#allocation2 + $0x228] sm:$0xff]
    %v135 = vld [vmem:[#allocation2 + $0x230] sm:$0xff]
    %v136 = vld [vmem:[#allocation2 + $0x238] sm:$0xff]
    %v137 = vld [vmem:[#allocation2 + $0x240] sm:$0xff]
    %v138 = vld [vmem:[#allocation2 + $0x248] sm:$0xff]
    %v139 = vld [vmem:[#allocation2 + $0x250] sm:$0xff]
    %v140 = vld [vmem:[#allocation2 + $0x258] sm:$0xff]
    %v141 = vld [vmem:[#allocation2 + $0x260] sm:$0xff]
    %v142 = vld [vmem:[#allocation2 + $0x268] sm:$0xff]
    %v143 = vld [vmem:[#allocation2 + $0x270] sm:$0xff]
    %v144 = vld [vmem:[#allocation2 + $0x278] sm:$0xff]
    %v145 = vld [vmem:[#allocation2 + $0x280] sm:$0xff]
    %v146 = vld [vmem:[#allocation2 + $0x288] sm:$0xff]
    %v147 = vld [vmem:[#allocation2 + $0x290] sm:$0xff]
    %v148 = vld [vmem:[#allocation2 + $0x298] sm:$0xff]
    %v149 = vld [vmem:[#allocation2 + $0x2a0] sm:$0xff]
    %v150 = vld [vmem:[#allocation2 + $0x2a8] sm:$0xff]
    %v151 = vld [vmem:[#allocation2 + $0x2b0] sm:$0xff]
    %v152 = vld [vmem:[#allocation2 + $0x2b8] sm:$0xff]
    %v153 = vld [vmem:[#allocation2 + $0x2c0] sm:$0xff]
    %v154 = vld [vmem:[#allocation2 + $0x2c8] sm:$0xff]
    %v155 = vld [vmem:[#allocation2 + $0x2d0] sm:$0xff]
    %v156 = vld [vmem:[#allocation2 + $0x2d8] sm:$0xff]
    %v157 = vld [vmem:[#allocation2 + $0x2e0] sm:$0xff]
    %v158 = vld [vmem:[#allocation2 + $0x2e8] sm:$0xff]
    %v159 = vld [vmem:[#allocation2 + $0x2f0] sm:$0xff]
    %v160 = vld [vmem:[#allocation2 + $0x2f8] sm:$0xff]
    %v161 = vld [vmem:[#allocation2 + $0x300] sm:$0xff]
    %v162 = vld [vmem:[#allocation2 + $0x308] sm:$0xff]
    %v163 = vld [vmem:[#allocation2 + $0x310] sm:$0xff]
    %v164 = vld [vmem:[#allocation2 + $0x318] sm:$0xff]
    %v165 = vld [vmem:[#allocation2 + $0x320] sm:$0xff]
    %v166 = vld [vmem:[#allocation2 + $0x328] sm:$0xff]
    %v167 = vld [vmem:[#allocation2 + $0x330] sm:$0xff]
    %v168 = vld [vmem:[#allocation2 + $0x338] sm:$0xff]
    %v169 = vld [vmem:[#allocation2 + $0x340] sm:$0xff]
    %v170 = vld [vmem:[#allocation2 + $0x348] sm:$0xff]
    %v171 = vld [vmem:[#allocation2 + $0x350] sm:$0xff]
    %v172 = vld [vmem:[#allocation2 + $0x358] sm:$0xff]
    %v173 = vld [vmem:[#allocation2 + $0x360] sm:$0xff]
    %v174 = vld [vmem:[#allocation2 + $0x368] sm:$0xff]
    %v175 = vld [vmem:[#allocation2 + $0x370] sm:$0xff]
    %v176 = vld [vmem:[#allocation2 + $0x378] sm:$0xff]
    %v177 = vld [vmem:[#allocation2 + $0x380] sm:$0xff]
    %v178 = vld [vmem:[#allocation2 + $0x388] sm:$0xff]
    %v179 = vld [vmem:[#allocation2 + $0x390] sm:$0xff]
    %v180 = vld [vmem:[#allocation2 + $0x398] sm:$0xff]
    %v181 = vld [vmem:[#allocation2 + $0x3a0] sm:$0xff]
    %v182 = vld [vmem:[#allocation2 + $0x3a8] sm:$0xff]
    %v183 = vld [vmem:[#allocation2 + $0x3b0] sm:$0xff]
    %v184 = vld [vmem:[#allocation2 + $0x3b8] sm:$0xff]
    %v185 = vld [vmem:[#allocation2 + $0x3c0] sm:$0xff]
    %v186 = vld [vmem:[#allocation2 + $0x3c8] sm:$0xff]
    %v187 = vld [vmem:[#allocation2 + $0x3d0] sm:$0xff]
    %v188 = vld [vmem:[#allocation2 + $0x3d8] sm:$0xff]
    %v189 = vld [vmem:[#allocation2 + $0x3e0] sm:$0xff]
    %v190 = vld [vmem:[#allocation2 + $0x3e8] sm:$0xff]
    %v191 = vld [vmem:[#allocation2 + $0x3f0] sm:$0xff]
    %v192 = vld [vmem:[#allocation2 + $0x3f8] sm:$0xff]
    %v193 = vunpack.c.0.s8 %v65
    %v194 = vunpack.c.0.s8 %v66
    %v195 = vunpack.c.0.s8 %v67
    %v196 = vunpack.c.0.s8 %v68
    %v197 = vunpack.c.1.s8 %v65
    %v198 = vunpack.c.1.s8 %v66
    %v199 = vunpack.c.1.s8 %v67
    %v200 = vunpack.c.1.s8 %v68
    %v201 = vunpack.c.2.s8 %v65
    %v202 = vunpack.c.2.s8 %v66
    %v203 = vunpack.c.2.s8 %v67
    %v204 = vunpack.c.2.s8 %v68
    %v205 = vunpack.c.3.s8 %v65
    %v206 = vunpack.c.3.s8 %v66
    %v207 = vunpack.c.3.s8 %v67
    %v208 = vunpack.c.3.s8 %v68
    %v209 = vunpack.c.0.s8 %v69
    %v210 = vunpack.c.0.s8 %v70
    %v211 = vunpack.c.0.s8 %v71
    %v212 = vunpack.c.0.s8 %v72
    %v213 = vunpack.c.1.s8 %v69
    %v214 = vunpack.c.1.s8 %v70
    %v215 = vunpack.c.1.s8 %v71
    %v216 = vunpack.c.1.s8 %v72
    %v217 = vunpack.c.2.s8 %v69
    %v218 = vunpack.c.2.s8 %v70
    %v219 = vunpack.c.2.s8 %v71
    %v220 = vunpack.c.2.s8 %v72
    %v221 = vunpack.c.3.s8 %v69
    %v222 = vunpack.c.3.s8 %v70
    %v223 = vunpack.c.3.s8 %v71
    %v224 = vunpack.c.3.s8 %v72
    %v225 = vunpack.c.0.s8 %v73
    %v226 = vunpack.c.0.s8 %v74
    %v227 = vunpack.c.0.s8 %v75
    %v228 = vunpack.c.0.s8 %v76
    %v229 = vunpack.c.1.s8 %v73
    %v230 = vunpack.c.1.s8 %v74
    %v231 = vunpack.c.1.s8 %v75
    %v232 = vunpack.c.1.s8 %v76
    %v233 = vunpack.c.2.s8 %v73
    %v234 = vunpack.c.2.s8 %v74
    %v235 = vunpack.c.2.s8 %v75
    %v236 = vunpack.c.2.s8 %v76
    %v237 = vunpack.c.3.s8 %v73
    %v238 = vunpack.c.3.s8 %v74
    %v239 = vunpack.c.3.s8 %v75
    %v240 = vunpack.c.3.s8 %v76
    %v241 = vunpack.c.0.s8 %v77
    %v242 = vunpack.c.0.s8 %v78
    %v243 = vunpack.c.0.s8 %v79
    %v244 = vunpack.c.0.s8 %v80
    %v245 = vunpack.c.1.s8 %v77
    %v246 = vunpack.c.1.s8 %v78
    %v247 = vunpack.c.1.s8 %v79
    %v248 = vunpack.c.1.s8 %v80
    %v249 = vunpack.c.2.s8 %v77
    %v250 = vunpack.c.2.s8 %v78
    %v251 = vunpack.c.2.s8 %v79
    %v252 = vunpack.c.2.s8 %v80
    %v253 = vunpack.c.3.s8 %v77
    %v254 = vunpack.c.3.s8 %v78
    %v255 = vunpack.c.3.s8 %v79
    %v256 = vunpack.c.3.s8 %v80
    %v257 = vunpack.c.0.s8 %v81
    %v258 = vunpack.c.0.s8 %v82
    %v259 = vunpack.c.0.s8 %v83
    %v260 = vunpack.c.0.s8 %v84
    %v261 = vunpack.c.1.s8 %v81
    %v262 = vunpack.c.1.s8 %v82
    %v263 = vunpack.c.1.s8 %v83
    %v264 = vunpack.c.1.s8 %v84
    %v265 = vunpack.c.2.s8 %v81
    %v266 = vunpack.c.2.s8 %v82
    %v267 = vunpack.c.2.s8 %v83
    %v268 = vunpack.c.2.s8 %v84
    %v269 = vunpack.c.3.s8 %v81
    %v270 = vunpack.c.3.s8 %v82
    %v271 = vunpack.c.3.s8 %v83
    %v272 = vunpack.c.3.s8 %v84
    %v273 = vunpack.c.0.s8 %v85
    %v274 = vunpack.c.0.s8 %v86
    %v275 = vunpack.c.0.s8 %v87
    %v276 = vunpack.c.0.s8 %v88
    %v277 = vunpack.c.1.s8 %v85
    %v278 = vunpack.c.1.s8 %v86
    %v279 = vunpack.c.1.s8 %v87
    %v280 = vunpack.c.1.s8 %v88
    %v281 = vunpack.c.2.s8 %v85
    %v282 = vunpack.c.2.s8 %v86
    %v283 = vunpack.c.2.s8 %v87
    %v284 = vunpack.c.2.s8 %v88
    %v285 = vunpack.c.3.s8 %v85
    %v286 = vunpack.c.3.s8 %v86
    %v287 = vunpack.c.3.s8 %v87
    %v288 = vunpack.c.3.s8 %v88
    %v289 = vunpack.c.0.s8 %v89
    %v290 = vunpack.c.0.s8 %v90
    %v291 = vunpack.c.0.s8 %v91
    %v292 = vunpack.c.0.s8 %v92
    %v293 = vunpack.c.1.s8 %v89
    %v294 = vunpack.c.1.s8 %v90
    %v295 = vunpack.c.1.s8 %v91
    %v296 = vunpack.c.1.s8 %v92
    %v297 = vunpack.c.2.s8 %v89
    %v298 = vunpack.c.2.s8 %v90
    %v299 = vunpack.c.2.s8 %v91
    %v300 = vunpack.c.2.s8 %v92
    %v301 = vunpack.c.3.s8 %v89
    %v302 = vunpack.c.3.s8 %v90
    %v303 = vunpack.c.3.s8 %v91
    %v304 = vunpack.c.3.s8 %v92
    %v305 = vunpack.c.0.s8 %v93
    %v306 = vunpack.c.0.s8 %v94
    %v307 = vunpack.c.0.s8 %v95
    %v308 = vunpack.c.0.s8 %v96
    %v309 = vunpack.c.1.s8 %v93
    %v310 = vunpack.c.1.s8 %v94
    %v311 = vunpack.c.1.s8 %v95
    %v312 = vunpack.c.1.s8 %v96
    %v313 = vunpack.c.2.s8 %v93
    %v314 = vunpack.c.2.s8 %v94
    %v315 = vunpack.c.2.s8 %v95
    %v316 = vunpack.c.2.s8 %v96
    %v317 = vunpack.c.3.s8 %v93
    %v318 = vunpack.c.3.s8 %v94
    %v319 = vunpack.c.3.s8 %v95
    %v320 = vunpack.c.3.s8 %v96
    %v321 = vunpack.c.0.s8 %v97
    %v322 = vunpack.c.0.s8 %v98
    %v323 = vunpack.c.0.s8 %v99
    %v324 = vunpack.c.0.s8 %v100
    %v325 = vunpack.c.1.s8 %v97
    %v326 = vunpack.c.1.s8 %v98
    %v327 = vunpack.c.1.s8 %v99
    %v328 = vunpack.c.1.s8 %v100
    %v329 = vunpack.c.2.s8 %v97
    %v330 = vunpack.c.2.s8 %v98
    %v331 = vunpack.c.2.s8 %v99
    %v332 = vunpack.c.2.s8 %v100
    %v333 = vunpack.c.3.s8 %v97
    %v334 = vunpack.c.3.s8 %v98
    %v335 = vunpack.c.3.s8 %v99
    %v336 = vunpack.c.3.s8 %v100
    %v337 = vunpack.c.0.s8 %v101
    %v338 = vunpack.c.0.s8 %v102
    %v339 = vunpack.c.0.s8 %v103
    %v340 = vunpack.c.0.s8 %v104
    %v341 = vunpack.c.1.s8 %v101
    %v342 = vunpack.c.1.s8 %v102
    %v343 = vunpack.c.1.s8 %v103
    %v344 = vunpack.c.1.s8 %v104
    %v345 = vunpack.c.2.s8 %v101
    %v346 = vunpack.c.2.s8 %v102
    %v347 = vunpack.c.2.s8 %v103
    %v348 = vunpack.c.2.s8 %v104
    %v349 = vunpack.c.3.s8 %v101
    %v350 = vunpack.c.3.s8 %v102
    %v351 = vunpack.c.3.s8 %v103
    %v352 = vunpack.c.3.s8 %v104
    %v353 = vunpack.c.0.s8 %v105
    %v354 = vunpack.c.0.s8 %v106
    %v355 = vunpack.c.0.s8 %v107
    %v356 = vunpack.c.0.s8 %v108
    %v357 = vunpack.c.1.s8 %v105
    %v358 = vunpack.c.1.s8 %v106
    %v359 = vunpack.c.1.s8 %v107
    %v360 = vunpack.c.1.s8 %v108
    %v361 = vunpack.c.2.s8 %v105
    %v362 = vunpack.c.2.s8 %v106
    %v363 = vunpack.c.2.s8 %v107
    %v364 = vunpack.c.2.s8 %v108
    %v365 = vunpack.c.3.s8 %v105
    %v366 = vunpack.c.3.s8 %v106
    %v367 = vunpack.c.3.s8 %v107
    %v368 = vunpack.c.3.s8 %v108
    %v369 = vunpack.c.0.s8 %v109
    %v370 = vunpack.c.0.s8 %v110
    %v371 = vunpack.c.0.s8 %v111
    %v372 = vunpack.c.0.s8 %v112
    %v373 = vunpack.c.1.s8 %v109
    %v374 = vunpack.c.1.s8 %v110
    %v375 = vunpack.c.1.s8 %v111
    %v376 = vunpack.c.1.s8 %v112
    %v377 = vunpack.c.2.s8 %v109
    %v378 = vunpack.c.2.s8 %v110
    %v379 = vunpack.c.2.s8 %v111
    %v380 = vunpack.c.2.s8 %v112
    %v381 = vunpack.c.3.s8 %v109
    %v382 = vunpack.c.3.s8 %v110
    %v383 = vunpack.c.3.s8 %v111
    %v384 = vunpack.c.3.s8 %v112
    %v385 = vunpack.c.0.s8 %v113
    %v386 = vunpack.c.0.s8 %v114
    %v387 = vunpack.c.0.s8 %v115
    %v388 = vunpack.c.0.s8 %v116
    %v389 = vunpack.c.1.s8 %v113
    %v390 = vunpack.c.1.s8 %v114
    %v391 = vunpack.c.1.s8 %v115
    %v392 = vunpack.c.1.s8 %v116
    %v393 = vunpack.c.2.s8 %v113
    %v394 = vunpack.c.2.s8 %v114
    %v395 = vunpack.c.2.s8 %v115
    %v396 = vunpack.c.2.s8 %v116
    %v397 = vunpack.c.3.s8 %v113
    %v398 = vunpack.c.3.s8 %v114
    %v399 = vunpack.c.3.s8 %v115
    %v400 = vunpack.c.3.s8 %v116
    %v401 = vunpack.c.0.s8 %v117
    %v402 = vunpack.c.0.s8 %v118
    %v403 = vunpack.c.0.s8 %v119
    %v404 = vunpack.c.0.s8 %v120
    %v405 = vunpack.c.1.s8 %v117
    %v406 = vunpack.c.1.s8 %v118
    %v407 = vunpack.c.1.s8 %v119
    %v408 = vunpack.c.1.s8 %v120
    %v409 = vunpack.c.2.s8 %v117
    %v410 = vunpack.c.2.s8 %v118
    %v411 = vunpack.c.2.s8 %v119
    %v412 = vunpack.c.2.s8 %v120
    %v413 = vunpack.c.3.s8 %v117
    %v414 = vunpack.c.3.s8 %v118
    %v415 = vunpack.c.3.s8 %v119
    %v416 = vunpack.c.3.s8 %v120
    %v417 = vunpack.c.0.s8 %v121
    %v418 = vunpack.c.0.s8 %v122
    %v419 = vunpack.c.0.s8 %v123
    %v420 = vunpack.c.0.s8 %v124
    %v421 = vunpack.c.1.s8 %v121
    %v422 = vunpack.c.1.s8 %v122
    %v423 = vunpack.c.1.s8 %v123
    %v424 = vunpack.c.1.s8 %v124
    %v425 = vunpack.c.2.s8 %v121
    %v426 = vunpack.c.2.s8 %v122
    %v427 = vunpack.c.2.s8 %v123
    %v428 = vunpack.c.2.s8 %v124
    %v429 = vunpack.c.3.s8 %v121
    %v430 = vunpack.c.3.s8 %v122
    %v431 = vunpack.c.3.s8 %v123
    %v432 = vunpack.c.3.s8 %v124
    %v433 = vunpack.c.0.s8 %v125
    %v434 = vunpack.c.0.s8 %v126
    %v435 = vunpack.c.0.s8 %v127
    %v436 = vunpack.c.0.s8 %v128
    %v437 = vunpack.c.1.s8 %v125
    %v438 = vunpack.c.1.s8 %v126
    %v439 = vunpack.c.1.s8 %v127
    %v440 = vunpack.c.1.s8 %v128
    %v441 = vunpack.c.2.s8 %v125
    %v442 = vunpack.c.2.s8 %v126
    %v443 = vunpack.c.2.s8 %v127
    %v444 = vunpack.c.2.s8 %v128
    %v445 = vunpack.c.3.s8 %v125
    %v446 = vunpack.c.3.s8 %v126
    %v447 = vunpack.c.3.s8 %v127
    %v448 = vunpack.c.3.s8 %v128
    %v449 = vunpack.c.0.s8 %v129
    %v450 = vunpack.c.0.s8 %v130
    %v451 = vunpack.c.0.s8 %v131
    %v452 = vunpack.c.0.s8 %v132
    %v453 = vunpack.c.1.s8 %v129
    %v454 = vunpack.c.1.s8 %v130
    %v455 = vunpack.c.1.s8 %v131
    %v456 = vunpack.c.1.s8 %v132
    %v457 = vunpack.c.2.s8 %v129
    %v458 = vunpack.c.2.s8 %v130
    %v459 = vunpack.c.2.s8 %v131
    %v460 = vunpack.c.2.s8 %v132
    %v461 = vunpack.c.3.s8 %v129
    %v462 = vunpack.c.3.s8 %v130
    %v463 = vunpack.c.3.s8 %v131
    %v464 = vunpack.c.3.s8 %v132
    %v465 = vunpack.c.0.s8 %v133
    %v466 = vunpack.c.0.s8 %v134
    %v467 = vunpack.c.0.s8 %v135
    %v468 = vunpack.c.0.s8 %v136
    %v469 = vunpack.c.1.s8 %v133
    %v470 = vunpack.c.1.s8 %v134
    %v471 = vunpack.c.1.s8 %v135
    %v472 = vunpack.c.1.s8 %v136
    %v473 = vunpack.c.2.s8 %v133
    %v474 = vunpack.c.2.s8 %v134
    %v475 = vunpack.c.2.s8 %v135
    %v476 = vunpack.c.2.s8 %v136
    %v477 = vunpack.c.3.s8 %v133
    %v478 = vunpack.c.3.s8 %v134
    %v479 = vunpack.c.3.s8 %v135
    %v480 = vunpack.c.3.s8 %v136
    %v481 = vunpack.c.0.s8 %v137
    %v482 = vunpack.c.0.s8 %v138
    %v483 = vunpack.c.0.s8 %v139
    %v484 = vunpack.c.0.s8 %v140
    %v485 = vunpack.c.1.s8 %v137
    %v486 = vunpack.c.1.s8 %v138
    %v487 = vunpack.c.1.s8 %v139
    %v488 = vunpack.c.1.s8 %v140
    %v489 = vunpack.c.2.s8 %v137
    %v490 = vunpack.c.2.s8 %v138
    %v491 = vunpack.c.2.s8 %v139
    %v492 = vunpack.c.2.s8 %v140
    %v493 = vunpack.c.3.s8 %v137
    %v494 = vunpack.c.3.s8 %v138
    %v495 = vunpack.c.3.s8 %v139
    %v496 = vunpack.c.3.s8 %v140
    %v497 = vunpack.c.0.s8 %v141
    %v498 = vunpack.c.0.s8 %v142
    %v499 = vunpack.c.0.s8 %v143
    %v500 = vunpack.c.0.s8 %v144
    %v501 = vunpack.c.1.s8 %v141
    %v502 = vunpack.c.1.s8 %v142
    %v503 = vunpack.c.1.s8 %v143
    %v504 = vunpack.c.1.s8 %v144
    %v505 = vunpack.c.2.s8 %v141
    %v506 = vunpack.c.2.s8 %v142
    %v507 = vunpack.c.2.s8 %v143
    %v508 = vunpack.c.2.s8 %v144
    %v509 = vunpack.c.3.s8 %v141
    %v510 = vunpack.c.3.s8 %v142
    %v511 = vunpack.c.3.s8 %v143
    %v512 = vunpack.c.3.s8 %v144
    %v513 = vunpack.c.0.s8 %v145
    %v514 = vunpack.c.0.s8 %v146
    %v515 = vunpack.c.0.s8 %v147
    %v516 = vunpack.c.0.s8 %v148
    %v517 = vunpack.c.1.s8 %v145
    %v518 = vunpack.c.1.s8 %v146
    %v519 = vunpack.c.1.s8 %v147
    %v520 = vunpack.c.1.s8 %v148
    %v521 = vunpack.c.2.s8 %v145
    %v522 = vunpack.c.2.s8 %v146
    %v523 = vunpack.c.2.s8 %v147
    %v524 = vunpack.c.2.s8 %v148
    %v525 = vunpack.c.3.s8 %v145
    %v526 = vunpack.c.3.s8 %v146
    %v527 = vunpack.c.3.s8 %v147
    %v528 = vunpack.c.3.s8 %v148
    %v529 = vunpack.c.0.s8 %v149
    %v530 = vunpack.c.0.s8 %v150
    %v531 = vunpack.c.0.s8 %v151
    %v532 = vunpack.c.0.s8 %v152
    %v533 = vunpack.c.1.s8 %v149
    %v534 = vunpack.c.1.s8 %v150
    %v535 = vunpack.c.1.s8 %v151
    %v536 = vunpack.c.1.s8 %v152
    %v537 = vunpack.c.2.s8 %v149
    %v538 = vunpack.c.2.s8 %v150
    %v539 = vunpack.c.2.s8 %v151
    %v540 = vunpack.c.2.s8 %v152
    %v541 = vunpack.c.3.s8 %v149
    %v542 = vunpack.c.3.s8 %v150
    %v543 = vunpack.c.3.s8 %v151
    %v544 = vunpack.c.3.s8 %v152
    %v545 = vunpack.c.0.s8 %v153
    %v546 = vunpack.c.0.s8 %v154
    %v547 = vunpack.c.0.s8 %v155
    %v548 = vunpack.c.0.s8 %v156
    %v549 = vunpack.c.1.s8 %v153
    %v550 = vunpack.c.1.s8 %v154
    %v551 = vunpack.c.1.s8 %v155
    %v552 = vunpack.c.1.s8 %v156
    %v553 = vunpack.c.2.s8 %v153
    %v554 = vunpack.c.2.s8 %v154
    %v555 = vunpack.c.2.s8 %v155
    %v556 = vunpack.c.2.s8 %v156
    %v557 = vunpack.c.3.s8 %v153
    %v558 = vunpack.c.3.s8 %v154
    %v559 = vunpack.c.3.s8 %v155
    %v560 = vunpack.c.3.s8 %v156
    %v561 = vunpack.c.0.s8 %v157
    %v562 = vunpack.c.0.s8 %v158
    %v563 = vunpack.c.0.s8 %v159
    %v564 = vunpack.c.0.s8 %v160
    %v565 = vunpack.c.1.s8 %v157
    %v566 = vunpack.c.1.s8 %v158
    %v567 = vunpack.c.1.s8 %v159
    %v568 = vunpack.c.1.s8 %v160
    %v569 = vunpack.c.2.s8 %v157
    %v570 = vunpack.c.2.s8 %v158
    %v571 = vunpack.c.2.s8 %v159
    %v572 = vunpack.c.2.s8 %v160
    %v573 = vunpack.c.3.s8 %v157
    %v574 = vunpack.c.3.s8 %v158
    %v575 = vunpack.c.3.s8 %v159
    %v576 = vunpack.c.3.s8 %v160
    %v577 = vunpack.c.0.s8 %v161
    %v578 = vunpack.c.0.s8 %v162
    %v579 = vunpack.c.0.s8 %v163
    %v580 = vunpack.c.0.s8 %v164
    %v581 = vunpack.c.1.s8 %v161
    %v582 = vunpack.c.1.s8 %v162
    %v583 = vunpack.c.1.s8 %v163
    %v584 = vunpack.c.1.s8 %v164
    %v585 = vunpack.c.2.s8 %v161
    %v586 = vunpack.c.2.s8 %v162
    %v587 = vunpack.c.2.s8 %v163
    %v588 = vunpack.c.2.s8 %v164
    %v589 = vunpack.c.3.s8 %v161
    %v590 = vunpack.c.3.s8 %v162
    %v591 = vunpack.c.3.s8 %v163
    %v592 = vunpack.c.3.s8 %v164
    %v593 = vunpack.c.0.s8 %v165
    %v594 = vunpack.c.0.s8 %v166
    %v595 = vunpack.c.0.s8 %v167
    %v596 = vunpack.c.0.s8 %v168
    %v597 = vunpack.c.1.s8 %v165
    %v598 = vunpack.c.1.s8 %v166
    %v599 = vunpack.c.1.s8 %v167
    %v600 = vunpack.c.1.s8 %v168
    %v601 = vunpack.c.2.s8 %v165
    %v602 = vunpack.c.2.s8 %v166
    %v603 = vunpack.c.2.s8 %v167
    %v604 = vunpack.c.2.s8 %v168
    %v605 = vunpack.c.3.s8 %v165
    %v606 = vunpack.c.3.s8 %v166
    %v607 = vunpack.c.3.s8 %v167
    %v608 = vunpack.c.3.s8 %v168
    %v609 = vunpack.c.0.s8 %v169
    %v610 = vunpack.c.0.s8 %v170
    %v611 = vunpack.c.0.s8 %v171
    %v612 = vunpack.c.0.s8 %v172
    %v613 = vunpack.c.1.s8 %v169
    %v614 = vunpack.c.1.s8 %v170
    %v615 = vunpack.c.1.s8 %v171
    %v616 = vunpack.c.1.s8 %v172
    %v617 = vunpack.c.2.s8 %v169
    %v618 = vunpack.c.2.s8 %v170
    %v619 = vunpack.c.2.s8 %v171
    %v620 = vunpack.c.2.s8 %v172
    %v621 = vunpack.c.3.s8 %v169
    %v622 = vunpack.c.3.s8 %v170
    %v623 = vunpack.c.3.s8 %v171
    %v624 = vunpack.c.3.s8 %v172
    %v625 = vunpack.c.0.s8 %v173
    %v626 = vunpack.c.0.s8 %v174
    %v627 = vunpack.c.0.s8 %v175
    %v628 = vunpack.c.0.s8 %v176
    %v629 = vunpack.c.1.s8 %v173
    %v630 = vunpack.c.1.s8 %v174
    %v631 = vunpack.c.1.s8 %v175
    %v632 = vunpack.c.1.s8 %v176
    %v633 = vunpack.c.2.s8 %v173
    %v634 = vunpack.c.2.s8 %v174
    %v635 = vunpack.c.2.s8 %v175
    %v636 = vunpack.c.2.s8 %v176
    %v637 = vunpack.c.3.s8 %v173
    %v638 = vunpack.c.3.s8 %v174
    %v639 = vunpack.c.3.s8 %v175
    %v640 = vunpack.c.3.s8 %v176
    %v641 = vunpack.c.0.s8 %v177
    %v642 = vunpack.c.0.s8 %v178
    %v643 = vunpack.c.0.s8 %v179
    %v644 = vunpack.c.0.s8 %v180
    %v645 = vunpack.c.1.s8 %v177
    %v646 = vunpack.c.1.s8 %v178
    %v647 = vunpack.c.1.s8 %v179
    %v648 = vunpack.c.1.s8 %v180
    %v649 = vunpack.c.2.s8 %v177
    %v650 = vunpack.c.2.s8 %v178
    %v651 = vunpack.c.2.s8 %v179
    %v652 = vunpack.c.2.s8 %v180
    %v653 = vunpack.c.3.s8 %v177
    %v654 = vunpack.c.3.s8 %v178
    %v655 = vunpack.c.3.s8 %v179
    %v656 = vunpack.c.3.s8 %v180
    %v657 = vunpack.c.0.s8 %v181
    %v658 = vunpack.c.0.s8 %v182
    %v659 = vunpack.c.0.s8 %v183
    %v660 = vunpack.c.0.s8 %v184
    %v661 = vunpack.c.1.s8 %v181
    %v662 = vunpack.c.1.s8 %v182
    %v663 = vunpack.c.1.s8 %v183
    %v664 = vunpack.c.1.s8 %v184
    %v665 = vunpack.c.2.s8 %v181
    %v666 = vunpack.c.2.s8 %v182
    %v667 = vunpack.c.2.s8 %v183
    %v668 = vunpack.c.2.s8 %v184
    %v669 = vunpack.c.3.s8 %v181
    %v670 = vunpack.c.3.s8 %v182
    %v671 = vunpack.c.3.s8 %v183
    %v672 = vunpack.c.3.s8 %v184
    %v673 = vunpack.c.0.s8 %v185
    %v674 = vunpack.c.0.s8 %v186
    %v675 = vunpack.c.0.s8 %v187
    %v676 = vunpack.c.0.s8 %v188
    %v677 = vunpack.c.1.s8 %v185
    %v678 = vunpack.c.1.s8 %v186
    %v679 = vunpack.c.1.s8 %v187
    %v680 = vunpack.c.1.s8 %v188
    %v681 = vunpack.c.2.s8 %v185
    %v682 = vunpack.c.2.s8 %v186
    %v683 = vunpack.c.2.s8 %v187
    %v684 = vunpack.c.2.s8 %v188
    %v685 = vunpack.c.3.s8 %v185
    %v686 = vunpack.c.3.s8 %v186
    %v687 = vunpack.c.3.s8 %v187
    %v688 = vunpack.c.3.s8 %v188
    %v689 = vunpack.c.0.s8 %v189
    %v690 = vunpack.c.0.s8 %v190
    %v691 = vunpack.c.0.s8 %v191
    %v692 = vunpack.c.0.s8 %v192
    %v693 = vunpack.c.1.s8 %v189
    %v694 = vunpack.c.1.s8 %v190
    %v695 = vunpack.c.1.s8 %v191
    %v696 = vunpack.c.1.s8 %v192
    %v697 = vunpack.c.2.s8 %v189
    %v698 = vunpack.c.2.s8 %v190
    %v699 = vunpack.c.2.s8 %v191
    %v700 = vunpack.c.2.s8 %v192
    %v701 = vunpack.c.3.s8 %v189
    %v702 = vunpack.c.3.s8 %v190
    %v703 = vunpack.c.3.s8 %v191
    %v704 = vunpack.c.3.s8 %v192
    %v705 = vcvt.s32.f32 %v193
    %v706 = vcvt.s32.f32 %v194
    %v707 = vcvt.s32.f32 %v195
    %v708 = vcvt.s32.f32 %v196
    %v709 = vcvt.s32.f32 %v197
    %v710 = vcvt.s32.f32 %v198
    %v711 = vcvt.s32.f32 %v199
    %v712 = vcvt.s32.f32 %v200
    %v713 = vcvt.s32.f32 %v201
    %v714 = vcvt.s32.f32 %v202
    %v715 = vcvt.s32.f32 %v203
    %v716 = vcvt.s32.f32 %v204
    %v717 = vcvt.s32.f32 %v205
    %v718 = vcvt.s32.f32 %v206
    %v719 = vcvt.s32.f32 %v207
    %v720 = vcvt.s32.f32 %v208
    %v721 = vcvt.s32.f32 %v209
    %v722 = vcvt.s32.f32 %v210
    %v723 = vcvt.s32.f32 %v211
    %v724 = vcvt.s32.f32 %v212
    %v725 = vcvt.s32.f32 %v213
    %v726 = vcvt.s32.f32 %v214
    %v727 = vcvt.s32.f32 %v215
    %v728 = vcvt.s32.f32 %v216
    %v729 = vcvt.s32.f32 %v217
    %v730 = vcvt.s32.f32 %v218
    %v731 = vcvt.s32.f32 %v219
    %v732 = vcvt.s32.f32 %v220
    %v733 = vcvt.s32.f32 %v221
    %v734 = vcvt.s32.f32 %v222
    %v735 = vcvt.s32.f32 %v223
    %v736 = vcvt.s32.f32 %v224
    %v737 = vcvt.s32.f32 %v225
    %v738 = vcvt.s32.f32 %v226
    %v739 = vcvt.s32.f32 %v227
    %v740 = vcvt.s32.f32 %v228
    %v741 = vcvt.s32.f32 %v229
    %v742 = vcvt.s32.f32 %v230
    %v743 = vcvt.s32.f32 %v231
    %v744 = vcvt.s32.f32 %v232
    %v745 = vcvt.s32.f32 %v233
    %v746 = vcvt.s32.f32 %v234
    %v747 = vcvt.s32.f32 %v235
    %v748 = vcvt.s32.f32 %v236
    %v749 = vcvt.s32.f32 %v237
    %v750 = vcvt.s32.f32 %v238
    %v751 = vcvt.s32.f32 %v239
    %v752 = vcvt.s32.f32 %v240
    %v753 = vcvt.s32.f32 %v241
    %v754 = vcvt.s32.f32 %v242
    %v755 = vcvt.s32.f32 %v243
    %v756 = vcvt.s32.f32 %v244
    %v757 = vcvt.s32.f32 %v245
    %v758 = vcvt.s32.f32 %v246
    %v759 = vcvt.s32.f32 %v247
    %v760 = vcvt.s32.f32 %v248
    %v761 = vcvt.s32.f32 %v249
    %v762 = vcvt.s32.f32 %v250
    %v763 = vcvt.s32.f32 %v251
    %v764 = vcvt.s32.f32 %v252
    %v765 = vcvt.s32.f32 %v253
    %v766 = vcvt.s32.f32 %v254
    %v767 = vcvt.s32.f32 %v255
    %v768 = vcvt.s32.f32 %v256
    %v769 = vcvt.s32.f32 %v257
    %v770 = vcvt.s32.f32 %v258
    %v771 = vcvt.s32.f32 %v259
    %v772 = vcvt.s32.f32 %v260
    %v773 = vcvt.s32.f32 %v261
    %v774 = vcvt.s32.f32 %v262
    %v775 = vcvt.s32.f32 %v263
    %v776 = vcvt.s32.f32 %v264
    %v777 = vcvt.s32.f32 %v265
    %v778 = vcvt.s32.f32 %v266
    %v779 = vcvt.s32.f32 %v267
    %v780 = vcvt.s32.f32 %v268
    %v781 = vcvt.s32.f32 %v269
    %v782 = vcvt.s32.f32 %v270
    %v783 = vcvt.s32.f32 %v271
    %v784 = vcvt.s32.f32 %v272
    %v785 = vcvt.s32.f32 %v273
    %v786 = vcvt.s32.f32 %v274
    %v787 = vcvt.s32.f32 %v275
    %v788 = vcvt.s32.f32 %v276
    %v789 = vcvt.s32.f32 %v277
    %v790 = vcvt.s32.f32 %v278
    %v791 = vcvt.s32.f32 %v279
    %v792 = vcvt.s32.f32 %v280
    %v793 = vcvt.s32.f32 %v281
    %v794 = vcvt.s32.f32 %v282
    %v795 = vcvt.s32.f32 %v283
    %v796 = vcvt.s32.f32 %v284
    %v797 = vcvt.s32.f32 %v285
    %v798 = vcvt.s32.f32 %v286
    %v799 = vcvt.s32.f32 %v287
    %v800 = vcvt.s32.f32 %v288
    %v801 = vcvt.s32.f32 %v289
    %v802 = vcvt.s32.f32 %v290
    %v803 = vcvt.s32.f32 %v291
    %v804 = vcvt.s32.f32 %v292
    %v805 = vcvt.s32.f32 %v293
    %v806 = vcvt.s32.f32 %v294
    %v807 = vcvt.s32.f32 %v295
    %v808 = vcvt.s32.f32 %v296
    %v809 = vcvt.s32.f32 %v297
    %v810 = vcvt.s32.f32 %v298
    %v811 = vcvt.s32.f32 %v299
    %v812 = vcvt.s32.f32 %v300
    %v813 = vcvt.s32.f32 %v301
    %v814 = vcvt.s32.f32 %v302
    %v815 = vcvt.s32.f32 %v303
    %v816 = vcvt.s32.f32 %v304
    %v817 = vcvt.s32.f32 %v305
    %v818 = vcvt.s32.f32 %v306
    %v819 = vcvt.s32.f32 %v307
    %v820 = vcvt.s32.f32 %v308
    %v821 = vcvt.s32.f32 %v309
    %v822 = vcvt.s32.f32 %v310
    %v823 = vcvt.s32.f32 %v311
    %v824 = vcvt.s32.f32 %v312
    %v825 = vcvt.s32.f32 %v313
    %v826 = vcvt.s32.f32 %v314
    %v827 = vcvt.s32.f32 %v315
    %v828 = vcvt.s32.f32 %v316
    %v829 = vcvt.s32.f32 %v317
    %v830 = vcvt.s32.f32 %v318
    %v831 = vcvt.s32.f32 %v319
    %v832 = vcvt.s32.f32 %v320
    %v833 = vcvt.s32.f32 %v321
    %v834 = vcvt.s32.f32 %v322
    %v835 = vcvt.s32.f32 %v323
    %v836 = vcvt.s32.f32 %v324
    %v837 = vcvt.s32.f32 %v325
    %v838 = vcvt.s32.f32 %v326
    %v839 = vcvt.s32.f32 %v327
    %v840 = vcvt.s32.f32 %v328
    %v841 = vcvt.s32.f32 %v329
    %v842 = vcvt.s32.f32 %v330
    %v843 = vcvt.s32.f32 %v331
    %v844 = vcvt.s32.f32 %v332
    %v845 = vcvt.s32.f32 %v333
    %v846 = vcvt.s32.f32 %v334
    %v847 = vcvt.s32.f32 %v335
    %v848 = vcvt.s32.f32 %v336
    %v849 = vcvt.s32.f32 %v337
    %v850 = vcvt.s32.f32 %v338
    %v851 = vcvt.s32.f32 %v339
    %v852 = vcvt.s32.f32 %v340
    %v853 = vcvt.s32.f32 %v341
    %v854 = vcvt.s32.f32 %v342
    %v855 = vcvt.s32.f32 %v343
    %v856 = vcvt.s32.f32 %v344
    %v857 = vcvt.s32.f32 %v345
    %v858 = vcvt.s32.f32 %v346
    %v859 = vcvt.s32.f32 %v347
    %v860 = vcvt.s32.f32 %v348
    %v861 = vcvt.s32.f32 %v349
    %v862 = vcvt.s32.f32 %v350
    %v863 = vcvt.s32.f32 %v351
    %v864 = vcvt.s32.f32 %v352
    %v865 = vcvt.s32.f32 %v353
    %v866 = vcvt.s32.f32 %v354
    %v867 = vcvt.s32.f32 %v355
    %v868 = vcvt.s32.f32 %v356
    %v869 = vcvt.s32.f32 %v357
    %v870 = vcvt.s32.f32 %v358
    %v871 = vcvt.s32.f32 %v359
    %v872 = vcvt.s32.f32 %v360
    %v873 = vcvt.s32.f32 %v361
    %v874 = vcvt.s32.f32 %v362
    %v875 = vcvt.s32.f32 %v363
    %v876 = vcvt.s32.f32 %v364
    %v877 = vcvt.s32.f32 %v365
    %v878 = vcvt.s32.f32 %v366
    %v879 = vcvt.s32.f32 %v367
    %v880 = vcvt.s32.f32 %v368
    %v881 = vcvt.s32.f32 %v369
    %v882 = vcvt.s32.f32 %v370
    %v883 = vcvt.s32.f32 %v371
    %v884 = vcvt.s32.f32 %v372
    %v885 = vcvt.s32.f32 %v373
    %v886 = vcvt.s32.f32 %v374
    %v887 = vcvt.s32.f32 %v375
    %v888 = vcvt.s32.f32 %v376
    %v889 = vcvt.s32.f32 %v377
    %v890 = vcvt.s32.f32 %v378
    %v891 = vcvt.s32.f32 %v379
    %v892 = vcvt.s32.f32 %v380
    %v893 = vcvt.s32.f32 %v381
    %v894 = vcvt.s32.f32 %v382
    %v895 = vcvt.s32.f32 %v383
    %v896 = vcvt.s32.f32 %v384
    %v897 = vcvt.s32.f32 %v385
    %v898 = vcvt.s32.f32 %v386
    %v899 = vcvt.s32.f32 %v387
    %v900 = vcvt.s32.f32 %v388
    %v901 = vcvt.s32.f32 %v389
    %v902 = vcvt.s32.f32 %v390
    %v903 = vcvt.s32.f32 %v391
    %v904 = vcvt.s32.f32 %v392
    %v905 = vcvt.s32.f32 %v393
    %v906 = vcvt.s32.f32 %v394
    %v907 = vcvt.s32.f32 %v395
    %v908 = vcvt.s32.f32 %v396
    %v909 = vcvt.s32.f32 %v397
    %v910 = vcvt.s32.f32 %v398
    %v911 = vcvt.s32.f32 %v399
    %v912 = vcvt.s32.f32 %v400
    %v913 = vcvt.s32.f32 %v401
    %v914 = vcvt.s32.f32 %v402
    %v915 = vcvt.s32.f32 %v403
    %v916 = vcvt.s32.f32 %v404
    %v917 = vcvt.s32.f32 %v405
    %v918 = vcvt.s32.f32 %v406
    %v919 = vcvt.s32.f32 %v407
    %v920 = vcvt.s32.f32 %v408
    %v921 = vcvt.s32.f32 %v409
    %v922 = vcvt.s32.f32 %v410
    %v923 = vcvt.s32.f32 %v411
    %v924 = vcvt.s32.f32 %v412
    %v925 = vcvt.s32.f32 %v413
    %v926 = vcvt.s32.f32 %v414
    %v927 = vcvt.s32.f32 %v415
    %v928 = vcvt.s32.f32 %v416
    %v929 = vcvt.s32.f32 %v417
    %v930 = vcvt.s32.f32 %v418
    %v931 = vcvt.s32.f32 %v419
    %v932 = vcvt.s32.f32 %v420
    %v933 = vcvt.s32.f32 %v421
    %v934 = vcvt.s32.f32 %v422
    %v935 = vcvt.s32.f32 %v423
    %v936 = vcvt.s32.f32 %v424
    %v937 = vcvt.s32.f32 %v425
    %v938 = vcvt.s32.f32 %v426
    %v939 = vcvt.s32.f32 %v427
    %v940 = vcvt.s32.f32 %v428
    %v941 = vcvt.s32.f32 %v429
    %v942 = vcvt.s32.f32 %v430
    %v943 = vcvt.s32.f32 %v431
    %v944 = vcvt.s32.f32 %v432
    %v945 = vcvt.s32.f32 %v433
    %v946 = vcvt.s32.f32 %v434
    %v947 = vcvt.s32.f32 %v435
    %v948 = vcvt.s32.f32 %v436
    %v949 = vcvt.s32.f32 %v437
    %v950 = vcvt.s32.f32 %v438
    %v951 = vcvt.s32.f32 %v439
    %v952 = vcvt.s32.f32 %v440
    %v953 = vcvt.s32.f32 %v441
    %v954 = vcvt.s32.f32 %v442
    %v955 = vcvt.s32.f32 %v443
    %v956 = vcvt.s32.f32 %v444
    %v957 = vcvt.s32.f32 %v445
    %v958 = vcvt.s32.f32 %v446
    %v959 = vcvt.s32.f32 %v447
    %v960 = vcvt.s32.f32 %v448
    %v961 = vcvt.s32.f32 %v449
    %v962 = vcvt.s32.f32 %v450
    %v963 = vcvt.s32.f32 %v451
    %v964 = vcvt.s32.f32 %v452
    %v965 = vcvt.s32.f32 %v453
    %v966 = vcvt.s32.f32 %v454
    %v967 = vcvt.s32.f32 %v455
    %v968 = vcvt.s32.f32 %v456
    %v969 = vcvt.s32.f32 %v457
    %v970 = vcvt.s32.f32 %v458
    %v971 = vcvt.s32.f32 %v459
    %v972 = vcvt.s32.f32 %v460
    %v973 = vcvt.s32.f32 %v461
    %v974 = vcvt.s32.f32 %v462
    %v975 = vcvt.s32.f32 %v463
    %v976 = vcvt.s32.f32 %v464
    %v977 = vcvt.s32.f32 %v465
    %v978 = vcvt.s32.f32 %v466
    %v979 = vcvt.s32.f32 %v467
    %v980 = vcvt.s32.f32 %v468
    %v981 = vcvt.s32.f32 %v469
    %v982 = vcvt.s32.f32 %v470
    %v983 = vcvt.s32.f32 %v471
    %v984 = vcvt.s32.f32 %v472
    %v985 = vcvt.s32.f32 %v473
    %v986 = vcvt.s32.f32 %v474
    %v987 = vcvt.s32.f32 %v475
    %v988 = vcvt.s32.f32 %v476
    %v989 = vcvt.s32.f32 %v477
    %v990 = vcvt.s32.f32 %v478
    %v991 = vcvt.s32.f32 %v479
    %v992 = vcvt.s32.f32 %v480
    %v993 = vcvt.s32.f32 %v481
    %v994 = vcvt.s32.f32 %v482
    %v995 = vcvt.s32.f32 %v483
    %v996 = vcvt.s32.f32 %v484
    %v997 = vcvt.s32.f32 %v485
    %v998 = vcvt.s32.f32 %v486
    %v999 = vcvt.s32.f32 %v487
    %v1000 = vcvt.s32.f32 %v488
    %v1001 = vcvt.s32.f32 %v489
    %v1002 = vcvt.s32.f32 %v490
    %v1003 = vcvt.s32.f32 %v491
    %v1004 = vcvt.s32.f32 %v492
    %v1005 = vcvt.s32.f32 %v493
    %v1006 = vcvt.s32.f32 %v494
    %v1007 = vcvt.s32.f32 %v495
    %v1008 = vcvt.s32.f32 %v496
    %v1009 = vcvt.s32.f32 %v497
    %v1010 = vcvt.s32.f32 %v498
    %v1011 = vcvt.s32.f32 %v499
    %v1012 = vcvt.s32.f32 %v500
    %v1013 = vcvt.s32.f32 %v501
    %v1014 = vcvt.s32.f32 %v502
    %v1015 = vcvt.s32.f32 %v503
    %v1016 = vcvt.s32.f32 %v504
    %v1017 = vcvt.s32.f32 %v505
    %v1018 = vcvt.s32.f32 %v506
    %v1019 = vcvt.s32.f32 %v507
    %v1020 = vcvt.s32.f32 %v508
    %v1021 = vcvt.s32.f32 %v509
    %v1022 = vcvt.s32.f32 %v510
    %v1023 = vcvt.s32.f32 %v511
    %v1024 = vcvt.s32.f32 %v512
    %v1025 = vcvt.s32.f32 %v513
    %v1026 = vcvt.s32.f32 %v514
    %v1027 = vcvt.s32.f32 %v515
    %v1028 = vcvt.s32.f32 %v516
    %v1029 = vcvt.s32.f32 %v517
    %v1030 = vcvt.s32.f32 %v518
    %v1031 = vcvt.s32.f32 %v519
    %v1032 = vcvt.s32.f32 %v520
    %v1033 = vcvt.s32.f32 %v521
    %v1034 = vcvt.s32.f32 %v522
    %v1035 = vcvt.s32.f32 %v523
    %v1036 = vcvt.s32.f32 %v524
    %v1037 = vcvt.s32.f32 %v525
    %v1038 = vcvt.s32.f32 %v526
    %v1039 = vcvt.s32.f32 %v527
    %v1040 = vcvt.s32.f32 %v528
    %v1041 = vcvt.s32.f32 %v529
    %v1042 = vcvt.s32.f32 %v530
    %v1043 = vcvt.s32.f32 %v531
    %v1044 = vcvt.s32.f32 %v532
    %v1045 = vcvt.s32.f32 %v533
    %v1046 = vcvt.s32.f32 %v534
    %v1047 = vcvt.s32.f32 %v535
    %v1048 = vcvt.s32.f32 %v536
    %v1049 = vcvt.s32.f32 %v537
    %v1050 = vcvt.s32.f32 %v538
    %v1051 = vcvt.s32.f32 %v539
    %v1052 = vcvt.s32.f32 %v540
    %v1053 = vcvt.s32.f32 %v541
    %v1054 = vcvt.s32.f32 %v542
    %v1055 = vcvt.s32.f32 %v543
    %v1056 = vcvt.s32.f32 %v544
    %v1057 = vcvt.s32.f32 %v545
    %v1058 = vcvt.s32.f32 %v546
    %v1059 = vcvt.s32.f32 %v547
    %v1060 = vcvt.s32.f32 %v548
    %v1061 = vcvt.s32.f32 %v549
    %v1062 = vcvt.s32.f32 %v550
    %v1063 = vcvt.s32.f32 %v551
    %v1064 = vcvt.s32.f32 %v552
    %v1065 = vcvt.s32.f32 %v553
    %v1066 = vcvt.s32.f32 %v554
    %v1067 = vcvt.s32.f32 %v555
    %v1068 = vcvt.s32.f32 %v556
    %v1069 = vcvt.s32.f32 %v557
    %v1070 = vcvt.s32.f32 %v558
    %v1071 = vcvt.s32.f32 %v559
    %v1072 = vcvt.s32.f32 %v560
    %v1073 = vcvt.s32.f32 %v561
    %v1074 = vcvt.s32.f32 %v562
    %v1075 = vcvt.s32.f32 %v563
    %v1076 = vcvt.s32.f32 %v564
    %v1077 = vcvt.s32.f32 %v565
    %v1078 = vcvt.s32.f32 %v566
    %v1079 = vcvt.s32.f32 %v567
    %v1080 = vcvt.s32.f32 %v568
    %v1081 = vcvt.s32.f32 %v569
    %v1082 = vcvt.s32.f32 %v570
    %v1083 = vcvt.s32.f32 %v571
    %v1084 = vcvt.s32.f32 %v572
    %v1085 = vcvt.s32.f32 %v573
    %v1086 = vcvt.s32.f32 %v574
    %v1087 = vcvt.s32.f32 %v575
    %v1088 = vcvt.s32.f32 %v576
    %v1089 = vcvt.s32.f32 %v577
    %v1090 = vcvt.s32.f32 %v578
    %v1091 = vcvt.s32.f32 %v579
    %v1092 = vcvt.s32.f32 %v580
    %v1093 = vcvt.s32.f32 %v581
    %v1094 = vcvt.s32.f32 %v582
    %v1095 = vcvt.s32.f32 %v583
    %v1096 = vcvt.s32.f32 %v584
    %v1097 = vcvt.s32.f32 %v585
    %v1098 = vcvt.s32.f32 %v586
    %v1099 = vcvt.s32.f32 %v587
    %v1100 = vcvt.s32.f32 %v588
    %v1101 = vcvt.s32.f32 %v589
    %v1102 = vcvt.s32.f32 %v590
    %v1103 = vcvt.s32.f32 %v591
    %v1104 = vcvt.s32.f32 %v592
    %v1105 = vcvt.s32.f32 %v593
    %v1106 = vcvt.s32.f32 %v594
    %v1107 = vcvt.s32.f32 %v595
    %v1108 = vcvt.s32.f32 %v596
    %v1109 = vcvt.s32.f32 %v597
    %v1110 = vcvt.s32.f32 %v598
    %v1111 = vcvt.s32.f32 %v599
    %v1112 = vcvt.s32.f32 %v600
    %v1113 = vcvt.s32.f32 %v601
    %v1114 = vcvt.s32.f32 %v602
    %v1115 = vcvt.s32.f32 %v603
    %v1116 = vcvt.s32.f32 %v604
    %v1117 = vcvt.s32.f32 %v605
    %v1118 = vcvt.s32.f32 %v606
    %v1119 = vcvt.s32.f32 %v607
    %v1120 = vcvt.s32.f32 %v608
    %v1121 = vcvt.s32.f32 %v609
    %v1122 = vcvt.s32.f32 %v610
    %v1123 = vcvt.s32.f32 %v611
    %v1124 = vcvt.s32.f32 %v612
    %v1125 = vcvt.s32.f32 %v613
    %v1126 = vcvt.s32.f32 %v614
    %v1127 = vcvt.s32.f32 %v615
    %v1128 = vcvt.s32.f32 %v616
    %v1129 = vcvt.s32.f32 %v617
    %v1130 = vcvt.s32.f32 %v618
    %v1131 = vcvt.s32.f32 %v619
    %v1132 = vcvt.s32.f32 %v620
    %v1133 = vcvt.s32.f32 %v621
    %v1134 = vcvt.s32.f32 %v622
    %v1135 = vcvt.s32.f32 %v623
    %v1136 = vcvt.s32.f32 %v624
    %v1137 = vcvt.s32.f32 %v625
    %v1138 = vcvt.s32.f32 %v626
    %v1139 = vcvt.s32.f32 %v627
    %v1140 = vcvt.s32.f32 %v628
    %v1141 = vcvt.s32.f32 %v629
    %v1142 = vcvt.s32.f32 %v630
    %v1143 = vcvt.s32.f32 %v631
    %v1144 = vcvt.s32.f32 %v632
    %v1145 = vcvt.s32.f32 %v633
    %v1146 = vcvt.s32.f32 %v634
    %v1147 = vcvt.s32.f32 %v635
    %v1148 = vcvt.s32.f32 %v636
    %v1149 = vcvt.s32.f32 %v637
    %v1150 = vcvt.s32.f32 %v638
    %v1151 = vcvt.s32.f32 %v639
    %v1152 = vcvt.s32.f32 %v640
    %v1153 = vcvt.s32.f32 %v641
    %v1154 = vcvt.s32.f32 %v642
    %v1155 = vcvt.s32.f32 %v643
    %v1156 = vcvt.s32.f32 %v644
    %v1157 = vcvt.s32.f32 %v645
    %v1158 = vcvt.s32.f32 %v646
    %v1159 = vcvt.s32.f32 %v647
    %v1160 = vcvt.s32.f32 %v648
    %v1161 = vcvt.s32.f32 %v649
    %v1162 = vcvt.s32.f32 %v650
    %v1163 = vcvt.s32.f32 %v651
    %v1164 = vcvt.s32.f32 %v652
    %v1165 = vcvt.s32.f32 %v653
    %v1166 = vcvt.s32.f32 %v654
    %v1167 = vcvt.s32.f32 %v655
    %v1168 = vcvt.s32.f32 %v656
    %v1169 = vcvt.s32.f32 %v657
    %v1170 = vcvt.s32.f32 %v658
    %v1171 = vcvt.s32.f32 %v659
    %v1172 = vcvt.s32.f32 %v660
    %v1173 = vcvt.s32.f32 %v661
    %v1174 = vcvt.s32.f32 %v662
    %v1175 = vcvt.s32.f32 %v663
    %v1176 = vcvt.s32.f32 %v664
    %v1177 = vcvt.s32.f32 %v665
    %v1178 = vcvt.s32.f32 %v666
    %v1179 = vcvt.s32.f32 %v667
    %v1180 = vcvt.s32.f32 %v668
    %v1181 = vcvt.s32.f32 %v669
    %v1182 = vcvt.s32.f32 %v670
    %v1183 = vcvt.s32.f32 %v671
    %v1184 = vcvt.s32.f32 %v672
    %v1185 = vcvt.s32.f32 %v673
    %v1186 = vcvt.s32.f32 %v674
    %v1187 = vcvt.s32.f32 %v675
    %v1188 = vcvt.s32.f32 %v676
    %v1189 = vcvt.s32.f32 %v677
    %v1190 = vcvt.s32.f32 %v678
    %v1191 = vcvt.s32.f32 %v679
    %v1192 = vcvt.s32.f32 %v680
    %v1193 = vcvt.s32.f32 %v681
    %v1194 = vcvt.s32.f32 %v682
    %v1195 = vcvt.s32.f32 %v683
    %v1196 = vcvt.s32.f32 %v684
    %v1197 = vcvt.s32.f32 %v685
    %v1198 = vcvt.s32.f32 %v686
    %v1199 = vcvt.s32.f32 %v687
    %v1200 = vcvt.s32.f32 %v688
    %v1201 = vcvt.s32.f32 %v689
    %v1202 = vcvt.s32.f32 %v690
    %v1203 = vcvt.s32.f32 %v691
    %v1204 = vcvt.s32.f32 %v692
    %v1205 = vcvt.s32.f32 %v693
    %v1206 = vcvt.s32.f32 %v694
    %v1207 = vcvt.s32.f32 %v695
    %v1208 = vcvt.s32.f32 %v696
    %v1209 = vcvt.s32.f32 %v697
    %v1210 = vcvt.s32.f32 %v698
    %v1211 = vcvt.s32.f32 %v699
    %v1212 = vcvt.s32.f32 %v700
    %v1213 = vcvt.s32.f32 %v701
    %v1214 = vcvt.s32.f32 %v702
    %v1215 = vcvt.s32.f32 %v703
    %v1216 = vcvt.s32.f32 %v704
    %v1217 = vpack.c.bf16 %v706, %v705
    %v1218 = vpack.c.bf16 %v708, %v707
    %v1219 = vpack.c.bf16 %v710, %v709
    %v1220 = vpack.c.bf16 %v712, %v711
    %v1221 = vpack.c.bf16 %v714, %v713
    %v1222 = vpack.c.bf16 %v716, %v715
    %v1223 = vpack.c.bf16 %v718, %v717
    %v1224 = vpack.c.bf16 %v720, %v719
    %v1225 = vpack.c.bf16 %v722, %v721
    %v1226 = vpack.c.bf16 %v724, %v723
    %v1227 = vpack.c.bf16 %v726, %v725
    %v1228 = vpack.c.bf16 %v728, %v727
    %v1229 = vpack.c.bf16 %v730, %v729
    %v1230 = vpack.c.bf16 %v732, %v731
    %v1231 = vpack.c.bf16 %v734, %v733
    %v1232 = vpack.c.bf16 %v736, %v735
    %v1233 = vpack.c.bf16 %v738, %v737
    %v1234 = vpack.c.bf16 %v740, %v739
    %v1235 = vpack.c.bf16 %v742, %v741
    %v1236 = vpack.c.bf16 %v744, %v743
    %v1237 = vpack.c.bf16 %v746, %v745
    %v1238 = vpack.c.bf16 %v748, %v747
    %v1239 = vpack.c.bf16 %v750, %v749
    %v1240 = vpack.c.bf16 %v752, %v751
    %v1241 = vpack.c.bf16 %v754, %v753
    %v1242 = vpack.c.bf16 %v756, %v755
    %v1243 = vpack.c.bf16 %v758, %v757
    %v1244 = vpack.c.bf16 %v760, %v759
    %v1245 = vpack.c.bf16 %v762, %v761
    %v1246 = vpack.c.bf16 %v764, %v763
    %v1247 = vpack.c.bf16 %v766, %v765
    %v1248 = vpack.c.bf16 %v768, %v767
    %v1249 = vpack.c.bf16 %v770, %v769
    %v1250 = vpack.c.bf16 %v772, %v771
    %v1251 = vpack.c.bf16 %v774, %v773
    %v1252 = vpack.c.bf16 %v776, %v775
    %v1253 = vpack.c.bf16 %v778, %v777
    %v1254 = vpack.c.bf16 %v780, %v779
    %v1255 = vpack.c.bf16 %v782, %v781
    %v1256 = vpack.c.bf16 %v784, %v783
    %v1257 = vpack.c.bf16 %v786, %v785
    %v1258 = vpack.c.bf16 %v788, %v787
    %v1259 = vpack.c.bf16 %v790, %v789
    %v1260 = vpack.c.bf16 %v792, %v791
    %v1261 = vpack.c.bf16 %v794, %v793
    %v1262 = vpack.c.bf16 %v796, %v795
    %v1263 = vpack.c.bf16 %v798, %v797
    %v1264 = vpack.c.bf16 %v800, %v799
    %v1265 = vpack.c.bf16 %v802, %v801
    %v1266 = vpack.c.bf16 %v804, %v803
    %v1267 = vpack.c.bf16 %v806, %v805
    %v1268 = vpack.c.bf16 %v808, %v807
    %v1269 = vpack.c.bf16 %v810, %v809
    %v1270 = vpack.c.bf16 %v812, %v811
    %v1271 = vpack.c.bf16 %v814, %v813
    %v1272 = vpack.c.bf16 %v816, %v815
    %v1273 = vpack.c.bf16 %v818, %v817
    %v1274 = vpack.c.bf16 %v820, %v819
    %v1275 = vpack.c.bf16 %v822, %v821
    %v1276 = vpack.c.bf16 %v824, %v823
    %v1277 = vpack.c.bf16 %v826, %v825
    %v1278 = vpack.c.bf16 %v828, %v827
    %v1279 = vpack.c.bf16 %v830, %v829
    %v1280 = vpack.c.bf16 %v832, %v831
    %v1281 = vpack.c.bf16 %v834, %v833
    %v1282 = vpack.c.bf16 %v836, %v835
    %v1283 = vpack.c.bf16 %v838, %v837
    %v1284 = vpack.c.bf16 %v840, %v839
    %v1285 = vpack.c.bf16 %v842, %v841
    %v1286 = vpack.c.bf16 %v844, %v843
    %v1287 = vpack.c.bf16 %v846, %v845
    %v1288 = vpack.c.bf16 %v848, %v847
    %v1289 = vpack.c.bf16 %v850, %v849
    %v1290 = vpack.c.bf16 %v852, %v851
    %v1291 = vpack.c.bf16 %v854, %v853
    %v1292 = vpack.c.bf16 %v856, %v855
    %v1293 = vpack.c.bf16 %v858, %v857
    %v1294 = vpack.c.bf16 %v860, %v859
    %v1295 = vpack.c.bf16 %v862, %v861
    %v1296 = vpack.c.bf16 %v864, %v863
    %v1297 = vpack.c.bf16 %v866, %v865
    %v1298 = vpack.c.bf16 %v868, %v867
    %v1299 = vpack.c.bf16 %v870, %v869
    %v1300 = vpack.c.bf16 %v872, %v871
    %v1301 = vpack.c.bf16 %v874, %v873
    %v1302 = vpack.c.bf16 %v876, %v875
    %v1303 = vpack.c.bf16 %v878, %v877
    %v1304 = vpack.c.bf16 %v880, %v879
    %v1305 = vpack.c.bf16 %v882, %v881
    %v1306 = vpack.c.bf16 %v884, %v883
    %v1307 = vpack.c.bf16 %v886, %v885
    %v1308 = vpack.c.bf16 %v888, %v887
    %v1309 = vpack.c.bf16 %v890, %v889
    %v1310 = vpack.c.bf16 %v892, %v891
    %v1311 = vpack.c.bf16 %v894, %v893
    %v1312 = vpack.c.bf16 %v896, %v895
    %v1313 = vpack.c.bf16 %v898, %v897
    %v1314 = vpack.c.bf16 %v900, %v899
    %v1315 = vpack.c.bf16 %v902, %v901
    %v1316 = vpack.c.bf16 %v904, %v903
    %v1317 = vpack.c.bf16 %v906, %v905
    %v1318 = vpack.c.bf16 %v908, %v907
    %v1319 = vpack.c.bf16 %v910, %v909
    %v1320 = vpack.c.bf16 %v912, %v911
    %v1321 = vpack.c.bf16 %v914, %v913
    %v1322 = vpack.c.bf16 %v916, %v915
    %v1323 = vpack.c.bf16 %v918, %v917
    %v1324 = vpack.c.bf16 %v920, %v919
    %v1325 = vpack.c.bf16 %v922, %v921
    %v1326 = vpack.c.bf16 %v924, %v923
    %v1327 = vpack.c.bf16 %v926, %v925
    %v1328 = vpack.c.bf16 %v928, %v927
    %v1329 = vpack.c.bf16 %v930, %v929
    %v1330 = vpack.c.bf16 %v932, %v931
    %v1331 = vpack.c.bf16 %v934, %v933
    %v1332 = vpack.c.bf16 %v936, %v935
    %v1333 = vpack.c.bf16 %v938, %v937
    %v1334 = vpack.c.bf16 %v940, %v939
    %v1335 = vpack.c.bf16 %v942, %v941
    %v1336 = vpack.c.bf16 %v944, %v943
    %v1337 = vpack.c.bf16 %v946, %v945
    %v1338 = vpack.c.bf16 %v948, %v947
    %v1339 = vpack.c.bf16 %v950, %v949
    %v1340 = vpack.c.bf16 %v952, %v951
    %v1341 = vpack.c.bf16 %v954, %v953
    %v1342 = vpack.c.bf16 %v956, %v955
    %v1343 = vpack.c.bf16 %v958, %v957
    %v1344 = vpack.c.bf16 %v960, %v959
    %v1345 = vpack.c.bf16 %v962, %v961
    %v1346 = vpack.c.bf16 %v964, %v963
    %v1347 = vpack.c.bf16 %v966, %v965
    %v1348 = vpack.c.bf16 %v968, %v967
    %v1349 = vpack.c.bf16 %v970, %v969
    %v1350 = vpack.c.bf16 %v972, %v971
    %v1351 = vpack.c.bf16 %v974, %v973
    %v1352 = vpack.c.bf16 %v976, %v975
    %v1353 = vpack.c.bf16 %v978, %v977
    %v1354 = vpack.c.bf16 %v980, %v979
    %v1355 = vpack.c.bf16 %v982, %v981
    %v1356 = vpack.c.bf16 %v984, %v983
    %v1357 = vpack.c.bf16 %v986, %v985
    %v1358 = vpack.c.bf16 %v988, %v987
    %v1359 = vpack.c.bf16 %v990, %v989
    %v1360 = vpack.c.bf16 %v992, %v991
    %v1361 = vpack.c.bf16 %v994, %v993
    %v1362 = vpack.c.bf16 %v996, %v995
    %v1363 = vpack.c.bf16 %v998, %v997
    %v1364 = vpack.c.bf16 %v1000, %v999
    %v1365 = vpack.c.bf16 %v1002, %v1001
    %v1366 = vpack.c.bf16 %v1004, %v1003
    %v1367 = vpack.c.bf16 %v1006, %v1005
    %v1368 = vpack.c.bf16 %v1008, %v1007
    %v1369 = vpack.c.bf16 %v1010, %v1009
    %v1370 = vpack.c.bf16 %v1012, %v1011
    %v1371 = vpack.c.bf16 %v1014, %v1013
    %v1372 = vpack.c.bf16 %v1016, %v1015
    %v1373 = vpack.c.bf16 %v1018, %v1017
    %v1374 = vpack.c.bf16 %v1020, %v1019
    %v1375 = vpack.c.bf16 %v1022, %v1021
    %v1376 = vpack.c.bf16 %v1024, %v1023
    %v1377 = vpack.c.bf16 %v1026, %v1025
    %v1378 = vpack.c.bf16 %v1028, %v1027
    %v1379 = vpack.c.bf16 %v1030, %v1029
    %v1380 = vpack.c.bf16 %v1032, %v1031
    %v1381 = vpack.c.bf16 %v1034, %v1033
    %v1382 = vpack.c.bf16 %v1036, %v1035
    %v1383 = vpack.c.bf16 %v1038, %v1037
    %v1384 = vpack.c.bf16 %v1040, %v1039
    %v1385 = vpack.c.bf16 %v1042, %v1041
    %v1386 = vpack.c.bf16 %v1044, %v1043
    %v1387 = vpack.c.bf16 %v1046, %v1045
    %v1388 = vpack.c.bf16 %v1048, %v1047
    %v1389 = vpack.c.bf16 %v1050, %v1049
    %v1390 = vpack.c.bf16 %v1052, %v1051
    %v1391 = vpack.c.bf16 %v1054, %v1053
    %v1392 = vpack.c.bf16 %v1056, %v1055
    %v1393 = vpack.c.bf16 %v1058, %v1057
    %v1394 = vpack.c.bf16 %v1060, %v1059
    %v1395 = vpack.c.bf16 %v1062, %v1061
    %v1396 = vpack.c.bf16 %v1064, %v1063
    %v1397 = vpack.c.bf16 %v1066, %v1065
    %v1398 = vpack.c.bf16 %v1068, %v1067
    %v1399 = vpack.c.bf16 %v1070, %v1069
    %v1400 = vpack.c.bf16 %v1072, %v1071
    %v1401 = vpack.c.bf16 %v1074, %v1073
    %v1402 = vpack.c.bf16 %v1076, %v1075
    %v1403 = vpack.c.bf16 %v1078, %v1077
    %v1404 = vpack.c.bf16 %v1080, %v1079
    %v1405 = vpack.c.bf16 %v1082, %v1081
    %v1406 = vpack.c.bf16 %v1084, %v1083
    %v1407 = vpack.c.bf16 %v1086, %v1085
    %v1408 = vpack.c.bf16 %v1088, %v1087
    %v1409 = vpack.c.bf16 %v1090, %v1089
    %v1410 = vpack.c.bf16 %v1092, %v1091
    %v1411 = vpack.c.bf16 %v1094, %v1093
    %v1412 = vpack.c.bf16 %v1096, %v1095
    %v1413 = vpack.c.bf16 %v1098, %v1097
    %v1414 = vpack.c.bf16 %v1100, %v1099
    %v1415 = vpack.c.bf16 %v1102, %v1101
    %v1416 = vpack.c.bf16 %v1104, %v1103
    %v1417 = vpack.c.bf16 %v1106, %v1105
    %v1418 = vpack.c.bf16 %v1108, %v1107
    %v1419 = vpack.c.bf16 %v1110, %v1109
    %v1420 = vpack.c.bf16 %v1112, %v1111
    %v1421 = vpack.c.bf16 %v1114, %v1113
    %v1422 = vpack.c.bf16 %v1116, %v1115
    %v1423 = vpack.c.bf16 %v1118, %v1117
    %v1424 = vpack.c.bf16 %v1120, %v1119
    %v1425 = vpack.c.bf16 %v1122, %v1121
    %v1426 = vpack.c.bf16 %v1124, %v1123
    %v1427 = vpack.c.bf16 %v1126, %v1125
    %v1428 = vpack.c.bf16 %v1128, %v1127
    %v1429 = vpack.c.bf16 %v1130, %v1129
    %v1430 = vpack.c.bf16 %v1132, %v1131
    %v1431 = vpack.c.bf16 %v1134, %v1133
    %v1432 = vpack.c.bf16 %v1136, %v1135
    %v1433 = vpack.c.bf16 %v1138, %v1137
    %v1434 = vpack.c.bf16 %v1140, %v1139
    %v1435 = vpack.c.bf16 %v1142, %v1141
    %v1436 = vpack.c.bf16 %v1144, %v1143
    %v1437 = vpack.c.bf16 %v1146, %v1145
    %v1438 = vpack.c.bf16 %v1148, %v1147
    %v1439 = vpack.c.bf16 %v1150, %v1149
    %v1440 = vpack.c.bf16 %v1152, %v1151
    %v1441 = vpack.c.bf16 %v1154, %v1153
    %v1442 = vpack.c.bf16 %v1156, %v1155
    %v1443 = vpack.c.bf16 %v1158, %v1157
    %v1444 = vpack.c.bf16 %v1160, %v1159
    %v1445 = vpack.c.bf16 %v1162, %v1161
    %v1446 = vpack.c.bf16 %v1164, %v1163
    %v1447 = vpack.c.bf16 %v1166, %v1165
    %v1448 = vpack.c.bf16 %v1168, %v1167
    %v1449 = vpack.c.bf16 %v1170, %v1169
    %v1450 = vpack.c.bf16 %v1172, %v1171
    %v1451 = vpack.c.bf16 %v1174, %v1173
    %v1452 = vpack.c.bf16 %v1176, %v1175
    %v1453 = vpack.c.bf16 %v1178, %v1177
    %v1454 = vpack.c.bf16 %v1180, %v1179
    %v1455 = vpack.c.bf16 %v1182, %v1181
    %v1456 = vpack.c.bf16 %v1184, %v1183
    %v1457 = vpack.c.bf16 %v1186, %v1185
    %v1458 = vpack.c.bf16 %v1188, %v1187
    %v1459 = vpack.c.bf16 %v1190, %v1189
    %v1460 = vpack.c.bf16 %v1192, %v1191
    %v1461 = vpack.c.bf16 %v1194, %v1193
    %v1462 = vpack.c.bf16 %v1196, %v1195
    %v1463 = vpack.c.bf16 %v1198, %v1197
    %v1464 = vpack.c.bf16 %v1200, %v1199
    %v1465 = vpack.c.bf16 %v1202, %v1201
    %v1466 = vpack.c.bf16 %v1204, %v1203
    %v1467 = vpack.c.bf16 %v1206, %v1205
    %v1468 = vpack.c.bf16 %v1208, %v1207
    %v1469 = vpack.c.bf16 %v1210, %v1209
    %v1470 = vpack.c.bf16 %v1212, %v1211
    %v1471 = vpack.c.bf16 %v1214, %v1213
    %v1472 = vpack.c.bf16 %v1216, %v1215
    %v1475 = vunpack.c.l.b16 %v63
    %v1476 = vunpack.c.h.b16 %v63
    %v1477 = vunpack.c.l.b16 %v64
    %v1478 = vunpack.c.h.b16 %v64
    %v1479 = vpack.c.b16 %v1475, %v1475
    %v1480 = vpack.c.b16 %v1476, %v1476
    %v1481 = vpack.c.b16 %v1477, %v1477
    %v1482 = vpack.c.b16 %v1478, %v1478
    %v1484 = vpack.i.b16 %v1479, %v1479
    %v1486 = vperm.slane %v1484, 0
    %v1488 = vpack.i.b16 %v1480, %v1480
    %v1490 = vperm.slane %v1488, 0
    %v1492 = vpack.i.b16 %v1481, %v1481
    %v1494 = vperm.slane %v1492, 0
    %v1496 = vpack.i.b16 %v1482, %v1482
    %v1498 = vperm.slane %v1496, 0
    %v1499 = vunpack.c.l.bf16 %v1217
    %v1500 = vunpack.c.h.bf16 %v1217
    %v1501 = vunpack.c.l.bf16 %v1218
    %v1502 = vunpack.c.h.bf16 %v1218
    %v1503 = vunpack.c.l.bf16 %v1219
    %v1504 = vunpack.c.h.bf16 %v1219
    %v1505 = vunpack.c.l.bf16 %v1220
    %v1506 = vunpack.c.h.bf16 %v1220
    %v1507 = vunpack.c.l.bf16 %v1221
    %v1508 = vunpack.c.h.bf16 %v1221
    %v1509 = vunpack.c.l.bf16 %v1222
    %v1510 = vunpack.c.h.bf16 %v1222
    %v1511 = vunpack.c.l.bf16 %v1223
    %v1512 = vunpack.c.h.bf16 %v1223
    %v1513 = vunpack.c.l.bf16 %v1224
    %v1514 = vunpack.c.h.bf16 %v1224
    %v1515 = vunpack.c.l.bf16 %v1225
    %v1516 = vunpack.c.h.bf16 %v1225
    %v1517 = vunpack.c.l.bf16 %v1226
    %v1518 = vunpack.c.h.bf16 %v1226
    %v1519 = vunpack.c.l.bf16 %v1227
    %v1520 = vunpack.c.h.bf16 %v1227
    %v1521 = vunpack.c.l.bf16 %v1228
    %v1522 = vunpack.c.h.bf16 %v1228
    %v1523 = vunpack.c.l.bf16 %v1229
    %v1524 = vunpack.c.h.bf16 %v1229
    %v1525 = vunpack.c.l.bf16 %v1230
    %v1526 = vunpack.c.h.bf16 %v1230
    %v1527 = vunpack.c.l.bf16 %v1231
    %v1528 = vunpack.c.h.bf16 %v1231
    %v1529 = vunpack.c.l.bf16 %v1232
    %v1530 = vunpack.c.h.bf16 %v1232
    %v1531 = vunpack.c.l.bf16 %v1233
    %v1532 = vunpack.c.h.bf16 %v1233
    %v1533 = vunpack.c.l.bf16 %v1234
    %v1534 = vunpack.c.h.bf16 %v1234
    %v1535 = vunpack.c.l.bf16 %v1235
    %v1536 = vunpack.c.h.bf16 %v1235
    %v1537 = vunpack.c.l.bf16 %v1236
    %v1538 = vunpack.c.h.bf16 %v1236
    %v1539 = vunpack.c.l.bf16 %v1237
    %v1540 = vunpack.c.h.bf16 %v1237
    %v1541 = vunpack.c.l.bf16 %v1238
    %v1542 = vunpack.c.h.bf16 %v1238
    %v1543 = vunpack.c.l.bf16 %v1239
    %v1544 = vunpack.c.h.bf16 %v1239
    %v1545 = vunpack.c.l.bf16 %v1240
    %v1546 = vunpack.c.h.bf16 %v1240
    %v1547 = vunpack.c.l.bf16 %v1241
    %v1548 = vunpack.c.h.bf16 %v1241
    %v1549 = vunpack.c.l.bf16 %v1242
    %v1550 = vunpack.c.h.bf16 %v1242
    %v1551 = vunpack.c.l.bf16 %v1243
    %v1552 = vunpack.c.h.bf16 %v1243
    %v1553 = vunpack.c.l.bf16 %v1244
    %v1554 = vunpack.c.h.bf16 %v1244
    %v1555 = vunpack.c.l.bf16 %v1245
    %v1556 = vunpack.c.h.bf16 %v1245
    %v1557 = vunpack.c.l.bf16 %v1246
    %v1558 = vunpack.c.h.bf16 %v1246
    %v1559 = vunpack.c.l.bf16 %v1247
    %v1560 = vunpack.c.h.bf16 %v1247
    %v1561 = vunpack.c.l.bf16 %v1248
    %v1562 = vunpack.c.h.bf16 %v1248
    %v1563 = vunpack.c.l.bf16 %v1249
    %v1564 = vunpack.c.h.bf16 %v1249
    %v1565 = vunpack.c.l.bf16 %v1250
    %v1566 = vunpack.c.h.bf16 %v1250
    %v1567 = vunpack.c.l.bf16 %v1251
    %v1568 = vunpack.c.h.bf16 %v1251
    %v1569 = vunpack.c.l.bf16 %v1252
    %v1570 = vunpack.c.h.bf16 %v1252
    %v1571 = vunpack.c.l.bf16 %v1253
    %v1572 = vunpack.c.h.bf16 %v1253
    %v1573 = vunpack.c.l.bf16 %v1254
    %v1574 = vunpack.c.h.bf16 %v1254
    %v1575 = vunpack.c.l.bf16 %v1255
    %v1576 = vunpack.c.h.bf16 %v1255
    %v1577 = vunpack.c.l.bf16 %v1256
    %v1578 = vunpack.c.h.bf16 %v1256
    %v1579 = vunpack.c.l.bf16 %v1257
    %v1580 = vunpack.c.h.bf16 %v1257
    %v1581 = vunpack.c.l.bf16 %v1258
    %v1582 = vunpack.c.h.bf16 %v1258
    %v1583 = vunpack.c.l.bf16 %v1259
    %v1584 = vunpack.c.h.bf16 %v1259
    %v1585 = vunpack.c.l.bf16 %v1260
    %v1586 = vunpack.c.h.bf16 %v1260
    %v1587 = vunpack.c.l.bf16 %v1261
    %v1588 = vunpack.c.h.bf16 %v1261
    %v1589 = vunpack.c.l.bf16 %v1262
    %v1590 = vunpack.c.h.bf16 %v1262
    %v1591 = vunpack.c.l.bf16 %v1263
    %v1592 = vunpack.c.h.bf16 %v1263
    %v1593 = vunpack.c.l.bf16 %v1264
    %v1594 = vunpack.c.h.bf16 %v1264
    %v1595 = vunpack.c.l.bf16 %v1265
    %v1596 = vunpack.c.h.bf16 %v1265
    %v1597 = vunpack.c.l.bf16 %v1266
    %v1598 = vunpack.c.h.bf16 %v1266
    %v1599 = vunpack.c.l.bf16 %v1267
    %v1600 = vunpack.c.h.bf16 %v1267
    %v1601 = vunpack.c.l.bf16 %v1268
    %v1602 = vunpack.c.h.bf16 %v1268
    %v1603 = vunpack.c.l.bf16 %v1269
    %v1604 = vunpack.c.h.bf16 %v1269
    %v1605 = vunpack.c.l.bf16 %v1270
    %v1606 = vunpack.c.h.bf16 %v1270
    %v1607 = vunpack.c.l.bf16 %v1271
    %v1608 = vunpack.c.h.bf16 %v1271
    %v1609 = vunpack.c.l.bf16 %v1272
    %v1610 = vunpack.c.h.bf16 %v1272
    %v1611 = vunpack.c.l.bf16 %v1273
    %v1612 = vunpack.c.h.bf16 %v1273
    %v1613 = vunpack.c.l.bf16 %v1274
    %v1614 = vunpack.c.h.bf16 %v1274
    %v1615 = vunpack.c.l.bf16 %v1275
    %v1616 = vunpack.c.h.bf16 %v1275
    %v1617 = vunpack.c.l.bf16 %v1276
    %v1618 = vunpack.c.h.bf16 %v1276
    %v1619 = vunpack.c.l.bf16 %v1277
    %v1620 = vunpack.c.h.bf16 %v1277
    %v1621 = vunpack.c.l.bf16 %v1278
    %v1622 = vunpack.c.h.bf16 %v1278
    %v1623 = vunpack.c.l.bf16 %v1279
    %v1624 = vunpack.c.h.bf16 %v1279
    %v1625 = vunpack.c.l.bf16 %v1280
    %v1626 = vunpack.c.h.bf16 %v1280
    %v1627 = vunpack.c.l.bf16 %v1281
    %v1628 = vunpack.c.h.bf16 %v1281
    %v1629 = vunpack.c.l.bf16 %v1282
    %v1630 = vunpack.c.h.bf16 %v1282
    %v1631 = vunpack.c.l.bf16 %v1283
    %v1632 = vunpack.c.h.bf16 %v1283
    %v1633 = vunpack.c.l.bf16 %v1284
    %v1634 = vunpack.c.h.bf16 %v1284
    %v1635 = vunpack.c.l.bf16 %v1285
    %v1636 = vunpack.c.h.bf16 %v1285
    %v1637 = vunpack.c.l.bf16 %v1286
    %v1638 = vunpack.c.h.bf16 %v1286
    %v1639 = vunpack.c.l.bf16 %v1287
    %v1640 = vunpack.c.h.bf16 %v1287
    %v1641 = vunpack.c.l.bf16 %v1288
    %v1642 = vunpack.c.h.bf16 %v1288
    %v1643 = vunpack.c.l.bf16 %v1289
    %v1644 = vunpack.c.h.bf16 %v1289
    %v1645 = vunpack.c.l.bf16 %v1290
    %v1646 = vunpack.c.h.bf16 %v1290
    %v1647 = vunpack.c.l.bf16 %v1291
    %v1648 = vunpack.c.h.bf16 %v1291
    %v1649 = vunpack.c.l.bf16 %v1292
    %v1650 = vunpack.c.h.bf16 %v1292
    %v1651 = vunpack.c.l.bf16 %v1293
    %v1652 = vunpack.c.h.bf16 %v1293
    %v1653 = vunpack.c.l.bf16 %v1294
    %v1654 = vunpack.c.h.bf16 %v1294
    %v1655 = vunpack.c.l.bf16 %v1295
    %v1656 = vunpack.c.h.bf16 %v1295
    %v1657 = vunpack.c.l.bf16 %v1296
    %v1658 = vunpack.c.h.bf16 %v1296
    %v1659 = vunpack.c.l.bf16 %v1297
    %v1660 = vunpack.c.h.bf16 %v1297
    %v1661 = vunpack.c.l.bf16 %v1298
    %v1662 = vunpack.c.h.bf16 %v1298
    %v1663 = vunpack.c.l.bf16 %v1299
    %v1664 = vunpack.c.h.bf16 %v1299
    %v1665 = vunpack.c.l.bf16 %v1300
    %v1666 = vunpack.c.h.bf16 %v1300
    %v1667 = vunpack.c.l.bf16 %v1301
    %v1668 = vunpack.c.h.bf16 %v1301
    %v1669 = vunpack.c.l.bf16 %v1302
    %v1670 = vunpack.c.h.bf16 %v1302
    %v1671 = vunpack.c.l.bf16 %v1303
    %v1672 = vunpack.c.h.bf16 %v1303
    %v1673 = vunpack.c.l.bf16 %v1304
    %v1674 = vunpack.c.h.bf16 %v1304
    %v1675 = vunpack.c.l.bf16 %v1305
    %v1676 = vunpack.c.h.bf16 %v1305
    %v1677 = vunpack.c.l.bf16 %v1306
    %v1678 = vunpack.c.h.bf16 %v1306
    %v1679 = vunpack.c.l.bf16 %v1307
    %v1680 = vunpack.c.h.bf16 %v1307
    %v1681 = vunpack.c.l.bf16 %v1308
    %v1682 = vunpack.c.h.bf16 %v1308
    %v1683 = vunpack.c.l.bf16 %v1309
    %v1684 = vunpack.c.h.bf16 %v1309
    %v1685 = vunpack.c.l.bf16 %v1310
    %v1686 = vunpack.c.h.bf16 %v1310
    %v1687 = vunpack.c.l.bf16 %v1311
    %v1688 = vunpack.c.h.bf16 %v1311
    %v1689 = vunpack.c.l.bf16 %v1312
    %v1690 = vunpack.c.h.bf16 %v1312
    %v1691 = vunpack.c.l.bf16 %v1313
    %v1692 = vunpack.c.h.bf16 %v1313
    %v1693 = vunpack.c.l.bf16 %v1314
    %v1694 = vunpack.c.h.bf16 %v1314
    %v1695 = vunpack.c.l.bf16 %v1315
    %v1696 = vunpack.c.h.bf16 %v1315
    %v1697 = vunpack.c.l.bf16 %v1316
    %v1698 = vunpack.c.h.bf16 %v1316
    %v1699 = vunpack.c.l.bf16 %v1317
    %v1700 = vunpack.c.h.bf16 %v1317
    %v1701 = vunpack.c.l.bf16 %v1318
    %v1702 = vunpack.c.h.bf16 %v1318
    %v1703 = vunpack.c.l.bf16 %v1319
    %v1704 = vunpack.c.h.bf16 %v1319
    %v1705 = vunpack.c.l.bf16 %v1320
    %v1706 = vunpack.c.h.bf16 %v1320
    %v1707 = vunpack.c.l.bf16 %v1321
    %v1708 = vunpack.c.h.bf16 %v1321
    %v1709 = vunpack.c.l.bf16 %v1322
    %v1710 = vunpack.c.h.bf16 %v1322
    %v1711 = vunpack.c.l.bf16 %v1323
    %v1712 = vunpack.c.h.bf16 %v1323
    %v1713 = vunpack.c.l.bf16 %v1324
    %v1714 = vunpack.c.h.bf16 %v1324
    %v1715 = vunpack.c.l.bf16 %v1325
    %v1716 = vunpack.c.h.bf16 %v1325
    %v1717 = vunpack.c.l.bf16 %v1326
    %v1718 = vunpack.c.h.bf16 %v1326
    %v1719 = vunpack.c.l.bf16 %v1327
    %v1720 = vunpack.c.h.bf16 %v1327
    %v1721 = vunpack.c.l.bf16 %v1328
    %v1722 = vunpack.c.h.bf16 %v1328
    %v1723 = vunpack.c.l.bf16 %v1329
    %v1724 = vunpack.c.h.bf16 %v1329
    %v1725 = vunpack.c.l.bf16 %v1330
    %v1726 = vunpack.c.h.bf16 %v1330
    %v1727 = vunpack.c.l.bf16 %v1331
    %v1728 = vunpack.c.h.bf16 %v1331
    %v1729 = vunpack.c.l.bf16 %v1332
    %v1730 = vunpack.c.h.bf16 %v1332
    %v1731 = vunpack.c.l.bf16 %v1333
    %v1732 = vunpack.c.h.bf16 %v1333
    %v1733 = vunpack.c.l.bf16 %v1334
    %v1734 = vunpack.c.h.bf16 %v1334
    %v1735 = vunpack.c.l.bf16 %v1335
    %v1736 = vunpack.c.h.bf16 %v1335
    %v1737 = vunpack.c.l.bf16 %v1336
    %v1738 = vunpack.c.h.bf16 %v1336
    %v1739 = vunpack.c.l.bf16 %v1337
    %v1740 = vunpack.c.h.bf16 %v1337
    %v1741 = vunpack.c.l.bf16 %v1338
    %v1742 = vunpack.c.h.bf16 %v1338
    %v1743 = vunpack.c.l.bf16 %v1339
    %v1744 = vunpack.c.h.bf16 %v1339
    %v1745 = vunpack.c.l.bf16 %v1340
    %v1746 = vunpack.c.h.bf16 %v1340
    %v1747 = vunpack.c.l.bf16 %v1341
    %v1748 = vunpack.c.h.bf16 %v1341
    %v1749 = vunpack.c.l.bf16 %v1342
    %v1750 = vunpack.c.h.bf16 %v1342
    %v1751 = vunpack.c.l.bf16 %v1343
    %v1752 = vunpack.c.h.bf16 %v1343
    %v1753 = vunpack.c.l.bf16 %v1344
    %v1754 = vunpack.c.h.bf16 %v1344
    %v1755 = vunpack.c.l.bf16 %v1345
    %v1756 = vunpack.c.h.bf16 %v1345
    %v1757 = vunpack.c.l.bf16 %v1346
    %v1758 = vunpack.c.h.bf16 %v1346
    %v1759 = vunpack.c.l.bf16 %v1347
    %v1760 = vunpack.c.h.bf16 %v1347
    %v1761 = vunpack.c.l.bf16 %v1348
    %v1762 = vunpack.c.h.bf16 %v1348
    %v1763 = vunpack.c.l.bf16 %v1349
    %v1764 = vunpack.c.h.bf16 %v1349
    %v1765 = vunpack.c.l.bf16 %v1350
    %v1766 = vunpack.c.h.bf16 %v1350
    %v1767 = vunpack.c.l.bf16 %v1351
    %v1768 = vunpack.c.h.bf16 %v1351
    %v1769 = vunpack.c.l.bf16 %v1352
    %v1770 = vunpack.c.h.bf16 %v1352
    %v1771 = vunpack.c.l.bf16 %v1353
    %v1772 = vunpack.c.h.bf16 %v1353
    %v1773 = vunpack.c.l.bf16 %v1354
    %v1774 = vunpack.c.h.bf16 %v1354
    %v1775 = vunpack.c.l.bf16 %v1355
    %v1776 = vunpack.c.h.bf16 %v1355
    %v1777 = vunpack.c.l.bf16 %v1356
    %v1778 = vunpack.c.h.bf16 %v1356
    %v1779 = vunpack.c.l.bf16 %v1357
    %v1780 = vunpack.c.h.bf16 %v1357
    %v1781 = vunpack.c.l.bf16 %v1358
    %v1782 = vunpack.c.h.bf16 %v1358
    %v1783 = vunpack.c.l.bf16 %v1359
    %v1784 = vunpack.c.h.bf16 %v1359
    %v1785 = vunpack.c.l.bf16 %v1360
    %v1786 = vunpack.c.h.bf16 %v1360
    %v1787 = vunpack.c.l.bf16 %v1361
    %v1788 = vunpack.c.h.bf16 %v1361
    %v1789 = vunpack.c.l.bf16 %v1362
    %v1790 = vunpack.c.h.bf16 %v1362
    %v1791 = vunpack.c.l.bf16 %v1363
    %v1792 = vunpack.c.h.bf16 %v1363
    %v1793 = vunpack.c.l.bf16 %v1364
    %v1794 = vunpack.c.h.bf16 %v1364
    %v1795 = vunpack.c.l.bf16 %v1365
    %v1796 = vunpack.c.h.bf16 %v1365
    %v1797 = vunpack.c.l.bf16 %v1366
    %v1798 = vunpack.c.h.bf16 %v1366
    %v1799 = vunpack.c.l.bf16 %v1367
    %v1800 = vunpack.c.h.bf16 %v1367
    %v1801 = vunpack.c.l.bf16 %v1368
    %v1802 = vunpack.c.h.bf16 %v1368
    %v1803 = vunpack.c.l.bf16 %v1369
    %v1804 = vunpack.c.h.bf16 %v1369
    %v1805 = vunpack.c.l.bf16 %v1370
    %v1806 = vunpack.c.h.bf16 %v1370
    %v1807 = vunpack.c.l.bf16 %v1371
    %v1808 = vunpack.c.h.bf16 %v1371
    %v1809 = vunpack.c.l.bf16 %v1372
    %v1810 = vunpack.c.h.bf16 %v1372
    %v1811 = vunpack.c.l.bf16 %v1373
    %v1812 = vunpack.c.h.bf16 %v1373
    %v1813 = vunpack.c.l.bf16 %v1374
    %v1814 = vunpack.c.h.bf16 %v1374
    %v1815 = vunpack.c.l.bf16 %v1375
    %v1816 = vunpack.c.h.bf16 %v1375
    %v1817 = vunpack.c.l.bf16 %v1376
    %v1818 = vunpack.c.h.bf16 %v1376
    %v1819 = vunpack.c.l.bf16 %v1377
    %v1820 = vunpack.c.h.bf16 %v1377
    %v1821 = vunpack.c.l.bf16 %v1378
    %v1822 = vunpack.c.h.bf16 %v1378
    %v1823 = vunpack.c.l.bf16 %v1379
    %v1824 = vunpack.c.h.bf16 %v1379
    %v1825 = vunpack.c.l.bf16 %v1380
    %v1826 = vunpack.c.h.bf16 %v1380
    %v1827 = vunpack.c.l.bf16 %v1381
    %v1828 = vunpack.c.h.bf16 %v1381
    %v1829 = vunpack.c.l.bf16 %v1382
    %v1830 = vunpack.c.h.bf16 %v1382
    %v1831 = vunpack.c.l.bf16 %v1383
    %v1832 = vunpack.c.h.bf16 %v1383
    %v1833 = vunpack.c.l.bf16 %v1384
    %v1834 = vunpack.c.h.bf16 %v1384
    %v1835 = vunpack.c.l.bf16 %v1385
    %v1836 = vunpack.c.h.bf16 %v1385
    %v1837 = vunpack.c.l.bf16 %v1386
    %v1838 = vunpack.c.h.bf16 %v1386
    %v1839 = vunpack.c.l.bf16 %v1387
    %v1840 = vunpack.c.h.bf16 %v1387
    %v1841 = vunpack.c.l.bf16 %v1388
    %v1842 = vunpack.c.h.bf16 %v1388
    %v1843 = vunpack.c.l.bf16 %v1389
    %v1844 = vunpack.c.h.bf16 %v1389
    %v1845 = vunpack.c.l.bf16 %v1390
    %v1846 = vunpack.c.h.bf16 %v1390
    %v1847 = vunpack.c.l.bf16 %v1391
    %v1848 = vunpack.c.h.bf16 %v1391
    %v1849 = vunpack.c.l.bf16 %v1392
    %v1850 = vunpack.c.h.bf16 %v1392
    %v1851 = vunpack.c.l.bf16 %v1393
    %v1852 = vunpack.c.h.bf16 %v1393
    %v1853 = vunpack.c.l.bf16 %v1394
    %v1854 = vunpack.c.h.bf16 %v1394
    %v1855 = vunpack.c.l.bf16 %v1395
    %v1856 = vunpack.c.h.bf16 %v1395
    %v1857 = vunpack.c.l.bf16 %v1396
    %v1858 = vunpack.c.h.bf16 %v1396
    %v1859 = vunpack.c.l.bf16 %v1397
    %v1860 = vunpack.c.h.bf16 %v1397
    %v1861 = vunpack.c.l.bf16 %v1398
    %v1862 = vunpack.c.h.bf16 %v1398
    %v1863 = vunpack.c.l.bf16 %v1399
    %v1864 = vunpack.c.h.bf16 %v1399
    %v1865 = vunpack.c.l.bf16 %v1400
    %v1866 = vunpack.c.h.bf16 %v1400
    %v1867 = vunpack.c.l.bf16 %v1401
    %v1868 = vunpack.c.h.bf16 %v1401
    %v1869 = vunpack.c.l.bf16 %v1402
    %v1870 = vunpack.c.h.bf16 %v1402
    %v1871 = vunpack.c.l.bf16 %v1403
    %v1872 = vunpack.c.h.bf16 %v1403
    %v1873 = vunpack.c.l.bf16 %v1404
    %v1874 = vunpack.c.h.bf16 %v1404
    %v1875 = vunpack.c.l.bf16 %v1405
    %v1876 = vunpack.c.h.bf16 %v1405
    %v1877 = vunpack.c.l.bf16 %v1406
    %v1878 = vunpack.c.h.bf16 %v1406
    %v1879 = vunpack.c.l.bf16 %v1407
    %v1880 = vunpack.c.h.bf16 %v1407
    %v1881 = vunpack.c.l.bf16 %v1408
    %v1882 = vunpack.c.h.bf16 %v1408
    %v1883 = vunpack.c.l.bf16 %v1409
    %v1884 = vunpack.c.h.bf16 %v1409
    %v1885 = vunpack.c.l.bf16 %v1410
    %v1886 = vunpack.c.h.bf16 %v1410
    %v1887 = vunpack.c.l.bf16 %v1411
    %v1888 = vunpack.c.h.bf16 %v1411
    %v1889 = vunpack.c.l.bf16 %v1412
    %v1890 = vunpack.c.h.bf16 %v1412
    %v1891 = vunpack.c.l.bf16 %v1413
    %v1892 = vunpack.c.h.bf16 %v1413
    %v1893 = vunpack.c.l.bf16 %v1414
    %v1894 = vunpack.c.h.bf16 %v1414
    %v1895 = vunpack.c.l.bf16 %v1415
    %v1896 = vunpack.c.h.bf16 %v1415
    %v1897 = vunpack.c.l.bf16 %v1416
    %v1898 = vunpack.c.h.bf16 %v1416
    %v1899 = vunpack.c.l.bf16 %v1417
    %v1900 = vunpack.c.h.bf16 %v1417
    %v1901 = vunpack.c.l.bf16 %v1418
    %v1902 = vunpack.c.h.bf16 %v1418
    %v1903 = vunpack.c.l.bf16 %v1419
    %v1904 = vunpack.c.h.bf16 %v1419
    %v1905 = vunpack.c.l.bf16 %v1420
    %v1906 = vunpack.c.h.bf16 %v1420
    %v1907 = vunpack.c.l.bf16 %v1421
    %v1908 = vunpack.c.h.bf16 %v1421
    %v1909 = vunpack.c.l.bf16 %v1422
    %v1910 = vunpack.c.h.bf16 %v1422
    %v1911 = vunpack.c.l.bf16 %v1423
    %v1912 = vunpack.c.h.bf16 %v1423
    %v1913 = vunpack.c.l.bf16 %v1424
    %v1914 = vunpack.c.h.bf16 %v1424
    %v1915 = vunpack.c.l.bf16 %v1425
    %v1916 = vunpack.c.h.bf16 %v1425
    %v1917 = vunpack.c.l.bf16 %v1426
    %v1918 = vunpack.c.h.bf16 %v1426
    %v1919 = vunpack.c.l.bf16 %v1427
    %v1920 = vunpack.c.h.bf16 %v1427
    %v1921 = vunpack.c.l.bf16 %v1428
    %v1922 = vunpack.c.h.bf16 %v1428
    %v1923 = vunpack.c.l.bf16 %v1429
    %v1924 = vunpack.c.h.bf16 %v1429
    %v1925 = vunpack.c.l.bf16 %v1430
    %v1926 = vunpack.c.h.bf16 %v1430
    %v1927 = vunpack.c.l.bf16 %v1431
    %v1928 = vunpack.c.h.bf16 %v1431
    %v1929 = vunpack.c.l.bf16 %v1432
    %v1930 = vunpack.c.h.bf16 %v1432
    %v1931 = vunpack.c.l.bf16 %v1433
    %v1932 = vunpack.c.h.bf16 %v1433
    %v1933 = vunpack.c.l.bf16 %v1434
    %v1934 = vunpack.c.h.bf16 %v1434
    %v1935 = vunpack.c.l.bf16 %v1435
    %v1936 = vunpack.c.h.bf16 %v1435
    %v1937 = vunpack.c.l.bf16 %v1436
    %v1938 = vunpack.c.h.bf16 %v1436
    %v1939 = vunpack.c.l.bf16 %v1437
    %v1940 = vunpack.c.h.bf16 %v1437
    %v1941 = vunpack.c.l.bf16 %v1438
    %v1942 = vunpack.c.h.bf16 %v1438
    %v1943 = vunpack.c.l.bf16 %v1439
    %v1944 = vunpack.c.h.bf16 %v1439
    %v1945 = vunpack.c.l.bf16 %v1440
    %v1946 = vunpack.c.h.bf16 %v1440
    %v1947 = vunpack.c.l.bf16 %v1441
    %v1948 = vunpack.c.h.bf16 %v1441
    %v1949 = vunpack.c.l.bf16 %v1442
    %v1950 = vunpack.c.h.bf16 %v1442
    %v1951 = vunpack.c.l.bf16 %v1443
    %v1952 = vunpack.c.h.bf16 %v1443
    %v1953 = vunpack.c.l.bf16 %v1444
    %v1954 = vunpack.c.h.bf16 %v1444
    %v1955 = vunpack.c.l.bf16 %v1445
    %v1956 = vunpack.c.h.bf16 %v1445
    %v1957 = vunpack.c.l.bf16 %v1446
    %v1958 = vunpack.c.h.bf16 %v1446
    %v1959 = vunpack.c.l.bf16 %v1447
    %v1960 = vunpack.c.h.bf16 %v1447
    %v1961 = vunpack.c.l.bf16 %v1448
    %v1962 = vunpack.c.h.bf16 %v1448
    %v1963 = vunpack.c.l.bf16 %v1449
    %v1964 = vunpack.c.h.bf16 %v1449
    %v1965 = vunpack.c.l.bf16 %v1450
    %v1966 = vunpack.c.h.bf16 %v1450
    %v1967 = vunpack.c.l.bf16 %v1451
    %v1968 = vunpack.c.h.bf16 %v1451
    %v1969 = vunpack.c.l.bf16 %v1452
    %v1970 = vunpack.c.h.bf16 %v1452
    %v1971 = vunpack.c.l.bf16 %v1453
    %v1972 = vunpack.c.h.bf16 %v1453
    %v1973 = vunpack.c.l.bf16 %v1454
    %v1974 = vunpack.c.h.bf16 %v1454
    %v1975 = vunpack.c.l.bf16 %v1455
    %v1976 = vunpack.c.h.bf16 %v1455
    %v1977 = vunpack.c.l.bf16 %v1456
    %v1978 = vunpack.c.h.bf16 %v1456
    %v1979 = vunpack.c.l.bf16 %v1457
    %v1980 = vunpack.c.h.bf16 %v1457
    %v1981 = vunpack.c.l.bf16 %v1458
    %v1982 = vunpack.c.h.bf16 %v1458
    %v1983 = vunpack.c.l.bf16 %v1459
    %v1984 = vunpack.c.h.bf16 %v1459
    %v1985 = vunpack.c.l.bf16 %v1460
    %v1986 = vunpack.c.h.bf16 %v1460
    %v1987 = vunpack.c.l.bf16 %v1461
    %v1988 = vunpack.c.h.bf16 %v1461
    %v1989 = vunpack.c.l.bf16 %v1462
    %v1990 = vunpack.c.h.bf16 %v1462
    %v1991 = vunpack.c.l.bf16 %v1463
    %v1992 = vunpack.c.h.bf16 %v1463
    %v1993 = vunpack.c.l.bf16 %v1464
    %v1994 = vunpack.c.h.bf16 %v1464
    %v1995 = vunpack.c.l.bf16 %v1465
    %v1996 = vunpack.c.h.bf16 %v1465
    %v1997 = vunpack.c.l.bf16 %v1466
    %v1998 = vunpack.c.h.bf16 %v1466
    %v1999 = vunpack.c.l.bf16 %v1467
    %v2000 = vunpack.c.h.bf16 %v1467
    %v2001 = vunpack.c.l.bf16 %v1468
    %v2002 = vunpack.c.h.bf16 %v1468
    %v2003 = vunpack.c.l.bf16 %v1469
    %v2004 = vunpack.c.h.bf16 %v1469
    %v2005 = vunpack.c.l.bf16 %v1470
    %v2006 = vunpack.c.h.bf16 %v1470
    %v2007 = vunpack.c.l.bf16 %v1471
    %v2008 = vunpack.c.h.bf16 %v1471
    %v2009 = vunpack.c.l.bf16 %v1472
    %v2010 = vunpack.c.h.bf16 %v1472
    %v2011 = vunpack.c.l.bf16 %v1486
    %v2012 = vunpack.c.l.bf16 %v1490
    %v2013 = vunpack.c.l.bf16 %v1494
    %v2014 = vunpack.c.l.bf16 %v1498
    %v2015 = vmul.f32 %v1499, %v2011
    %v2016 = vmul.f32 %v1500, %v2012
    %v2017 = vmul.f32 %v1501, %v2013
    %v2018 = vmul.f32 %v1502, %v2014
    %v2019 = vmul.f32 %v1503, %v2011
    %v2020 = vmul.f32 %v1504, %v2012
    %v2021 = vmul.f32 %v1505, %v2013
    %v2022 = vmul.f32 %v1506, %v2014
    %v2023 = vmul.f32 %v1507, %v2011
    %v2024 = vmul.f32 %v1508, %v2012
    %v2025 = vmul.f32 %v1509, %v2013
    %v2026 = vmul.f32 %v1510, %v2014
    %v2027 = vmul.f32 %v1511, %v2011
    %v2028 = vmul.f32 %v1512, %v2012
    %v2029 = vmul.f32 %v1513, %v2013
    %v2030 = vmul.f32 %v1514, %v2014
    %v2031 = vmul.f32 %v1515, %v2011
    %v2032 = vmul.f32 %v1516, %v2012
    %v2033 = vmul.f32 %v1517, %v2013
    %v2034 = vmul.f32 %v1518, %v2014
    %v2035 = vmul.f32 %v1519, %v2011
    %v2036 = vmul.f32 %v1520, %v2012
    %v2037 = vmul.f32 %v1521, %v2013
    %v2038 = vmul.f32 %v1522, %v2014
    %v2039 = vmul.f32 %v1523, %v2011
    %v2040 = vmul.f32 %v1524, %v2012
    %v2041 = vmul.f32 %v1525, %v2013
    %v2042 = vmul.f32 %v1526, %v2014
    %v2043 = vmul.f32 %v1527, %v2011
    %v2044 = vmul.f32 %v1528, %v2012
    %v2045 = vmul.f32 %v1529, %v2013
    %v2046 = vmul.f32 %v1530, %v2014
    %v2047 = vmul.f32 %v1531, %v2011
    %v2048 = vmul.f32 %v1532, %v2012
    %v2049 = vmul.f32 %v1533, %v2013
    %v2050 = vmul.f32 %v1534, %v2014
    %v2051 = vmul.f32 %v1535, %v2011
    %v2052 = vmul.f32 %v1536, %v2012
    %v2053 = vmul.f32 %v1537, %v2013
    %v2054 = vmul.f32 %v1538, %v2014
    %v2055 = vmul.f32 %v1539, %v2011
    %v2056 = vmul.f32 %v1540, %v2012
    %v2057 = vmul.f32 %v1541, %v2013
    %v2058 = vmul.f32 %v1542, %v2014
    %v2059 = vmul.f32 %v1543, %v2011
    %v2060 = vmul.f32 %v1544, %v2012
    %v2061 = vmul.f32 %v1545, %v2013
    %v2062 = vmul.f32 %v1546, %v2014
    %v2063 = vmul.f32 %v1547, %v2011
    %v2064 = vmul.f32 %v1548, %v2012
    %v2065 = vmul.f32 %v1549, %v2013
    %v2066 = vmul.f32 %v1550, %v2014
    %v2067 = vmul.f32 %v1551, %v2011
    %v2068 = vmul.f32 %v1552, %v2012
    %v2069 = vmul.f32 %v1553, %v2013
    %v2070 = vmul.f32 %v1554, %v2014
    %v2071 = vmul.f32 %v1555, %v2011
    %v2072 = vmul.f32 %v1556, %v2012
    %v2073 = vmul.f32 %v1557, %v2013
    %v2074 = vmul.f32 %v1558, %v2014
    %v2075 = vmul.f32 %v1559, %v2011
    %v2076 = vmul.f32 %v1560, %v2012
    %v2077 = vmul.f32 %v1561, %v2013
    %v2078 = vmul.f32 %v1562, %v2014
    %v2079 = vmul.f32 %v1563, %v2011
    %v2080 = vmul.f32 %v1564, %v2012
    %v2081 = vmul.f32 %v1565, %v2013
    %v2082 = vmul.f32 %v1566, %v2014
    %v2083 = vmul.f32 %v1567, %v2011
    %v2084 = vmul.f32 %v1568, %v2012
    %v2085 = vmul.f32 %v1569, %v2013
    %v2086 = vmul.f32 %v1570, %v2014
    %v2087 = vmul.f32 %v1571, %v2011
    %v2088 = vmul.f32 %v1572, %v2012
    %v2089 = vmul.f32 %v1573, %v2013
    %v2090 = vmul.f32 %v1574, %v2014
    %v2091 = vmul.f32 %v1575, %v2011
    %v2092 = vmul.f32 %v1576, %v2012
    %v2093 = vmul.f32 %v1577, %v2013
    %v2094 = vmul.f32 %v1578, %v2014
    %v2095 = vmul.f32 %v1579, %v2011
    %v2096 = vmul.f32 %v1580, %v2012
    %v2097 = vmul.f32 %v1581, %v2013
    %v2098 = vmul.f32 %v1582, %v2014
    %v2099 = vmul.f32 %v1583, %v2011
    %v2100 = vmul.f32 %v1584, %v2012
    %v2101 = vmul.f32 %v1585, %v2013
    %v2102 = vmul.f32 %v1586, %v2014
    %v2103 = vmul.f32 %v1587, %v2011
    %v2104 = vmul.f32 %v1588, %v2012
    %v2105 = vmul.f32 %v1589, %v2013
    %v2106 = vmul.f32 %v1590, %v2014
    %v2107 = vmul.f32 %v1591, %v2011
    %v2108 = vmul.f32 %v1592, %v2012
    %v2109 = vmul.f32 %v1593, %v2013
    %v2110 = vmul.f32 %v1594, %v2014
    %v2111 = vmul.f32 %v1595, %v2011
    %v2112 = vmul.f32 %v1596, %v2012
    %v2113 = vmul.f32 %v1597, %v2013
    %v2114 = vmul.f32 %v1598, %v2014
    %v2115 = vmul.f32 %v1599, %v2011
    %v2116 = vmul.f32 %v1600, %v2012
    %v2117 = vmul.f32 %v1601, %v2013
    %v2118 = vmul.f32 %v1602, %v2014
    %v2119 = vmul.f32 %v1603, %v2011
    %v2120 = vmul.f32 %v1604, %v2012
    %v2121 = vmul.f32 %v1605, %v2013
    %v2122 = vmul.f32 %v1606, %v2014
    %v2123 = vmul.f32 %v1607, %v2011
    %v2124 = vmul.f32 %v1608, %v2012
    %v2125 = vmul.f32 %v1609, %v2013
    %v2126 = vmul.f32 %v1610, %v2014
    %v2127 = vmul.f32 %v1611, %v2011
    %v2128 = vmul.f32 %v1612, %v2012
    %v2129 = vmul.f32 %v1613, %v2013
    %v2130 = vmul.f32 %v1614, %v2014
    %v2131 = vmul.f32 %v1615, %v2011
    %v2132 = vmul.f32 %v1616, %v2012
    %v2133 = vmul.f32 %v1617, %v2013
    %v2134 = vmul.f32 %v1618, %v2014
    %v2135 = vmul.f32 %v1619, %v2011
    %v2136 = vmul.f32 %v1620, %v2012
    %v2137 = vmul.f32 %v1621, %v2013
    %v2138 = vmul.f32 %v1622, %v2014
    %v2139 = vmul.f32 %v1623, %v2011
    %v2140 = vmul.f32 %v1624, %v2012
    %v2141 = vmul.f32 %v1625, %v2013
    %v2142 = vmul.f32 %v1626, %v2014
    %v2143 = vmul.f32 %v1627, %v2011
    %v2144 = vmul.f32 %v1628, %v2012
    %v2145 = vmul.f32 %v1629, %v2013
    %v2146 = vmul.f32 %v1630, %v2014
    %v2147 = vmul.f32 %v1631, %v2011
    %v2148 = vmul.f32 %v1632, %v2012
    %v2149 = vmul.f32 %v1633, %v2013
    %v2150 = vmul.f32 %v1634, %v2014
    %v2151 = vmul.f32 %v1635, %v2011
    %v2152 = vmul.f32 %v1636, %v2012
    %v2153 = vmul.f32 %v1637, %v2013
    %v2154 = vmul.f32 %v1638, %v2014
    %v2155 = vmul.f32 %v1639, %v2011
    %v2156 = vmul.f32 %v1640, %v2012
    %v2157 = vmul.f32 %v1641, %v2013
    %v2158 = vmul.f32 %v1642, %v2014
    %v2159 = vmul.f32 %v1643, %v2011
    %v2160 = vmul.f32 %v1644, %v2012
    %v2161 = vmul.f32 %v1645, %v2013
    %v2162 = vmul.f32 %v1646, %v2014
    %v2163 = vmul.f32 %v1647, %v2011
    %v2164 = vmul.f32 %v1648, %v2012
    %v2165 = vmul.f32 %v1649, %v2013
    %v2166 = vmul.f32 %v1650, %v2014
    %v2167 = vmul.f32 %v1651, %v2011
    %v2168 = vmul.f32 %v1652, %v2012
    %v2169 = vmul.f32 %v1653, %v2013
    %v2170 = vmul.f32 %v1654, %v2014
    %v2171 = vmul.f32 %v1655, %v2011
    %v2172 = vmul.f32 %v1656, %v2012
    %v2173 = vmul.f32 %v1657, %v2013
    %v2174 = vmul.f32 %v1658, %v2014
    %v2175 = vmul.f32 %v1659, %v2011
    %v2176 = vmul.f32 %v1660, %v2012
    %v2177 = vmul.f32 %v1661, %v2013
    %v2178 = vmul.f32 %v1662, %v2014
    %v2179 = vmul.f32 %v1663, %v2011
    %v2180 = vmul.f32 %v1664, %v2012
    %v2181 = vmul.f32 %v1665, %v2013
    %v2182 = vmul.f32 %v1666, %v2014
    %v2183 = vmul.f32 %v1667, %v2011
    %v2184 = vmul.f32 %v1668, %v2012
    %v2185 = vmul.f32 %v1669, %v2013
    %v2186 = vmul.f32 %v1670, %v2014
    %v2187 = vmul.f32 %v1671, %v2011
    %v2188 = vmul.f32 %v1672, %v2012
    %v2189 = vmul.f32 %v1673, %v2013
    %v2190 = vmul.f32 %v1674, %v2014
    %v2191 = vmul.f32 %v1675, %v2011
    %v2192 = vmul.f32 %v1676, %v2012
    %v2193 = vmul.f32 %v1677, %v2013
    %v2194 = vmul.f32 %v1678, %v2014
    %v2195 = vmul.f32 %v1679, %v2011
    %v2196 = vmul.f32 %v1680, %v2012
    %v2197 = vmul.f32 %v1681, %v2013
    %v2198 = vmul.f32 %v1682, %v2014
    %v2199 = vmul.f32 %v1683, %v2011
    %v2200 = vmul.f32 %v1684, %v2012
    %v2201 = vmul.f32 %v1685, %v2013
    %v2202 = vmul.f32 %v1686, %v2014
    %v2203 = vmul.f32 %v1687, %v2011
    %v2204 = vmul.f32 %v1688, %v2012
    %v2205 = vmul.f32 %v1689, %v2013
    %v2206 = vmul.f32 %v1690, %v2014
    %v2207 = vmul.f32 %v1691, %v2011
    %v2208 = vmul.f32 %v1692, %v2012
    %v2209 = vmul.f32 %v1693, %v2013
    %v2210 = vmul.f32 %v1694, %v2014
    %v2211 = vmul.f32 %v1695, %v2011
    %v2212 = vmul.f32 %v1696, %v2012
    %v2213 = vmul.f32 %v1697, %v2013
    %v2214 = vmul.f32 %v1698, %v2014
    %v2215 = vmul.f32 %v1699, %v2011
    %v2216 = vmul.f32 %v1700, %v2012
    %v2217 = vmul.f32 %v1701, %v2013
    %v2218 = vmul.f32 %v1702, %v2014
    %v2219 = vmul.f32 %v1703, %v2011
    %v2220 = vmul.f32 %v1704, %v2012
    %v2221 = vmul.f32 %v1705, %v2013
    %v2222 = vmul.f32 %v1706, %v2014
    %v2223 = vmul.f32 %v1707, %v2011
    %v2224 = vmul.f32 %v1708, %v2012
    %v2225 = vmul.f32 %v1709, %v2013
    %v2226 = vmul.f32 %v1710, %v2014
    %v2227 = vmul.f32 %v1711, %v2011
    %v2228 = vmul.f32 %v1712, %v2012
    %v2229 = vmul.f32 %v1713, %v2013
    %v2230 = vmul.f32 %v1714, %v2014
    %v2231 = vmul.f32 %v1715, %v2011
    %v2232 = vmul.f32 %v1716, %v2012
    %v2233 = vmul.f32 %v1717, %v2013
    %v2234 = vmul.f32 %v1718, %v2014
    %v2235 = vmul.f32 %v1719, %v2011
    %v2236 = vmul.f32 %v1720, %v2012
    %v2237 = vmul.f32 %v1721, %v2013
    %v2238 = vmul.f32 %v1722, %v2014
    %v2239 = vmul.f32 %v1723, %v2011
    %v2240 = vmul.f32 %v1724, %v2012
    %v2241 = vmul.f32 %v1725, %v2013
    %v2242 = vmul.f32 %v1726, %v2014
    %v2243 = vmul.f32 %v1727, %v2011
    %v2244 = vmul.f32 %v1728, %v2012
    %v2245 = vmul.f32 %v1729, %v2013
    %v2246 = vmul.f32 %v1730, %v2014
    %v2247 = vmul.f32 %v1731, %v2011
    %v2248 = vmul.f32 %v1732, %v2012
    %v2249 = vmul.f32 %v1733, %v2013
    %v2250 = vmul.f32 %v1734, %v2014
    %v2251 = vmul.f32 %v1735, %v2011
    %v2252 = vmul.f32 %v1736, %v2012
    %v2253 = vmul.f32 %v1737, %v2013
    %v2254 = vmul.f32 %v1738, %v2014
    %v2255 = vmul.f32 %v1739, %v2011
    %v2256 = vmul.f32 %v1740, %v2012
    %v2257 = vmul.f32 %v1741, %v2013
    %v2258 = vmul.f32 %v1742, %v2014
    %v2259 = vmul.f32 %v1743, %v2011
    %v2260 = vmul.f32 %v1744, %v2012
    %v2261 = vmul.f32 %v1745, %v2013
    %v2262 = vmul.f32 %v1746, %v2014
    %v2263 = vmul.f32 %v1747, %v2011
    %v2264 = vmul.f32 %v1748, %v2012
    %v2265 = vmul.f32 %v1749, %v2013
    %v2266 = vmul.f32 %v1750, %v2014
    %v2267 = vmul.f32 %v1751, %v2011
    %v2268 = vmul.f32 %v1752, %v2012
    %v2269 = vmul.f32 %v1753, %v2013
    %v2270 = vmul.f32 %v1754, %v2014
    %v2271 = vmul.f32 %v1755, %v2011
    %v2272 = vmul.f32 %v1756, %v2012
    %v2273 = vmul.f32 %v1757, %v2013
    %v2274 = vmul.f32 %v1758, %v2014
    %v2275 = vmul.f32 %v1759, %v2011
    %v2276 = vmul.f32 %v1760, %v2012
    %v2277 = vmul.f32 %v1761, %v2013
    %v2278 = vmul.f32 %v1762, %v2014
    %v2279 = vmul.f32 %v1763, %v2011
    %v2280 = vmul.f32 %v1764, %v2012
    %v2281 = vmul.f32 %v1765, %v2013
    %v2282 = vmul.f32 %v1766, %v2014
    %v2283 = vmul.f32 %v1767, %v2011
    %v2284 = vmul.f32 %v1768, %v2012
    %v2285 = vmul.f32 %v1769, %v2013
    %v2286 = vmul.f32 %v1770, %v2014
    %v2287 = vmul.f32 %v1771, %v2011
    %v2288 = vmul.f32 %v1772, %v2012
    %v2289 = vmul.f32 %v1773, %v2013
    %v2290 = vmul.f32 %v1774, %v2014
    %v2291 = vmul.f32 %v1775, %v2011
    %v2292 = vmul.f32 %v1776, %v2012
    %v2293 = vmul.f32 %v1777, %v2013
    %v2294 = vmul.f32 %v1778, %v2014
    %v2295 = vmul.f32 %v1779, %v2011
    %v2296 = vmul.f32 %v1780, %v2012
    %v2297 = vmul.f32 %v1781, %v2013
    %v2298 = vmul.f32 %v1782, %v2014
    %v2299 = vmul.f32 %v1783, %v2011
    %v2300 = vmul.f32 %v1784, %v2012
    %v2301 = vmul.f32 %v1785, %v2013
    %v2302 = vmul.f32 %v1786, %v2014
    %v2303 = vmul.f32 %v1787, %v2011
    %v2304 = vmul.f32 %v1788, %v2012
    %v2305 = vmul.f32 %v1789, %v2013
    %v2306 = vmul.f32 %v1790, %v2014
    %v2307 = vmul.f32 %v1791, %v2011
    %v2308 = vmul.f32 %v1792, %v2012
    %v2309 = vmul.f32 %v1793, %v2013
    %v2310 = vmul.f32 %v1794, %v2014
    %v2311 = vmul.f32 %v1795, %v2011
    %v2312 = vmul.f32 %v1796, %v2012
    %v2313 = vmul.f32 %v1797, %v2013
    %v2314 = vmul.f32 %v1798, %v2014
    %v2315 = vmul.f32 %v1799, %v2011
    %v2316 = vmul.f32 %v1800, %v2012
    %v2317 = vmul.f32 %v1801, %v2013
    %v2318 = vmul.f32 %v1802, %v2014
    %v2319 = vmul.f32 %v1803, %v2011
    %v2320 = vmul.f32 %v1804, %v2012
    %v2321 = vmul.f32 %v1805, %v2013
    %v2322 = vmul.f32 %v1806, %v2014
    %v2323 = vmul.f32 %v1807, %v2011
    %v2324 = vmul.f32 %v1808, %v2012
    %v2325 = vmul.f32 %v1809, %v2013
    %v2326 = vmul.f32 %v1810, %v2014
    %v2327 = vmul.f32 %v1811, %v2011
    %v2328 = vmul.f32 %v1812, %v2012
    %v2329 = vmul.f32 %v1813, %v2013
    %v2330 = vmul.f32 %v1814, %v2014
    %v2331 = vmul.f32 %v1815, %v2011
    %v2332 = vmul.f32 %v1816, %v2012
    %v2333 = vmul.f32 %v1817, %v2013
    %v2334 = vmul.f32 %v1818, %v2014
    %v2335 = vmul.f32 %v1819, %v2011
    %v2336 = vmul.f32 %v1820, %v2012
    %v2337 = vmul.f32 %v1821, %v2013
    %v2338 = vmul.f32 %v1822, %v2014
    %v2339 = vmul.f32 %v1823, %v2011
    %v2340 = vmul.f32 %v1824, %v2012
    %v2341 = vmul.f32 %v1825, %v2013
    %v2342 = vmul.f32 %v1826, %v2014
    %v2343 = vmul.f32 %v1827, %v2011
    %v2344 = vmul.f32 %v1828, %v2012
    %v2345 = vmul.f32 %v1829, %v2013
    %v2346 = vmul.f32 %v1830, %v2014
    %v2347 = vmul.f32 %v1831, %v2011
    %v2348 = vmul.f32 %v1832, %v2012
    %v2349 = vmul.f32 %v1833, %v2013
    %v2350 = vmul.f32 %v1834, %v2014
    %v2351 = vmul.f32 %v1835, %v2011
    %v2352 = vmul.f32 %v1836, %v2012
    %v2353 = vmul.f32 %v1837, %v2013
    %v2354 = vmul.f32 %v1838, %v2014
    %v2355 = vmul.f32 %v1839, %v2011
    %v2356 = vmul.f32 %v1840, %v2012
    %v2357 = vmul.f32 %v1841, %v2013
    %v2358 = vmul.f32 %v1842, %v2014
    %v2359 = vmul.f32 %v1843, %v2011
    %v2360 = vmul.f32 %v1844, %v2012
    %v2361 = vmul.f32 %v1845, %v2013
    %v2362 = vmul.f32 %v1846, %v2014
    %v2363 = vmul.f32 %v1847, %v2011
    %v2364 = vmul.f32 %v1848, %v2012
    %v2365 = vmul.f32 %v1849, %v2013
    %v2366 = vmul.f32 %v1850, %v2014
    %v2367 = vmul.f32 %v1851, %v2011
    %v2368 = vmul.f32 %v1852, %v2012
    %v2369 = vmul.f32 %v1853, %v2013
    %v2370 = vmul.f32 %v1854, %v2014
    %v2371 = vmul.f32 %v1855, %v2011
    %v2372 = vmul.f32 %v1856, %v2012
    %v2373 = vmul.f32 %v1857, %v2013
    %v2374 = vmul.f32 %v1858, %v2014
    %v2375 = vmul.f32 %v1859, %v2011
    %v2376 = vmul.f32 %v1860, %v2012
    %v2377 = vmul.f32 %v1861, %v2013
    %v2378 = vmul.f32 %v1862, %v2014
    %v2379 = vmul.f32 %v1863, %v2011
    %v2380 = vmul.f32 %v1864, %v2012
    %v2381 = vmul.f32 %v1865, %v2013
    %v2382 = vmul.f32 %v1866, %v2014
    %v2383 = vmul.f32 %v1867, %v2011
    %v2384 = vmul.f32 %v1868, %v2012
    %v2385 = vmul.f32 %v1869, %v2013
    %v2386 = vmul.f32 %v1870, %v2014
    %v2387 = vmul.f32 %v1871, %v2011
    %v2388 = vmul.f32 %v1872, %v2012
    %v2389 = vmul.f32 %v1873, %v2013
    %v2390 = vmul.f32 %v1874, %v2014
    %v2391 = vmul.f32 %v1875, %v2011
    %v2392 = vmul.f32 %v1876, %v2012
    %v2393 = vmul.f32 %v1877, %v2013
    %v2394 = vmul.f32 %v1878, %v2014
    %v2395 = vmul.f32 %v1879, %v2011
    %v2396 = vmul.f32 %v1880, %v2012
    %v2397 = vmul.f32 %v1881, %v2013
    %v2398 = vmul.f32 %v1882, %v2014
    %v2399 = vmul.f32 %v1883, %v2011
    %v2400 = vmul.f32 %v1884, %v2012
    %v2401 = vmul.f32 %v1885, %v2013
    %v2402 = vmul.f32 %v1886, %v2014
    %v2403 = vmul.f32 %v1887, %v2011
    %v2404 = vmul.f32 %v1888, %v2012
    %v2405 = vmul.f32 %v1889, %v2013
    %v2406 = vmul.f32 %v1890, %v2014
    %v2407 = vmul.f32 %v1891, %v2011
    %v2408 = vmul.f32 %v1892, %v2012
    %v2409 = vmul.f32 %v1893, %v2013
    %v2410 = vmul.f32 %v1894, %v2014
    %v2411 = vmul.f32 %v1895, %v2011
    %v2412 = vmul.f32 %v1896, %v2012
    %v2413 = vmul.f32 %v1897, %v2013
    %v2414 = vmul.f32 %v1898, %v2014
    %v2415 = vmul.f32 %v1899, %v2011
    %v2416 = vmul.f32 %v1900, %v2012
    %v2417 = vmul.f32 %v1901, %v2013
    %v2418 = vmul.f32 %v1902, %v2014
    %v2419 = vmul.f32 %v1903, %v2011
    %v2420 = vmul.f32 %v1904, %v2012
    %v2421 = vmul.f32 %v1905, %v2013
    %v2422 = vmul.f32 %v1906, %v2014
    %v2423 = vmul.f32 %v1907, %v2011
    %v2424 = vmul.f32 %v1908, %v2012
    %v2425 = vmul.f32 %v1909, %v2013
    %v2426 = vmul.f32 %v1910, %v2014
    %v2427 = vmul.f32 %v1911, %v2011
    %v2428 = vmul.f32 %v1912, %v2012
    %v2429 = vmul.f32 %v1913, %v2013
    %v2430 = vmul.f32 %v1914, %v2014
    %v2431 = vmul.f32 %v1915, %v2011
    %v2432 = vmul.f32 %v1916, %v2012
    %v2433 = vmul.f32 %v1917, %v2013
    %v2434 = vmul.f32 %v1918, %v2014
    %v2435 = vmul.f32 %v1919, %v2011
    %v2436 = vmul.f32 %v1920, %v2012
    %v2437 = vmul.f32 %v1921, %v2013
    %v2438 = vmul.f32 %v1922, %v2014
    %v2439 = vmul.f32 %v1923, %v2011
    %v2440 = vmul.f32 %v1924, %v2012
    %v2441 = vmul.f32 %v1925, %v2013
    %v2442 = vmul.f32 %v1926, %v2014
    %v2443 = vmul.f32 %v1927, %v2011
    %v2444 = vmul.f32 %v1928, %v2012
    %v2445 = vmul.f32 %v1929, %v2013
    %v2446 = vmul.f32 %v1930, %v2014
    %v2447 = vmul.f32 %v1931, %v2011
    %v2448 = vmul.f32 %v1932, %v2012
    %v2449 = vmul.f32 %v1933, %v2013
    %v2450 = vmul.f32 %v1934, %v2014
    %v2451 = vmul.f32 %v1935, %v2011
    %v2452 = vmul.f32 %v1936, %v2012
    %v2453 = vmul.f32 %v1937, %v2013
    %v2454 = vmul.f32 %v1938, %v2014
    %v2455 = vmul.f32 %v1939, %v2011
    %v2456 = vmul.f32 %v1940, %v2012
    %v2457 = vmul.f32 %v1941, %v2013
    %v2458 = vmul.f32 %v1942, %v2014
    %v2459 = vmul.f32 %v1943, %v2011
    %v2460 = vmul.f32 %v1944, %v2012
    %v2461 = vmul.f32 %v1945, %v2013
    %v2462 = vmul.f32 %v1946, %v2014
    %v2463 = vmul.f32 %v1947, %v2011
    %v2464 = vmul.f32 %v1948, %v2012
    %v2465 = vmul.f32 %v1949, %v2013
    %v2466 = vmul.f32 %v1950, %v2014
    %v2467 = vmul.f32 %v1951, %v2011
    %v2468 = vmul.f32 %v1952, %v2012
    %v2469 = vmul.f32 %v1953, %v2013
    %v2470 = vmul.f32 %v1954, %v2014
    %v2471 = vmul.f32 %v1955, %v2011
    %v2472 = vmul.f32 %v1956, %v2012
    %v2473 = vmul.f32 %v1957, %v2013
    %v2474 = vmul.f32 %v1958, %v2014
    %v2475 = vmul.f32 %v1959, %v2011
    %v2476 = vmul.f32 %v1960, %v2012
    %v2477 = vmul.f32 %v1961, %v2013
    %v2478 = vmul.f32 %v1962, %v2014
    %v2479 = vmul.f32 %v1963, %v2011
    %v2480 = vmul.f32 %v1964, %v2012
    %v2481 = vmul.f32 %v1965, %v2013
    %v2482 = vmul.f32 %v1966, %v2014
    %v2483 = vmul.f32 %v1967, %v2011
    %v2484 = vmul.f32 %v1968, %v2012
    %v2485 = vmul.f32 %v1969, %v2013
    %v2486 = vmul.f32 %v1970, %v2014
    %v2487 = vmul.f32 %v1971, %v2011
    %v2488 = vmul.f32 %v1972, %v2012
    %v2489 = vmul.f32 %v1973, %v2013
    %v2490 = vmul.f32 %v1974, %v2014
    %v2491 = vmul.f32 %v1975, %v2011
    %v2492 = vmul.f32 %v1976, %v2012
    %v2493 = vmul.f32 %v1977, %v2013
    %v2494 = vmul.f32 %v1978, %v2014
    %v2495 = vmul.f32 %v1979, %v2011
    %v2496 = vmul.f32 %v1980, %v2012
    %v2497 = vmul.f32 %v1981, %v2013
    %v2498 = vmul.f32 %v1982, %v2014
    %v2499 = vmul.f32 %v1983, %v2011
    %v2500 = vmul.f32 %v1984, %v2012
    %v2501 = vmul.f32 %v1985, %v2013
    %v2502 = vmul.f32 %v1986, %v2014
    %v2503 = vmul.f32 %v1987, %v2011
    %v2504 = vmul.f32 %v1988, %v2012
    %v2505 = vmul.f32 %v1989, %v2013
    %v2506 = vmul.f32 %v1990, %v2014
    %v2507 = vmul.f32 %v1991, %v2011
    %v2508 = vmul.f32 %v1992, %v2012
    %v2509 = vmul.f32 %v1993, %v2013
    %v2510 = vmul.f32 %v1994, %v2014
    %v2511 = vmul.f32 %v1995, %v2011
    %v2512 = vmul.f32 %v1996, %v2012
    %v2513 = vmul.f32 %v1997, %v2013
    %v2514 = vmul.f32 %v1998, %v2014
    %v2515 = vmul.f32 %v1999, %v2011
    %v2516 = vmul.f32 %v2000, %v2012
    %v2517 = vmul.f32 %v2001, %v2013
    %v2518 = vmul.f32 %v2002, %v2014
    %v2519 = vmul.f32 %v2003, %v2011
    %v2520 = vmul.f32 %v2004, %v2012
    %v2521 = vmul.f32 %v2005, %v2013
    %v2522 = vmul.f32 %v2006, %v2014
    %v2523 = vmul.f32 %v2007, %v2011
    %v2524 = vmul.f32 %v2008, %v2012
    %v2525 = vmul.f32 %v2009, %v2013
    %v2526 = vmul.f32 %v2010, %v2014
    %v2527 = vpack.c.bf16 %v2019, %v2015
    %v2528 = vpack.c.bf16 %v2020, %v2016
    %v2529 = vpack.c.bf16 %v2021, %v2017
    %v2530 = vpack.c.bf16 %v2022, %v2018
    %v2531 = vpack.c.bf16 %v2027, %v2023
    %v2532 = vpack.c.bf16 %v2028, %v2024
    %v2533 = vpack.c.bf16 %v2029, %v2025
    %v2534 = vpack.c.bf16 %v2030, %v2026
    %v2535 = vpack.c.bf16 %v2035, %v2031
    %v2536 = vpack.c.bf16 %v2036, %v2032
    %v2537 = vpack.c.bf16 %v2037, %v2033
    %v2538 = vpack.c.bf16 %v2038, %v2034
    %v2539 = vpack.c.bf16 %v2043, %v2039
    %v2540 = vpack.c.bf16 %v2044, %v2040
    %v2541 = vpack.c.bf16 %v2045, %v2041
    %v2542 = vpack.c.bf16 %v2046, %v2042
    %v2543 = vpack.c.bf16 %v2051, %v2047
    %v2544 = vpack.c.bf16 %v2052, %v2048
    %v2545 = vpack.c.bf16 %v2053, %v2049
    %v2546 = vpack.c.bf16 %v2054, %v2050
    %v2547 = vpack.c.bf16 %v2059, %v2055
    %v2548 = vpack.c.bf16 %v2060, %v2056
    %v2549 = vpack.c.bf16 %v2061, %v2057
    %v2550 = vpack.c.bf16 %v2062, %v2058
    %v2551 = vpack.c.bf16 %v2067, %v2063
    %v2552 = vpack.c.bf16 %v2068, %v2064
    %v2553 = vpack.c.bf16 %v2069, %v2065
    %v2554 = vpack.c.bf16 %v2070, %v2066
    %v2555 = vpack.c.bf16 %v2075, %v2071
    %v2556 = vpack.c.bf16 %v2076, %v2072
    %v2557 = vpack.c.bf16 %v2077, %v2073
    %v2558 = vpack.c.bf16 %v2078, %v2074
    %v2559 = vpack.c.bf16 %v2083, %v2079
    %v2560 = vpack.c.bf16 %v2084, %v2080
    %v2561 = vpack.c.bf16 %v2085, %v2081
    %v2562 = vpack.c.bf16 %v2086, %v2082
    %v2563 = vpack.c.bf16 %v2091, %v2087
    %v2564 = vpack.c.bf16 %v2092, %v2088
    %v2565 = vpack.c.bf16 %v2093, %v2089
    %v2566 = vpack.c.bf16 %v2094, %v2090
    %v2567 = vpack.c.bf16 %v2099, %v2095
    %v2568 = vpack.c.bf16 %v2100, %v2096
    %v2569 = vpack.c.bf16 %v2101, %v2097
    %v2570 = vpack.c.bf16 %v2102, %v2098
    %v2571 = vpack.c.bf16 %v2107, %v2103
    %v2572 = vpack.c.bf16 %v2108, %v2104
    %v2573 = vpack.c.bf16 %v2109, %v2105
    %v2574 = vpack.c.bf16 %v2110, %v2106
    %v2575 = vpack.c.bf16 %v2115, %v2111
    %v2576 = vpack.c.bf16 %v2116, %v2112
    %v2577 = vpack.c.bf16 %v2117, %v2113
    %v2578 = vpack.c.bf16 %v2118, %v2114
    %v2579 = vpack.c.bf16 %v2123, %v2119
    %v2580 = vpack.c.bf16 %v2124, %v2120
    %v2581 = vpack.c.bf16 %v2125, %v2121
    %v2582 = vpack.c.bf16 %v2126, %v2122
    %v2583 = vpack.c.bf16 %v2131, %v2127
    %v2584 = vpack.c.bf16 %v2132, %v2128
    %v2585 = vpack.c.bf16 %v2133, %v2129
    %v2586 = vpack.c.bf16 %v2134, %v2130
    %v2587 = vpack.c.bf16 %v2139, %v2135
    %v2588 = vpack.c.bf16 %v2140, %v2136
    %v2589 = vpack.c.bf16 %v2141, %v2137
    %v2590 = vpack.c.bf16 %v2142, %v2138
    %v2591 = vpack.c.bf16 %v2147, %v2143
    %v2592 = vpack.c.bf16 %v2148, %v2144
    %v2593 = vpack.c.bf16 %v2149, %v2145
    %v2594 = vpack.c.bf16 %v2150, %v2146
    %v2595 = vpack.c.bf16 %v2155, %v2151
    %v2596 = vpack.c.bf16 %v2156, %v2152
    %v2597 = vpack.c.bf16 %v2157, %v2153
    %v2598 = vpack.c.bf16 %v2158, %v2154
    %v2599 = vpack.c.bf16 %v2163, %v2159
    %v2600 = vpack.c.bf16 %v2164, %v2160
    %v2601 = vpack.c.bf16 %v2165, %v2161
    %v2602 = vpack.c.bf16 %v2166, %v2162
    %v2603 = vpack.c.bf16 %v2171, %v2167
    %v2604 = vpack.c.bf16 %v2172, %v2168
    %v2605 = vpack.c.bf16 %v2173, %v2169
    %v2606 = vpack.c.bf16 %v2174, %v2170
    %v2607 = vpack.c.bf16 %v2179, %v2175
    %v2608 = vpack.c.bf16 %v2180, %v2176
    %v2609 = vpack.c.bf16 %v2181, %v2177
    %v2610 = vpack.c.bf16 %v2182, %v2178
    %v2611 = vpack.c.bf16 %v2187, %v2183
    %v2612 = vpack.c.bf16 %v2188, %v2184
    %v2613 = vpack.c.bf16 %v2189, %v2185
    %v2614 = vpack.c.bf16 %v2190, %v2186
    %v2615 = vpack.c.bf16 %v2195, %v2191
    %v2616 = vpack.c.bf16 %v2196, %v2192
    %v2617 = vpack.c.bf16 %v2197, %v2193
    %v2618 = vpack.c.bf16 %v2198, %v2194
    %v2619 = vpack.c.bf16 %v2203, %v2199
    %v2620 = vpack.c.bf16 %v2204, %v2200
    %v2621 = vpack.c.bf16 %v2205, %v2201
    %v2622 = vpack.c.bf16 %v2206, %v2202
    %v2623 = vpack.c.bf16 %v2211, %v2207
    %v2624 = vpack.c.bf16 %v2212, %v2208
    %v2625 = vpack.c.bf16 %v2213, %v2209
    %v2626 = vpack.c.bf16 %v2214, %v2210
    %v2627 = vpack.c.bf16 %v2219, %v2215
    %v2628 = vpack.c.bf16 %v2220, %v2216
    %v2629 = vpack.c.bf16 %v2221, %v2217
    %v2630 = vpack.c.bf16 %v2222, %v2218
    %v2631 = vpack.c.bf16 %v2227, %v2223
    %v2632 = vpack.c.bf16 %v2228, %v2224
    %v2633 = vpack.c.bf16 %v2229, %v2225
    %v2634 = vpack.c.bf16 %v2230, %v2226
    %v2635 = vpack.c.bf16 %v2235, %v2231
    %v2636 = vpack.c.bf16 %v2236, %v2232
    %v2637 = vpack.c.bf16 %v2237, %v2233
    %v2638 = vpack.c.bf16 %v2238, %v2234
    %v2639 = vpack.c.bf16 %v2243, %v2239
    %v2640 = vpack.c.bf16 %v2244, %v2240
    %v2641 = vpack.c.bf16 %v2245, %v2241
    %v2642 = vpack.c.bf16 %v2246, %v2242
    %v2643 = vpack.c.bf16 %v2251, %v2247
    %v2644 = vpack.c.bf16 %v2252, %v2248
    %v2645 = vpack.c.bf16 %v2253, %v2249
    %v2646 = vpack.c.bf16 %v2254, %v2250
    %v2647 = vpack.c.bf16 %v2259, %v2255
    %v2648 = vpack.c.bf16 %v2260, %v2256
    %v2649 = vpack.c.bf16 %v2261, %v2257
    %v2650 = vpack.c.bf16 %v2262, %v2258
    %v2651 = vpack.c.bf16 %v2267, %v2263
    %v2652 = vpack.c.bf16 %v2268, %v2264
    %v2653 = vpack.c.bf16 %v2269, %v2265
    %v2654 = vpack.c.bf16 %v2270, %v2266
    %v2655 = vpack.c.bf16 %v2275, %v2271
    %v2656 = vpack.c.bf16 %v2276, %v2272
    %v2657 = vpack.c.bf16 %v2277, %v2273
    %v2658 = vpack.c.bf16 %v2278, %v2274
    %v2659 = vpack.c.bf16 %v2283, %v2279
    %v2660 = vpack.c.bf16 %v2284, %v2280
    %v2661 = vpack.c.bf16 %v2285, %v2281
    %v2662 = vpack.c.bf16 %v2286, %v2282
    %v2663 = vpack.c.bf16 %v2291, %v2287
    %v2664 = vpack.c.bf16 %v2292, %v2288
    %v2665 = vpack.c.bf16 %v2293, %v2289
    %v2666 = vpack.c.bf16 %v2294, %v2290
    %v2667 = vpack.c.bf16 %v2299, %v2295
    %v2668 = vpack.c.bf16 %v2300, %v2296
    %v2669 = vpack.c.bf16 %v2301, %v2297
    %v2670 = vpack.c.bf16 %v2302, %v2298
    %v2671 = vpack.c.bf16 %v2307, %v2303
    %v2672 = vpack.c.bf16 %v2308, %v2304
    %v2673 = vpack.c.bf16 %v2309, %v2305
    %v2674 = vpack.c.bf16 %v2310, %v2306
    %v2675 = vpack.c.bf16 %v2315, %v2311
    %v2676 = vpack.c.bf16 %v2316, %v2312
    %v2677 = vpack.c.bf16 %v2317, %v2313
    %v2678 = vpack.c.bf16 %v2318, %v2314
    %v2679 = vpack.c.bf16 %v2323, %v2319
    %v2680 = vpack.c.bf16 %v2324, %v2320
    %v2681 = vpack.c.bf16 %v2325, %v2321
    %v2682 = vpack.c.bf16 %v2326, %v2322
    %v2683 = vpack.c.bf16 %v2331, %v2327
    %v2684 = vpack.c.bf16 %v2332, %v2328
    %v2685 = vpack.c.bf16 %v2333, %v2329
    %v2686 = vpack.c.bf16 %v2334, %v2330
    %v2687 = vpack.c.bf16 %v2339, %v2335
    %v2688 = vpack.c.bf16 %v2340, %v2336
    %v2689 = vpack.c.bf16 %v2341, %v2337
    %v2690 = vpack.c.bf16 %v2342, %v2338
    %v2691 = vpack.c.bf16 %v2347, %v2343
    %v2692 = vpack.c.bf16 %v2348, %v2344
    %v2693 = vpack.c.bf16 %v2349, %v2345
    %v2694 = vpack.c.bf16 %v2350, %v2346
    %v2695 = vpack.c.bf16 %v2355, %v2351
    %v2696 = vpack.c.bf16 %v2356, %v2352
    %v2697 = vpack.c.bf16 %v2357, %v2353
    %v2698 = vpack.c.bf16 %v2358, %v2354
    %v2699 = vpack.c.bf16 %v2363, %v2359
    %v2700 = vpack.c.bf16 %v2364, %v2360
    %v2701 = vpack.c.bf16 %v2365, %v2361
    %v2702 = vpack.c.bf16 %v2366, %v2362
    %v2703 = vpack.c.bf16 %v2371, %v2367
    %v2704 = vpack.c.bf16 %v2372, %v2368
    %v2705 = vpack.c.bf16 %v2373, %v2369
    %v2706 = vpack.c.bf16 %v2374, %v2370
    %v2707 = vpack.c.bf16 %v2379, %v2375
    %v2708 = vpack.c.bf16 %v2380, %v2376
    %v2709 = vpack.c.bf16 %v2381, %v2377
    %v2710 = vpack.c.bf16 %v2382, %v2378
    %v2711 = vpack.c.bf16 %v2387, %v2383
    %v2712 = vpack.c.bf16 %v2388, %v2384
    %v2713 = vpack.c.bf16 %v2389, %v2385
    %v2714 = vpack.c.bf16 %v2390, %v2386
    %v2715 = vpack.c.bf16 %v2395, %v2391
    %v2716 = vpack.c.bf16 %v2396, %v2392
    %v2717 = vpack.c.bf16 %v2397, %v2393
    %v2718 = vpack.c.bf16 %v2398, %v2394
    %v2719 = vpack.c.bf16 %v2403, %v2399
    %v2720 = vpack.c.bf16 %v2404, %v2400
    %v2721 = vpack.c.bf16 %v2405, %v2401
    %v2722 = vpack.c.bf16 %v2406, %v2402
    %v2723 = vpack.c.bf16 %v2411, %v2407
    %v2724 = vpack.c.bf16 %v2412, %v2408
    %v2725 = vpack.c.bf16 %v2413, %v2409
    %v2726 = vpack.c.bf16 %v2414, %v2410
    %v2727 = vpack.c.bf16 %v2419, %v2415
    %v2728 = vpack.c.bf16 %v2420, %v2416
    %v2729 = vpack.c.bf16 %v2421, %v2417
    %v2730 = vpack.c.bf16 %v2422, %v2418
    %v2731 = vpack.c.bf16 %v2427, %v2423
    %v2732 = vpack.c.bf16 %v2428, %v2424
    %v2733 = vpack.c.bf16 %v2429, %v2425
    %v2734 = vpack.c.bf16 %v2430, %v2426
    %v2735 = vpack.c.bf16 %v2435, %v2431
    %v2736 = vpack.c.bf16 %v2436, %v2432
    %v2737 = vpack.c.bf16 %v2437, %v2433
    %v2738 = vpack.c.bf16 %v2438, %v2434
    %v2739 = vpack.c.bf16 %v2443, %v2439
    %v2740 = vpack.c.bf16 %v2444, %v2440
    %v2741 = vpack.c.bf16 %v2445, %v2441
    %v2742 = vpack.c.bf16 %v2446, %v2442
    %v2743 = vpack.c.bf16 %v2451, %v2447
    %v2744 = vpack.c.bf16 %v2452, %v2448
    %v2745 = vpack.c.bf16 %v2453, %v2449
    %v2746 = vpack.c.bf16 %v2454, %v2450
    %v2747 = vpack.c.bf16 %v2459, %v2455
    %v2748 = vpack.c.bf16 %v2460, %v2456
    %v2749 = vpack.c.bf16 %v2461, %v2457
    %v2750 = vpack.c.bf16 %v2462, %v2458
    %v2751 = vpack.c.bf16 %v2467, %v2463
    %v2752 = vpack.c.bf16 %v2468, %v2464
    %v2753 = vpack.c.bf16 %v2469, %v2465
    %v2754 = vpack.c.bf16 %v2470, %v2466
    %v2755 = vpack.c.bf16 %v2475, %v2471
    %v2756 = vpack.c.bf16 %v2476, %v2472
    %v2757 = vpack.c.bf16 %v2477, %v2473
    %v2758 = vpack.c.bf16 %v2478, %v2474
    %v2759 = vpack.c.bf16 %v2483, %v2479
    %v2760 = vpack.c.bf16 %v2484, %v2480
    %v2761 = vpack.c.bf16 %v2485, %v2481
    %v2762 = vpack.c.bf16 %v2486, %v2482
    %v2763 = vpack.c.bf16 %v2491, %v2487
    %v2764 = vpack.c.bf16 %v2492, %v2488
    %v2765 = vpack.c.bf16 %v2493, %v2489
    %v2766 = vpack.c.bf16 %v2494, %v2490
    %v2767 = vpack.c.bf16 %v2499, %v2495
    %v2768 = vpack.c.bf16 %v2500, %v2496
    %v2769 = vpack.c.bf16 %v2501, %v2497
    %v2770 = vpack.c.bf16 %v2502, %v2498
    %v2771 = vpack.c.bf16 %v2507, %v2503
    %v2772 = vpack.c.bf16 %v2508, %v2504
    %v2773 = vpack.c.bf16 %v2509, %v2505
    %v2774 = vpack.c.bf16 %v2510, %v2506
    %v2775 = vpack.c.bf16 %v2515, %v2511
    %v2776 = vpack.c.bf16 %v2516, %v2512
    %v2777 = vpack.c.bf16 %v2517, %v2513
    %v2778 = vpack.c.bf16 %v2518, %v2514
    %v2779 = vpack.c.bf16 %v2523, %v2519
    %v2780 = vpack.c.bf16 %v2524, %v2520
    %v2781 = vpack.c.bf16 %v2525, %v2521
    %v2782 = vpack.c.bf16 %v2526, %v2522
    %v2783 = vld [vmem:[%s0] sm:$0xff]
    %v2784 = vld [vmem:[%s0 + $0x8] sm:$0xff]
    %2787 = vst [vmem:[#allocation1] ss:$4 sm:$0xff] %v2783
    %s2788 = scalar_lea.vmem [#allocation1], 32
    %2789 = vst [vmem:[%s2788] ss:$4 sm:$0xff] %v2784
    %v2790 = vld.sshfl [vmem:[#allocation1] sm:$0xff pattern:$0x73625140]
    %v2791 = vld.sshfl [vmem:[#allocation1 + $0x8] sm:$0xff pattern:$0x73625140]
    %v2792 = vld.sshfl [vmem:[#allocation1 + $0x10] sm:$0xff pattern:$0x73625140]
    %v2793 = vld.sshfl [vmem:[#allocation1 + $0x18] sm:$0xff pattern:$0x73625140]
    %v2794 = vld.sshfl [vmem:[#allocation1 + $0x20] sm:$0xff pattern:$0x73625140]
    %v2795 = vld.sshfl [vmem:[#allocation1 + $0x28] sm:$0xff pattern:$0x73625140]
    %v2796 = vld.sshfl [vmem:[#allocation1 + $0x30] sm:$0xff pattern:$0x73625140]
    %v2797 = vld.sshfl [vmem:[#allocation1 + $0x38] sm:$0xff pattern:$0x73625140]
    %v2806 = vpack.c.bf16 %v2790, %v2790
    %v2807 = vpack.c.bf16 %v2791, %v2791
    %v2808 = vpack.c.bf16 %v2792, %v2792
    %v2809 = vpack.c.bf16 %v2793, %v2793
    %v2810 = vpack.c.bf16 %v2794, %v2794
    %v2811 = vpack.c.bf16 %v2795, %v2795
    %v2812 = vpack.c.bf16 %v2796, %v2796
    %v2813 = vpack.c.bf16 %v2797, %v2797
    %v2814 = vld [vmem:[%s1] sm:$0xff]
    %v2815 = vld [vmem:[%s1 + $0x8] sm:$0xff]
    %2818 = vst [vmem:[#allocation1] ss:$4 sm:$0xff] %v2814
    %s2819 = scalar_lea.vmem [#allocation1], 32
    %2820 = vst [vmem:[%s2819] ss:$4 sm:$0xff] %v2815
    %v2821 = vld.sshfl [vmem:[#allocation1] sm:$0xff pattern:$0x73625140]
    %v2822 = vld.sshfl [vmem:[#allocation1 + $0x8] sm:$0xff pattern:$0x73625140]
    %v2823 = vld.sshfl [vmem:[#allocation1 + $0x10] sm:$0xff pattern:$0x73625140]
    %v2824 = vld.sshfl [vmem:[#allocation1 + $0x18] sm:$0xff pattern:$0x73625140]
    %v2825 = vld.sshfl [vmem:[#allocation1 + $0x20] sm:$0xff pattern:$0x73625140]
    %v2826 = vld.sshfl [vmem:[#allocation1 + $0x28] sm:$0xff pattern:$0x73625140]
    %v2827 = vld.sshfl [vmem:[#allocation1 + $0x30] sm:$0xff pattern:$0x73625140]
    %v2828 = vld.sshfl [vmem:[#allocation1 + $0x38] sm:$0xff pattern:$0x73625140]
    %v2837 = vpack.c.bf16 %v2821, %v2821
    %v2838 = vpack.c.bf16 %v2822, %v2822
    %v2839 = vpack.c.bf16 %v2823, %v2823
    %v2840 = vpack.c.bf16 %v2824, %v2824
    %v2841 = vpack.c.bf16 %v2825, %v2825
    %v2842 = vpack.c.bf16 %v2826, %v2826
    %v2843 = vpack.c.bf16 %v2827, %v2827
    %v2844 = vpack.c.bf16 %v2828, %v2828
    %2845 = vmatpush.bf16.msra.mxu0 %v2555
    %2846 = vmatpush.bf16.msra.mxu0 %v2551
    %2847 = vmatpush.bf16.msra.mxu0 %v2547
    %2848 = vmatpush.bf16.msra.mxu0 %v2543
    %2849 = vmatpush.bf16.msra.mxu0 %v2539
    %2850 = vmatpush.bf16.msra.mxu0 %v2535
    %2851 = vmatpush.bf16.msra.mxu0 %v2531
    %2852 = vmatpush.bf16.msra.mxu0 %v2527
    %2853 = vmatmul.bf16.gmra.mxu0 %v2806
    %v2854 = vpop.f32.mrf.mxu0
    %v2855 = vadd.f32 0.0, %v2854
    %v2856 = vpop.f32.mrf.mxu0
    %2857 = vdwg.mxu0
    %2858 = vmatpush.bf16.msra.mxu0 %v2587
    %2859 = vmatpush.bf16.msra.mxu0 %v2583
    %2860 = vmatpush.bf16.msra.mxu0 %v2579
    %2861 = vmatpush.bf16.msra.mxu0 %v2575
    %2862 = vmatpush.bf16.msra.mxu0 %v2571
    %2863 = vmatpush.bf16.msra.mxu0 %v2567
    %2864 = vmatpush.bf16.msra.mxu0 %v2563
    %2865 = vmatpush.bf16.msra.mxu0 %v2559
    %2866 = vmatmul.bf16.gmra.mxu0 %v2807
    %v2867 = vpop.f32.mrf.mxu0
    %v2868 = vadd.f32 %v2855, %v2867
    %v2869 = vpop.f32.mrf.mxu0
    %2870 = vdwg.mxu0
    %2871 = vmatpush.bf16.msra.mxu0 %v2619
    %2872 = vmatpush.bf16.msra.mxu0 %v2615
    %2873 = vmatpush.bf16.msra.mxu0 %v2611
    %2874 = vmatpush.bf16.msra.mxu0 %v2607
    %2875 = vmatpush.bf16.msra.mxu0 %v2603
    %2876 = vmatpush.bf16.msra.mxu0 %v2599
    %2877 = vmatpush.bf16.msra.mxu0 %v2595
    %2878 = vmatpush.bf16.msra.mxu0 %v2591
    %2879 = vmatmul.bf16.gmra.mxu0 %v2808
    %v2880 = vpop.f32.mrf.mxu0
    %v2881 = vadd.f32 %v2868, %v2880
    %v2882 = vpop.f32.mrf.mxu0
    %2883 = vdwg.mxu0
    %2884 = vmatpush.bf16.msra.mxu0 %v2651
    %2885 = vmatpush.bf16.msra.mxu0 %v2647
    %2886 = vmatpush.bf16.msra.mxu0 %v2643
    %2887 = vmatpush.bf16.msra.mxu0 %v2639
    %2888 = vmatpush.bf16.msra.mxu0 %v2635
    %2889 = vmatpush.bf16.msra.mxu0 %v2631
    %2890 = vmatpush.bf16.msra.mxu0 %v2627
    %2891 = vmatpush.bf16.msra.mxu0 %v2623
    %2892 = vmatmul.bf16.gmra.mxu0 %v2809
    %v2893 = vpop.f32.mrf.mxu0
    %v2894 = vadd.f32 %v2881, %v2893
    %v2895 = vpop.f32.mrf.mxu0
    %2896 = vdwg.mxu0
    %2897 = vmatpush.bf16.msra.mxu0 %v2683
    %2898 = vmatpush.bf16.msra.mxu0 %v2679
    %2899 = vmatpush.bf16.msra.mxu0 %v2675
    %2900 = vmatpush.bf16.msra.mxu0 %v2671
    %2901 = vmatpush.bf16.msra.mxu0 %v2667
    %2902 = vmatpush.bf16.msra.mxu0 %v2663
    %2903 = vmatpush.bf16.msra.mxu0 %v2659
    %2904 = vmatpush.bf16.msra.mxu0 %v2655
    %2905 = vmatmul.bf16.gmra.mxu0 %v2810
    %v2906 = vpop.f32.mrf.mxu0
    %v2907 = vadd.f32 %v2894, %v2906
    %v2908 = vpop.f32.mrf.mxu0
    %2909 = vdwg.mxu0
    %2910 = vmatpush.bf16.msra.mxu0 %v2715
    %2911 = vmatpush.bf16.msra.mxu0 %v2711
    %2912 = vmatpush.bf16.msra.mxu0 %v2707
    %2913 = vmatpush.bf16.msra.mxu0 %v2703
    %2914 = vmatpush.bf16.msra.mxu0 %v2699
    %2915 = vmatpush.bf16.msra.mxu0 %v2695
    %2916 = vmatpush.bf16.msra.mxu0 %v2691
    %2917 = vmatpush.bf16.msra.mxu0 %v2687
    %2918 = vmatmul.bf16.gmra.mxu0 %v2811
    %v2919 = vpop.f32.mrf.mxu0
    %v2920 = vadd.f32 %v2907, %v2919
    %v2921 = vpop.f32.mrf.mxu0
    %2922 = vdwg.mxu0
    %2923 = vmatpush.bf16.msra.mxu0 %v2747
    %2924 = vmatpush.bf16.msra.mxu0 %v2743
    %2925 = vmatpush.bf16.msra.mxu0 %v2739
    %2926 = vmatpush.bf16.msra.mxu0 %v2735
    %2927 = vmatpush.bf16.msra.mxu0 %v2731
    %2928 = vmatpush.bf16.msra.mxu0 %v2727
    %2929 = vmatpush.bf16.msra.mxu0 %v2723
    %2930 = vmatpush.bf16.msra.mxu0 %v2719
    %2931 = vmatmul.bf16.gmra.mxu0 %v2812
    %v2932 = vpop.f32.mrf.mxu0
    %v2933 = vadd.f32 %v2920, %v2932
    %v2934 = vpop.f32.mrf.mxu0
    %2935 = vdwg.mxu0
    %2936 = vmatpush.bf16.msra.mxu0 %v2779
    %2937 = vmatpush.bf16.msra.mxu0 %v2775
    %2938 = vmatpush.bf16.msra.mxu0 %v2771
    %2939 = vmatpush.bf16.msra.mxu0 %v2767
    %2940 = vmatpush.bf16.msra.mxu0 %v2763
    %2941 = vmatpush.bf16.msra.mxu0 %v2759
    %2942 = vmatpush.bf16.msra.mxu0 %v2755
    %2943 = vmatpush.bf16.msra.mxu0 %v2751
    %2944 = vmatmul.bf16.gmra.mxu0 %v2813
    %v2945 = vpop.f32.mrf.mxu0
    %v2946 = vadd.f32 %v2933, %v2945
    %v2947 = vpop.f32.mrf.mxu0
    %2948 = vdwg.mxu0
    %2949 = vmatpush.bf16.msra.mxu0 %v2556
    %2950 = vmatpush.bf16.msra.mxu0 %v2552
    %2951 = vmatpush.bf16.msra.mxu0 %v2548
    %2952 = vmatpush.bf16.msra.mxu0 %v2544
    %2953 = vmatpush.bf16.msra.mxu0 %v2540
    %2954 = vmatpush.bf16.msra.mxu0 %v2536
    %2955 = vmatpush.bf16.msra.mxu0 %v2532
    %2956 = vmatpush.bf16.msra.mxu0 %v2528
    %2957 = vmatmul.bf16.gmra.mxu0 %v2806
    %v2958 = vpop.f32.mrf.mxu0
    %v2959 = vadd.f32 0.0, %v2958
    %v2960 = vpop.f32.mrf.mxu0
    %2961 = vdwg.mxu0
    %2962 = vmatpush.bf16.msra.mxu0 %v2588
    %2963 = vmatpush.bf16.msra.mxu0 %v2584
    %2964 = vmatpush.bf16.msra.mxu0 %v2580
    %2965 = vmatpush.bf16.msra.mxu0 %v2576
    %2966 = vmatpush.bf16.msra.mxu0 %v2572
    %2967 = vmatpush.bf16.msra.mxu0 %v2568
    %2968 = vmatpush.bf16.msra.mxu0 %v2564
    %2969 = vmatpush.bf16.msra.mxu0 %v2560
    %2970 = vmatmul.bf16.gmra.mxu0 %v2807
    %v2971 = vpop.f32.mrf.mxu0
    %v2972 = vadd.f32 %v2959, %v2971
    %v2973 = vpop.f32.mrf.mxu0
    %2974 = vdwg.mxu0
    %2975 = vmatpush.bf16.msra.mxu0 %v2620
    %2976 = vmatpush.bf16.msra.mxu0 %v2616
    %2977 = vmatpush.bf16.msra.mxu0 %v2612
    %2978 = vmatpush.bf16.msra.mxu0 %v2608
    %2979 = vmatpush.bf16.msra.mxu0 %v2604
    %2980 = vmatpush.bf16.msra.mxu0 %v2600
    %2981 = vmatpush.bf16.msra.mxu0 %v2596
    %2982 = vmatpush.bf16.msra.mxu0 %v2592
    %2983 = vmatmul.bf16.gmra.mxu0 %v2808
    %v2984 = vpop.f32.mrf.mxu0
    %v2985 = vadd.f32 %v2972, %v2984
    %v2986 = vpop.f32.mrf.mxu0
    %2987 = vdwg.mxu0
    %2988 = vmatpush.bf16.msra.mxu0 %v2652
    %2989 = vmatpush.bf16.msra.mxu0 %v2648
    %2990 = vmatpush.bf16.msra.mxu0 %v2644
    %2991 = vmatpush.bf16.msra.mxu0 %v2640
    %2992 = vmatpush.bf16.msra.mxu0 %v2636
    %2993 = vmatpush.bf16.msra.mxu0 %v2632
    %2994 = vmatpush.bf16.msra.mxu0 %v2628
    %2995 = vmatpush.bf16.msra.mxu0 %v2624
    %2996 = vmatmul.bf16.gmra.mxu0 %v2809
    %v2997 = vpop.f32.mrf.mxu0
    %v2998 = vadd.f32 %v2985, %v2997
    %v2999 = vpop.f32.mrf.mxu0
    %3000 = vdwg.mxu0
    %3001 = vmatpush.bf16.msra.mxu0 %v2684
    %3002 = vmatpush.bf16.msra.mxu0 %v2680
    %3003 = vmatpush.bf16.msra.mxu0 %v2676
    %3004 = vmatpush.bf16.msra.mxu0 %v2672
    %3005 = vmatpush.bf16.msra.mxu0 %v2668
    %3006 = vmatpush.bf16.msra.mxu0 %v2664
    %3007 = vmatpush.bf16.msra.mxu0 %v2660
    %3008 = vmatpush.bf16.msra.mxu0 %v2656
    %3009 = vmatmul.bf16.gmra.mxu0 %v2810
    %v3010 = vpop.f32.mrf.mxu0
    %v3011 = vadd.f32 %v2998, %v3010
    %v3012 = vpop.f32.mrf.mxu0
    %3013 = vdwg.mxu0
    %3014 = vmatpush.bf16.msra.mxu0 %v2716
    %3015 = vmatpush.bf16.msra.mxu0 %v2712
    %3016 = vmatpush.bf16.msra.mxu0 %v2708
    %3017 = vmatpush.bf16.msra.mxu0 %v2704
    %3018 = vmatpush.bf16.msra.mxu0 %v2700
    %3019 = vmatpush.bf16.msra.mxu0 %v2696
    %3020 = vmatpush.bf16.msra.mxu0 %v2692
    %3021 = vmatpush.bf16.msra.mxu0 %v2688
    %3022 = vmatmul.bf16.gmra.mxu0 %v2811
    %v3023 = vpop.f32.mrf.mxu0
    %v3024 = vadd.f32 %v3011, %v3023
    %v3025 = vpop.f32.mrf.mxu0
    %3026 = vdwg.mxu0
    %3027 = vmatpush.bf16.msra.mxu0 %v2748
    %3028 = vmatpush.bf16.msra.mxu0 %v2744
    %3029 = vmatpush.bf16.msra.mxu0 %v2740
    %3030 = vmatpush.bf16.msra.mxu0 %v2736
    %3031 = vmatpush.bf16.msra.mxu0 %v2732
    %3032 = vmatpush.bf16.msra.mxu0 %v2728
    %3033 = vmatpush.bf16.msra.mxu0 %v2724
    %3034 = vmatpush.bf16.msra.mxu0 %v2720
    %3035 = vmatmul.bf16.gmra.mxu0 %v2812
    %v3036 = vpop.f32.mrf.mxu0
    %v3037 = vadd.f32 %v3024, %v3036
    %v3038 = vpop.f32.mrf.mxu0
    %3039 = vdwg.mxu0
    %3040 = vmatpush.bf16.msra.mxu0 %v2780
    %3041 = vmatpush.bf16.msra.mxu0 %v2776
    %3042 = vmatpush.bf16.msra.mxu0 %v2772
    %3043 = vmatpush.bf16.msra.mxu0 %v2768
    %3044 = vmatpush.bf16.msra.mxu0 %v2764
    %3045 = vmatpush.bf16.msra.mxu0 %v2760
    %3046 = vmatpush.bf16.msra.mxu0 %v2756
    %3047 = vmatpush.bf16.msra.mxu0 %v2752
    %3048 = vmatmul.bf16.gmra.mxu0 %v2813
    %v3049 = vpop.f32.mrf.mxu0
    %v3050 = vadd.f32 %v3037, %v3049
    %v3051 = vpop.f32.mrf.mxu0
    %3052 = vdwg.mxu0
    %3053 = vmatpush.bf16.msra.mxu0 %v2557
    %3054 = vmatpush.bf16.msra.mxu0 %v2553
    %3055 = vmatpush.bf16.msra.mxu0 %v2549
    %3056 = vmatpush.bf16.msra.mxu0 %v2545
    %3057 = vmatpush.bf16.msra.mxu0 %v2541
    %3058 = vmatpush.bf16.msra.mxu0 %v2537
    %3059 = vmatpush.bf16.msra.mxu0 %v2533
    %3060 = vmatpush.bf16.msra.mxu0 %v2529
    %3061 = vmatmul.bf16.gmra.mxu0 %v2806
    %v3062 = vpop.f32.mrf.mxu0
    %v3063 = vadd.f32 0.0, %v3062
    %v3064 = vpop.f32.mrf.mxu0
    %3065 = vdwg.mxu0
    %3066 = vmatpush.bf16.msra.mxu0 %v2589
    %3067 = vmatpush.bf16.msra.mxu0 %v2585
    %3068 = vmatpush.bf16.msra.mxu0 %v2581
    %3069 = vmatpush.bf16.msra.mxu0 %v2577
    %3070 = vmatpush.bf16.msra.mxu0 %v2573
    %3071 = vmatpush.bf16.msra.mxu0 %v2569
    %3072 = vmatpush.bf16.msra.mxu0 %v2565
    %3073 = vmatpush.bf16.msra.mxu0 %v2561
    %3074 = vmatmul.bf16.gmra.mxu0 %v2807
    %v3075 = vpop.f32.mrf.mxu0
    %v3076 = vadd.f32 %v3063, %v3075
    %v3077 = vpop.f32.mrf.mxu0
    %3078 = vdwg.mxu0
    %3079 = vmatpush.bf16.msra.mxu0 %v2621
    %3080 = vmatpush.bf16.msra.mxu0 %v2617
    %3081 = vmatpush.bf16.msra.mxu0 %v2613
    %3082 = vmatpush.bf16.msra.mxu0 %v2609
    %3083 = vmatpush.bf16.msra.mxu0 %v2605
    %3084 = vmatpush.bf16.msra.mxu0 %v2601
    %3085 = vmatpush.bf16.msra.mxu0 %v2597
    %3086 = vmatpush.bf16.msra.mxu0 %v2593
    %3087 = vmatmul.bf16.gmra.mxu0 %v2808
    %v3088 = vpop.f32.mrf.mxu0
    %v3089 = vadd.f32 %v3076, %v3088
    %v3090 = vpop.f32.mrf.mxu0
    %3091 = vdwg.mxu0
    %3092 = vmatpush.bf16.msra.mxu0 %v2653
    %3093 = vmatpush.bf16.msra.mxu0 %v2649
    %3094 = vmatpush.bf16.msra.mxu0 %v2645
    %3095 = vmatpush.bf16.msra.mxu0 %v2641
    %3096 = vmatpush.bf16.msra.mxu0 %v2637
    %3097 = vmatpush.bf16.msra.mxu0 %v2633
    %3098 = vmatpush.bf16.msra.mxu0 %v2629
    %3099 = vmatpush.bf16.msra.mxu0 %v2625
    %3100 = vmatmul.bf16.gmra.mxu0 %v2809
    %v3101 = vpop.f32.mrf.mxu0
    %v3102 = vadd.f32 %v3089, %v3101
    %v3103 = vpop.f32.mrf.mxu0
    %3104 = vdwg.mxu0
    %3105 = vmatpush.bf16.msra.mxu0 %v2685
    %3106 = vmatpush.bf16.msra.mxu0 %v2681
    %3107 = vmatpush.bf16.msra.mxu0 %v2677
    %3108 = vmatpush.bf16.msra.mxu0 %v2673
    %3109 = vmatpush.bf16.msra.mxu0 %v2669
    %3110 = vmatpush.bf16.msra.mxu0 %v2665
    %3111 = vmatpush.bf16.msra.mxu0 %v2661
    %3112 = vmatpush.bf16.msra.mxu0 %v2657
    %3113 = vmatmul.bf16.gmra.mxu0 %v2810
    %v3114 = vpop.f32.mrf.mxu0
    %v3115 = vadd.f32 %v3102, %v3114
    %v3116 = vpop.f32.mrf.mxu0
    %3117 = vdwg.mxu0
    %3118 = vmatpush.bf16.msra.mxu0 %v2717
    %3119 = vmatpush.bf16.msra.mxu0 %v2713
    %3120 = vmatpush.bf16.msra.mxu0 %v2709
    %3121 = vmatpush.bf16.msra.mxu0 %v2705
    %3122 = vmatpush.bf16.msra.mxu0 %v2701
    %3123 = vmatpush.bf16.msra.mxu0 %v2697
    %3124 = vmatpush.bf16.msra.mxu0 %v2693
    %3125 = vmatpush.bf16.msra.mxu0 %v2689
    %3126 = vmatmul.bf16.gmra.mxu0 %v2811
    %v3127 = vpop.f32.mrf.mxu0
    %v3128 = vadd.f32 %v3115, %v3127
    %v3129 = vpop.f32.mrf.mxu0
    %3130 = vdwg.mxu0
    %3131 = vmatpush.bf16.msra.mxu0 %v2749
    %3132 = vmatpush.bf16.msra.mxu0 %v2745
    %3133 = vmatpush.bf16.msra.mxu0 %v2741
    %3134 = vmatpush.bf16.msra.mxu0 %v2737
    %3135 = vmatpush.bf16.msra.mxu0 %v2733
    %3136 = vmatpush.bf16.msra.mxu0 %v2729
    %3137 = vmatpush.bf16.msra.mxu0 %v2725
    %3138 = vmatpush.bf16.msra.mxu0 %v2721
    %3139 = vmatmul.bf16.gmra.mxu0 %v2812
    %v3140 = vpop.f32.mrf.mxu0
    %v3141 = vadd.f32 %v3128, %v3140
    %v3142 = vpop.f32.mrf.mxu0
    %3143 = vdwg.mxu0
    %3144 = vmatpush.bf16.msra.mxu0 %v2781
    %3145 = vmatpush.bf16.msra.mxu0 %v2777
    %3146 = vmatpush.bf16.msra.mxu0 %v2773
    %3147 = vmatpush.bf16.msra.mxu0 %v2769
    %3148 = vmatpush.bf16.msra.mxu0 %v2765
    %3149 = vmatpush.bf16.msra.mxu0 %v2761
    %3150 = vmatpush.bf16.msra.mxu0 %v2757
    %3151 = vmatpush.bf16.msra.mxu0 %v2753
    %3152 = vmatmul.bf16.gmra.mxu0 %v2813
    %v3153 = vpop.f32.mrf.mxu0
    %v3154 = vadd.f32 %v3141, %v3153
    %v3155 = vpop.f32.mrf.mxu0
    %3156 = vdwg.mxu0
    %3157 = vmatpush.bf16.msra.mxu0 %v2558
    %3158 = vmatpush.bf16.msra.mxu0 %v2554
    %3159 = vmatpush.bf16.msra.mxu0 %v2550
    %3160 = vmatpush.bf16.msra.mxu0 %v2546
    %3161 = vmatpush.bf16.msra.mxu0 %v2542
    %3162 = vmatpush.bf16.msra.mxu0 %v2538
    %3163 = vmatpush.bf16.msra.mxu0 %v2534
    %3164 = vmatpush.bf16.msra.mxu0 %v2530
    %3165 = vmatmul.bf16.gmra.mxu0 %v2806
    %v3166 = vpop.f32.mrf.mxu0
    %v3167 = vadd.f32 0.0, %v3166
    %v3168 = vpop.f32.mrf.mxu0
    %3169 = vdwg.mxu0
    %3170 = vmatpush.bf16.msra.mxu0 %v2590
    %3171 = vmatpush.bf16.msra.mxu0 %v2586
    %3172 = vmatpush.bf16.msra.mxu0 %v2582
    %3173 = vmatpush.bf16.msra.mxu0 %v2578
    %3174 = vmatpush.bf16.msra.mxu0 %v2574
    %3175 = vmatpush.bf16.msra.mxu0 %v2570
    %3176 = vmatpush.bf16.msra.mxu0 %v2566
    %3177 = vmatpush.bf16.msra.mxu0 %v2562
    %3178 = vmatmul.bf16.gmra.mxu0 %v2807
    %v3179 = vpop.f32.mrf.mxu0
    %v3180 = vadd.f32 %v3167, %v3179
    %v3181 = vpop.f32.mrf.mxu0
    %3182 = vdwg.mxu0
    %3183 = vmatpush.bf16.msra.mxu0 %v2622
    %3184 = vmatpush.bf16.msra.mxu0 %v2618
    %3185 = vmatpush.bf16.msra.mxu0 %v2614
    %3186 = vmatpush.bf16.msra.mxu0 %v2610
    %3187 = vmatpush.bf16.msra.mxu0 %v2606
    %3188 = vmatpush.bf16.msra.mxu0 %v2602
    %3189 = vmatpush.bf16.msra.mxu0 %v2598
    %3190 = vmatpush.bf16.msra.mxu0 %v2594
    %3191 = vmatmul.bf16.gmra.mxu0 %v2808
    %v3192 = vpop.f32.mrf.mxu0
    %v3193 = vadd.f32 %v3180, %v3192
    %v3194 = vpop.f32.mrf.mxu0
    %3195 = vdwg.mxu0
    %3196 = vmatpush.bf16.msra.mxu0 %v2654
    %3197 = vmatpush.bf16.msra.mxu0 %v2650
    %3198 = vmatpush.bf16.msra.mxu0 %v2646
    %3199 = vmatpush.bf16.msra.mxu0 %v2642
    %3200 = vmatpush.bf16.msra.mxu0 %v2638
    %3201 = vmatpush.bf16.msra.mxu0 %v2634
    %3202 = vmatpush.bf16.msra.mxu0 %v2630
    %3203 = vmatpush.bf16.msra.mxu0 %v2626
    %3204 = vmatmul.bf16.gmra.mxu0 %v2809
    %v3205 = vpop.f32.mrf.mxu0
    %v3206 = vadd.f32 %v3193, %v3205
    %v3207 = vpop.f32.mrf.mxu0
    %3208 = vdwg.mxu0
    %3209 = vmatpush.bf16.msra.mxu0 %v2686
    %3210 = vmatpush.bf16.msra.mxu0 %v2682
    %3211 = vmatpush.bf16.msra.mxu0 %v2678
    %3212 = vmatpush.bf16.msra.mxu0 %v2674
    %3213 = vmatpush.bf16.msra.mxu0 %v2670
    %3214 = vmatpush.bf16.msra.mxu0 %v2666
    %3215 = vmatpush.bf16.msra.mxu0 %v2662
    %3216 = vmatpush.bf16.msra.mxu0 %v2658
    %3217 = vmatmul.bf16.gmra.mxu0 %v2810
    %v3218 = vpop.f32.mrf.mxu0
    %v3219 = vadd.f32 %v3206, %v3218
    %v3220 = vpop.f32.mrf.mxu0
    %3221 = vdwg.mxu0
    %3222 = vmatpush.bf16.msra.mxu0 %v2718
    %3223 = vmatpush.bf16.msra.mxu0 %v2714
    %3224 = vmatpush.bf16.msra.mxu0 %v2710
    %3225 = vmatpush.bf16.msra.mxu0 %v2706
    %3226 = vmatpush.bf16.msra.mxu0 %v2702
    %3227 = vmatpush.bf16.msra.mxu0 %v2698
    %3228 = vmatpush.bf16.msra.mxu0 %v2694
    %3229 = vmatpush.bf16.msra.mxu0 %v2690
    %3230 = vmatmul.bf16.gmra.mxu0 %v2811
    %v3231 = vpop.f32.mrf.mxu0
    %v3232 = vadd.f32 %v3219, %v3231
    %v3233 = vpop.f32.mrf.mxu0
    %3234 = vdwg.mxu0
    %3235 = vmatpush.bf16.msra.mxu0 %v2750
    %3236 = vmatpush.bf16.msra.mxu0 %v2746
    %3237 = vmatpush.bf16.msra.mxu0 %v2742
    %3238 = vmatpush.bf16.msra.mxu0 %v2738
    %3239 = vmatpush.bf16.msra.mxu0 %v2734
    %3240 = vmatpush.bf16.msra.mxu0 %v2730
    %3241 = vmatpush.bf16.msra.mxu0 %v2726
    %3242 = vmatpush.bf16.msra.mxu0 %v2722
    %3243 = vmatmul.bf16.gmra.mxu0 %v2812
    %v3244 = vpop.f32.mrf.mxu0
    %v3245 = vadd.f32 %v3232, %v3244
    %v3246 = vpop.f32.mrf.mxu0
    %3247 = vdwg.mxu0
    %3248 = vmatpush.bf16.msra.mxu0 %v2782
    %3249 = vmatpush.bf16.msra.mxu0 %v2778
    %3250 = vmatpush.bf16.msra.mxu0 %v2774
    %3251 = vmatpush.bf16.msra.mxu0 %v2770
    %3252 = vmatpush.bf16.msra.mxu0 %v2766
    %3253 = vmatpush.bf16.msra.mxu0 %v2762
    %3254 = vmatpush.bf16.msra.mxu0 %v2758
    %3255 = vmatpush.bf16.msra.mxu0 %v2754
    %3256 = vmatmul.bf16.gmra.mxu0 %v2813
    %v3257 = vpop.f32.mrf.mxu0
    %v3258 = vadd.f32 %v3245, %v3257
    %v3259 = vpop.f32.mrf.mxu0
    %3260 = vdwg.mxu0
    %3261 = vmatpush.bf16.msra.mxu0 %v2555
    %3262 = vmatpush.bf16.msra.mxu0 %v2551
    %3263 = vmatpush.bf16.msra.mxu0 %v2547
    %3264 = vmatpush.bf16.msra.mxu0 %v2543
    %3265 = vmatpush.bf16.msra.mxu0 %v2539
    %3266 = vmatpush.bf16.msra.mxu0 %v2535
    %3267 = vmatpush.bf16.msra.mxu0 %v2531
    %3268 = vmatpush.bf16.msra.mxu0 %v2527
    %3269 = vmatmul.bf16.gmra.mxu0 %v2837
    %v3270 = vpop.f32.mrf.mxu0
    %v3271 = vadd.f32 0.0, %v3270
    %v3272 = vpop.f32.mrf.mxu0
    %3273 = vdwg.mxu0
    %3274 = vmatpush.bf16.msra.mxu0 %v2587
    %3275 = vmatpush.bf16.msra.mxu0 %v2583
    %3276 = vmatpush.bf16.msra.mxu0 %v2579
    %3277 = vmatpush.bf16.msra.mxu0 %v2575
    %3278 = vmatpush.bf16.msra.mxu0 %v2571
    %3279 = vmatpush.bf16.msra.mxu0 %v2567
    %3280 = vmatpush.bf16.msra.mxu0 %v2563
    %3281 = vmatpush.bf16.msra.mxu0 %v2559
    %3282 = vmatmul.bf16.gmra.mxu0 %v2838
    %v3283 = vpop.f32.mrf.mxu0
    %v3284 = vadd.f32 %v3271, %v3283
    %v3285 = vpop.f32.mrf.mxu0
    %3286 = vdwg.mxu0
    %3287 = vmatpush.bf16.msra.mxu0 %v2619
    %3288 = vmatpush.bf16.msra.mxu0 %v2615
    %3289 = vmatpush.bf16.msra.mxu0 %v2611
    %3290 = vmatpush.bf16.msra.mxu0 %v2607
    %3291 = vmatpush.bf16.msra.mxu0 %v2603
    %3292 = vmatpush.bf16.msra.mxu0 %v2599
    %3293 = vmatpush.bf16.msra.mxu0 %v2595
    %3294 = vmatpush.bf16.msra.mxu0 %v2591
    %3295 = vmatmul.bf16.gmra.mxu0 %v2839
    %v3296 = vpop.f32.mrf.mxu0
    %v3297 = vadd.f32 %v3284, %v3296
    %v3298 = vpop.f32.mrf.mxu0
    %3299 = vdwg.mxu0
    %3300 = vmatpush.bf16.msra.mxu0 %v2651
    %3301 = vmatpush.bf16.msra.mxu0 %v2647
    %3302 = vmatpush.bf16.msra.mxu0 %v2643
    %3303 = vmatpush.bf16.msra.mxu0 %v2639
    %3304 = vmatpush.bf16.msra.mxu0 %v2635
    %3305 = vmatpush.bf16.msra.mxu0 %v2631
    %3306 = vmatpush.bf16.msra.mxu0 %v2627
    %3307 = vmatpush.bf16.msra.mxu0 %v2623
    %3308 = vmatmul.bf16.gmra.mxu0 %v2840
    %v3309 = vpop.f32.mrf.mxu0
    %v3310 = vadd.f32 %v3297, %v3309
    %v3311 = vpop.f32.mrf.mxu0
    %3312 = vdwg.mxu0
    %3313 = vmatpush.bf16.msra.mxu0 %v2683
    %3314 = vmatpush.bf16.msra.mxu0 %v2679
    %3315 = vmatpush.bf16.msra.mxu0 %v2675
    %3316 = vmatpush.bf16.msra.mxu0 %v2671
    %3317 = vmatpush.bf16.msra.mxu0 %v2667
    %3318 = vmatpush.bf16.msra.mxu0 %v2663
    %3319 = vmatpush.bf16.msra.mxu0 %v2659
    %3320 = vmatpush.bf16.msra.mxu0 %v2655
    %3321 = vmatmul.bf16.gmra.mxu0 %v2841
    %v3322 = vpop.f32.mrf.mxu0
    %v3323 = vadd.f32 %v3310, %v3322
    %v3324 = vpop.f32.mrf.mxu0
    %3325 = vdwg.mxu0
    %3326 = vmatpush.bf16.msra.mxu0 %v2715
    %3327 = vmatpush.bf16.msra.mxu0 %v2711
    %3328 = vmatpush.bf16.msra.mxu0 %v2707
    %3329 = vmatpush.bf16.msra.mxu0 %v2703
    %3330 = vmatpush.bf16.msra.mxu0 %v2699
    %3331 = vmatpush.bf16.msra.mxu0 %v2695
    %3332 = vmatpush.bf16.msra.mxu0 %v2691
    %3333 = vmatpush.bf16.msra.mxu0 %v2687
    %3334 = vmatmul.bf16.gmra.mxu0 %v2842
    %v3335 = vpop.f32.mrf.mxu0
    %v3336 = vadd.f32 %v3323, %v3335
    %v3337 = vpop.f32.mrf.mxu0
    %3338 = vdwg.mxu0
    %3339 = vmatpush.bf16.msra.mxu0 %v2747
    %3340 = vmatpush.bf16.msra.mxu0 %v2743
    %3341 = vmatpush.bf16.msra.mxu0 %v2739
    %3342 = vmatpush.bf16.msra.mxu0 %v2735
    %3343 = vmatpush.bf16.msra.mxu0 %v2731
    %3344 = vmatpush.bf16.msra.mxu0 %v2727
    %3345 = vmatpush.bf16.msra.mxu0 %v2723
    %3346 = vmatpush.bf16.msra.mxu0 %v2719
    %3347 = vmatmul.bf16.gmra.mxu0 %v2843
    %v3348 = vpop.f32.mrf.mxu0
    %v3349 = vadd.f32 %v3336, %v3348
    %v3350 = vpop.f32.mrf.mxu0
    %3351 = vdwg.mxu0
    %3352 = vmatpush.bf16.msra.mxu0 %v2779
    %3353 = vmatpush.bf16.msra.mxu0 %v2775
    %3354 = vmatpush.bf16.msra.mxu0 %v2771
    %3355 = vmatpush.bf16.msra.mxu0 %v2767
    %3356 = vmatpush.bf16.msra.mxu0 %v2763
    %3357 = vmatpush.bf16.msra.mxu0 %v2759
    %3358 = vmatpush.bf16.msra.mxu0 %v2755
    %3359 = vmatpush.bf16.msra.mxu0 %v2751
    %3360 = vmatmul.bf16.gmra.mxu0 %v2844
    %v3361 = vpop.f32.mrf.mxu0
    %v3362 = vadd.f32 %v3349, %v3361
    %v3363 = vpop.f32.mrf.mxu0
    %3364 = vdwg.mxu0
    %3365 = vmatpush.bf16.msra.mxu0 %v2556
    %3366 = vmatpush.bf16.msra.mxu0 %v2552
    %3367 = vmatpush.bf16.msra.mxu0 %v2548
    %3368 = vmatpush.bf16.msra.mxu0 %v2544
    %3369 = vmatpush.bf16.msra.mxu0 %v2540
    %3370 = vmatpush.bf16.msra.mxu0 %v2536
    %3371 = vmatpush.bf16.msra.mxu0 %v2532
    %3372 = vmatpush.bf16.msra.mxu0 %v2528
    %3373 = vmatmul.bf16.gmra.mxu0 %v2837
    %v3374 = vpop.f32.mrf.mxu0
    %v3375 = vadd.f32 0.0, %v3374
    %v3376 = vpop.f32.mrf.mxu0
    %3377 = vdwg.mxu0
    %3378 = vmatpush.bf16.msra.mxu0 %v2588
    %3379 = vmatpush.bf16.msra.mxu0 %v2584
    %3380 = vmatpush.bf16.msra.mxu0 %v2580
    %3381 = vmatpush.bf16.msra.mxu0 %v2576
    %3382 = vmatpush.bf16.msra.mxu0 %v2572
    %3383 = vmatpush.bf16.msra.mxu0 %v2568
    %3384 = vmatpush.bf16.msra.mxu0 %v2564
    %3385 = vmatpush.bf16.msra.mxu0 %v2560
    %3386 = vmatmul.bf16.gmra.mxu0 %v2838
    %v3387 = vpop.f32.mrf.mxu0
    %v3388 = vadd.f32 %v3375, %v3387
    %v3389 = vpop.f32.mrf.mxu0
    %3390 = vdwg.mxu0
    %3391 = vmatpush.bf16.msra.mxu0 %v2620
    %3392 = vmatpush.bf16.msra.mxu0 %v2616
    %3393 = vmatpush.bf16.msra.mxu0 %v2612
    %3394 = vmatpush.bf16.msra.mxu0 %v2608
    %3395 = vmatpush.bf16.msra.mxu0 %v2604
    %3396 = vmatpush.bf16.msra.mxu0 %v2600
    %3397 = vmatpush.bf16.msra.mxu0 %v2596
    %3398 = vmatpush.bf16.msra.mxu0 %v2592
    %3399 = vmatmul.bf16.gmra.mxu0 %v2839
    %v3400 = vpop.f32.mrf.mxu0
    %v3401 = vadd.f32 %v3388, %v3400
    %v3402 = vpop.f32.mrf.mxu0
    %3403 = vdwg.mxu0
    %3404 = vmatpush.bf16.msra.mxu0 %v2652
    %3405 = vmatpush.bf16.msra.mxu0 %v2648
    %3406 = vmatpush.bf16.msra.mxu0 %v2644
    %3407 = vmatpush.bf16.msra.mxu0 %v2640
    %3408 = vmatpush.bf16.msra.mxu0 %v2636
    %3409 = vmatpush.bf16.msra.mxu0 %v2632
    %3410 = vmatpush.bf16.msra.mxu0 %v2628
    %3411 = vmatpush.bf16.msra.mxu0 %v2624
    %3412 = vmatmul.bf16.gmra.mxu0 %v2840
    %v3413 = vpop.f32.mrf.mxu0
    %v3414 = vadd.f32 %v3401, %v3413
    %v3415 = vpop.f32.mrf.mxu0
    %3416 = vdwg.mxu0
    %3417 = vmatpush.bf16.msra.mxu0 %v2684
    %3418 = vmatpush.bf16.msra.mxu0 %v2680
    %3419 = vmatpush.bf16.msra.mxu0 %v2676
    %3420 = vmatpush.bf16.msra.mxu0 %v2672
    %3421 = vmatpush.bf16.msra.mxu0 %v2668
    %3422 = vmatpush.bf16.msra.mxu0 %v2664
    %3423 = vmatpush.bf16.msra.mxu0 %v2660
    %3424 = vmatpush.bf16.msra.mxu0 %v2656
    %3425 = vmatmul.bf16.gmra.mxu0 %v2841
    %v3426 = vpop.f32.mrf.mxu0
    %v3427 = vadd.f32 %v3414, %v3426
    %v3428 = vpop.f32.mrf.mxu0
    %3429 = vdwg.mxu0
    %3430 = vmatpush.bf16.msra.mxu0 %v2716
    %3431 = vmatpush.bf16.msra.mxu0 %v2712
    %3432 = vmatpush.bf16.msra.mxu0 %v2708
    %3433 = vmatpush.bf16.msra.mxu0 %v2704
    %3434 = vmatpush.bf16.msra.mxu0 %v2700
    %3435 = vmatpush.bf16.msra.mxu0 %v2696
    %3436 = vmatpush.bf16.msra.mxu0 %v2692
    %3437 = vmatpush.bf16.msra.mxu0 %v2688
    %3438 = vmatmul.bf16.gmra.mxu0 %v2842
    %v3439 = vpop.f32.mrf.mxu0
    %v3440 = vadd.f32 %v3427, %v3439
    %v3441 = vpop.f32.mrf.mxu0
    %3442 = vdwg.mxu0
    %3443 = vmatpush.bf16.msra.mxu0 %v2748
    %3444 = vmatpush.bf16.msra.mxu0 %v2744
    %3445 = vmatpush.bf16.msra.mxu0 %v2740
    %3446 = vmatpush.bf16.msra.mxu0 %v2736
    %3447 = vmatpush.bf16.msra.mxu0 %v2732
    %3448 = vmatpush.bf16.msra.mxu0 %v2728
    %3449 = vmatpush.bf16.msra.mxu0 %v2724
    %3450 = vmatpush.bf16.msra.mxu0 %v2720
    %3451 = vmatmul.bf16.gmra.mxu0 %v2843
    %v3452 = vpop.f32.mrf.mxu0
    %v3453 = vadd.f32 %v3440, %v3452
    %v3454 = vpop.f32.mrf.mxu0
    %3455 = vdwg.mxu0
    %3456 = vmatpush.bf16.msra.mxu0 %v2780
    %3457 = vmatpush.bf16.msra.mxu0 %v2776
    %3458 = vmatpush.bf16.msra.mxu0 %v2772
    %3459 = vmatpush.bf16.msra.mxu0 %v2768
    %3460 = vmatpush.bf16.msra.mxu0 %v2764
    %3461 = vmatpush.bf16.msra.mxu0 %v2760
    %3462 = vmatpush.bf16.msra.mxu0 %v2756
    %3463 = vmatpush.bf16.msra.mxu0 %v2752
    %3464 = vmatmul.bf16.gmra.mxu0 %v2844
    %v3465 = vpop.f32.mrf.mxu0
    %v3466 = vadd.f32 %v3453, %v3465
    %v3467 = vpop.f32.mrf.mxu0
    %3468 = vdwg.mxu0
    %3469 = vmatpush.bf16.msra.mxu0 %v2557
    %3470 = vmatpush.bf16.msra.mxu0 %v2553
    %3471 = vmatpush.bf16.msra.mxu0 %v2549
    %3472 = vmatpush.bf16.msra.mxu0 %v2545
    %3473 = vmatpush.bf16.msra.mxu0 %v2541
    %3474 = vmatpush.bf16.msra.mxu0 %v2537
    %3475 = vmatpush.bf16.msra.mxu0 %v2533
    %3476 = vmatpush.bf16.msra.mxu0 %v2529
    %3477 = vmatmul.bf16.gmra.mxu0 %v2837
    %v3478 = vpop.f32.mrf.mxu0
    %v3479 = vadd.f32 0.0, %v3478
    %v3480 = vpop.f32.mrf.mxu0
    %3481 = vdwg.mxu0
    %3482 = vmatpush.bf16.msra.mxu0 %v2589
    %3483 = vmatpush.bf16.msra.mxu0 %v2585
    %3484 = vmatpush.bf16.msra.mxu0 %v2581
    %3485 = vmatpush.bf16.msra.mxu0 %v2577
    %3486 = vmatpush.bf16.msra.mxu0 %v2573
    %3487 = vmatpush.bf16.msra.mxu0 %v2569
    %3488 = vmatpush.bf16.msra.mxu0 %v2565
    %3489 = vmatpush.bf16.msra.mxu0 %v2561
    %3490 = vmatmul.bf16.gmra.mxu0 %v2838
    %v3491 = vpop.f32.mrf.mxu0
    %v3492 = vadd.f32 %v3479, %v3491
    %v3493 = vpop.f32.mrf.mxu0
    %3494 = vdwg.mxu0
    %3495 = vmatpush.bf16.msra.mxu0 %v2621
    %3496 = vmatpush.bf16.msra.mxu0 %v2617
    %3497 = vmatpush.bf16.msra.mxu0 %v2613
    %3498 = vmatpush.bf16.msra.mxu0 %v2609
    %3499 = vmatpush.bf16.msra.mxu0 %v2605
    %3500 = vmatpush.bf16.msra.mxu0 %v2601
    %3501 = vmatpush.bf16.msra.mxu0 %v2597
    %3502 = vmatpush.bf16.msra.mxu0 %v2593
    %3503 = vmatmul.bf16.gmra.mxu0 %v2839
    %v3504 = vpop.f32.mrf.mxu0
    %v3505 = vadd.f32 %v3492, %v3504
    %v3506 = vpop.f32.mrf.mxu0
    %3507 = vdwg.mxu0
    %3508 = vmatpush.bf16.msra.mxu0 %v2653
    %3509 = vmatpush.bf16.msra.mxu0 %v2649
    %3510 = vmatpush.bf16.msra.mxu0 %v2645
    %3511 = vmatpush.bf16.msra.mxu0 %v2641
    %3512 = vmatpush.bf16.msra.mxu0 %v2637
    %3513 = vmatpush.bf16.msra.mxu0 %v2633
    %3514 = vmatpush.bf16.msra.mxu0 %v2629
    %3515 = vmatpush.bf16.msra.mxu0 %v2625
    %3516 = vmatmul.bf16.gmra.mxu0 %v2840
    %v3517 = vpop.f32.mrf.mxu0
    %v3518 = vadd.f32 %v3505, %v3517
    %v3519 = vpop.f32.mrf.mxu0
    %3520 = vdwg.mxu0
    %3521 = vmatpush.bf16.msra.mxu0 %v2685
    %3522 = vmatpush.bf16.msra.mxu0 %v2681
    %3523 = vmatpush.bf16.msra.mxu0 %v2677
    %3524 = vmatpush.bf16.msra.mxu0 %v2673
    %3525 = vmatpush.bf16.msra.mxu0 %v2669
    %3526 = vmatpush.bf16.msra.mxu0 %v2665
    %3527 = vmatpush.bf16.msra.mxu0 %v2661
    %3528 = vmatpush.bf16.msra.mxu0 %v2657
    %3529 = vmatmul.bf16.gmra.mxu0 %v2841
    %v3530 = vpop.f32.mrf.mxu0
    %v3531 = vadd.f32 %v3518, %v3530
    %v3532 = vpop.f32.mrf.mxu0
    %3533 = vdwg.mxu0
    %3534 = vmatpush.bf16.msra.mxu0 %v2717
    %3535 = vmatpush.bf16.msra.mxu0 %v2713
    %3536 = vmatpush.bf16.msra.mxu0 %v2709
    %3537 = vmatpush.bf16.msra.mxu0 %v2705
    %3538 = vmatpush.bf16.msra.mxu0 %v2701
    %3539 = vmatpush.bf16.msra.mxu0 %v2697
    %3540 = vmatpush.bf16.msra.mxu0 %v2693
    %3541 = vmatpush.bf16.msra.mxu0 %v2689
    %3542 = vmatmul.bf16.gmra.mxu0 %v2842
    %v3543 = vpop.f32.mrf.mxu0
    %v3544 = vadd.f32 %v3531, %v3543
    %v3545 = vpop.f32.mrf.mxu0
    %3546 = vdwg.mxu0
    %3547 = vmatpush.bf16.msra.mxu0 %v2749
    %3548 = vmatpush.bf16.msra.mxu0 %v2745
    %3549 = vmatpush.bf16.msra.mxu0 %v2741
    %3550 = vmatpush.bf16.msra.mxu0 %v2737
    %3551 = vmatpush.bf16.msra.mxu0 %v2733
    %3552 = vmatpush.bf16.msra.mxu0 %v2729
    %3553 = vmatpush.bf16.msra.mxu0 %v2725
    %3554 = vmatpush.bf16.msra.mxu0 %v2721
    %3555 = vmatmul.bf16.gmra.mxu0 %v2843
    %v3556 = vpop.f32.mrf.mxu0
    %v3557 = vadd.f32 %v3544, %v3556
    %v3558 = vpop.f32.mrf.mxu0
    %3559 = vdwg.mxu0
    %3560 = vmatpush.bf16.msra.mxu0 %v2781
    %3561 = vmatpush.bf16.msra.mxu0 %v2777
    %3562 = vmatpush.bf16.msra.mxu0 %v2773
    %3563 = vmatpush.bf16.msra.mxu0 %v2769
    %3564 = vmatpush.bf16.msra.mxu0 %v2765
    %3565 = vmatpush.bf16.msra.mxu0 %v2761
    %3566 = vmatpush.bf16.msra.mxu0 %v2757
    %3567 = vmatpush.bf16.msra.mxu0 %v2753
    %3568 = vmatmul.bf16.gmra.mxu0 %v2844
    %v3569 = vpop.f32.mrf.mxu0
    %v3570 = vadd.f32 %v3557, %v3569
    %v3571 = vpop.f32.mrf.mxu0
    %3572 = vdwg.mxu0
    %3573 = vmatpush.bf16.msra.mxu0 %v2558
    %3574 = vmatpush.bf16.msra.mxu0 %v2554
    %3575 = vmatpush.bf16.msra.mxu0 %v2550
    %3576 = vmatpush.bf16.msra.mxu0 %v2546
    %3577 = vmatpush.bf16.msra.mxu0 %v2542
    %3578 = vmatpush.bf16.msra.mxu0 %v2538
    %3579 = vmatpush.bf16.msra.mxu0 %v2534
    %3580 = vmatpush.bf16.msra.mxu0 %v2530
    %3581 = vmatmul.bf16.gmra.mxu0 %v2837
    %v3582 = vpop.f32.mrf.mxu0
    %v3583 = vadd.f32 0.0, %v3582
    %v3584 = vpop.f32.mrf.mxu0
    %3585 = vdwg.mxu0
    %3586 = vmatpush.bf16.msra.mxu0 %v2590
    %3587 = vmatpush.bf16.msra.mxu0 %v2586
    %3588 = vmatpush.bf16.msra.mxu0 %v2582
    %3589 = vmatpush.bf16.msra.mxu0 %v2578
    %3590 = vmatpush.bf16.msra.mxu0 %v2574
    %3591 = vmatpush.bf16.msra.mxu0 %v2570
    %3592 = vmatpush.bf16.msra.mxu0 %v2566
    %3593 = vmatpush.bf16.msra.mxu0 %v2562
    %3594 = vmatmul.bf16.gmra.mxu0 %v2838
    %v3595 = vpop.f32.mrf.mxu0
    %v3596 = vadd.f32 %v3583, %v3595
    %v3597 = vpop.f32.mrf.mxu0
    %3598 = vdwg.mxu0
    %3599 = vmatpush.bf16.msra.mxu0 %v2622
    %3600 = vmatpush.bf16.msra.mxu0 %v2618
    %3601 = vmatpush.bf16.msra.mxu0 %v2614
    %3602 = vmatpush.bf16.msra.mxu0 %v2610
    %3603 = vmatpush.bf16.msra.mxu0 %v2606
    %3604 = vmatpush.bf16.msra.mxu0 %v2602
    %3605 = vmatpush.bf16.msra.mxu0 %v2598
    %3606 = vmatpush.bf16.msra.mxu0 %v2594
    %3607 = vmatmul.bf16.gmra.mxu0 %v2839
    %v3608 = vpop.f32.mrf.mxu0
    %v3609 = vadd.f32 %v3596, %v3608
    %v3610 = vpop.f32.mrf.mxu0
    %3611 = vdwg.mxu0
    %3612 = vmatpush.bf16.msra.mxu0 %v2654
    %3613 = vmatpush.bf16.msra.mxu0 %v2650
    %3614 = vmatpush.bf16.msra.mxu0 %v2646
    %3615 = vmatpush.bf16.msra.mxu0 %v2642
    %3616 = vmatpush.bf16.msra.mxu0 %v2638
    %3617 = vmatpush.bf16.msra.mxu0 %v2634
    %3618 = vmatpush.bf16.msra.mxu0 %v2630
    %3619 = vmatpush.bf16.msra.mxu0 %v2626
    %3620 = vmatmul.bf16.gmra.mxu0 %v2840
    %v3621 = vpop.f32.mrf.mxu0
    %v3622 = vadd.f32 %v3609, %v3621
    %v3623 = vpop.f32.mrf.mxu0
    %3624 = vdwg.mxu0
    %3625 = vmatpush.bf16.msra.mxu0 %v2686
    %3626 = vmatpush.bf16.msra.mxu0 %v2682
    %3627 = vmatpush.bf16.msra.mxu0 %v2678
    %3628 = vmatpush.bf16.msra.mxu0 %v2674
    %3629 = vmatpush.bf16.msra.mxu0 %v2670
    %3630 = vmatpush.bf16.msra.mxu0 %v2666
    %3631 = vmatpush.bf16.msra.mxu0 %v2662
    %3632 = vmatpush.bf16.msra.mxu0 %v2658
    %3633 = vmatmul.bf16.gmra.mxu0 %v2841
    %v3634 = vpop.f32.mrf.mxu0
    %v3635 = vadd.f32 %v3622, %v3634
    %v3636 = vpop.f32.mrf.mxu0
    %3637 = vdwg.mxu0
    %3638 = vmatpush.bf16.msra.mxu0 %v2718
    %3639 = vmatpush.bf16.msra.mxu0 %v2714
    %3640 = vmatpush.bf16.msra.mxu0 %v2710
    %3641 = vmatpush.bf16.msra.mxu0 %v2706
    %3642 = vmatpush.bf16.msra.mxu0 %v2702
    %3643 = vmatpush.bf16.msra.mxu0 %v2698
    %3644 = vmatpush.bf16.msra.mxu0 %v2694
    %3645 = vmatpush.bf16.msra.mxu0 %v2690
    %3646 = vmatmul.bf16.gmra.mxu0 %v2842
    %v3647 = vpop.f32.mrf.mxu0
    %v3648 = vadd.f32 %v3635, %v3647
    %v3649 = vpop.f32.mrf.mxu0
    %3650 = vdwg.mxu0
    %3651 = vmatpush.bf16.msra.mxu0 %v2750
    %3652 = vmatpush.bf16.msra.mxu0 %v2746
    %3653 = vmatpush.bf16.msra.mxu0 %v2742
    %3654 = vmatpush.bf16.msra.mxu0 %v2738
    %3655 = vmatpush.bf16.msra.mxu0 %v2734
    %3656 = vmatpush.bf16.msra.mxu0 %v2730
    %3657 = vmatpush.bf16.msra.mxu0 %v2726
    %3658 = vmatpush.bf16.msra.mxu0 %v2722
    %3659 = vmatmul.bf16.gmra.mxu0 %v2843
    %v3660 = vpop.f32.mrf.mxu0
    %v3661 = vadd.f32 %v3648, %v3660
    %v3662 = vpop.f32.mrf.mxu0
    %3663 = vdwg.mxu0
    %3664 = vmatpush.bf16.msra.mxu0 %v2782
    %3665 = vmatpush.bf16.msra.mxu0 %v2778
    %3666 = vmatpush.bf16.msra.mxu0 %v2774
    %3667 = vmatpush.bf16.msra.mxu0 %v2770
    %3668 = vmatpush.bf16.msra.mxu0 %v2766
    %3669 = vmatpush.bf16.msra.mxu0 %v2762
    %3670 = vmatpush.bf16.msra.mxu0 %v2758
    %3671 = vmatpush.bf16.msra.mxu0 %v2754
    %3672 = vmatmul.bf16.gmra.mxu0 %v2844
    %v3673 = vpop.f32.mrf.mxu0
    %v3674 = vadd.f32 %v3661, %v3673
    %v3675 = vpop.f32.mrf.mxu0
    %3676 = vdwg.mxu0
    %v3677 = vmul.f32 %v2946, %v2946
    %v3678 = vmul.f32 %v3050, %v3050
    %v3679 = vmul.f32 %v3154, %v3154
    %v3680 = vmul.f32 %v3258, %v3258
    %vm3681 = vcmask 1041408
    %v3682 = vsel %vm3681, %v3677, 0.0
    %v3683 = vsel %vm3681, %v3678, 0.0
    %v3684 = vadd.f32 %v3682, %v3683
    %v3685 = vsel %vm3681, %v3679, 0.0
    %v3686 = vadd.f32 %v3684, %v3685
    %v3687 = vsel %vm3681, %v3680, 0.0
    %v3688 = vadd.f32 %v3686, %v3687
    %3689 = vadd.xlane.f32.xlu0 %v3688
    %v3690 = vpop.xlane.xlu0 %3689
    %v3691 = vmax.f32 %v3690, 1e-24
    %v3692 = vrsqrt.pop %v3691
    %v3693 = vmul.f32 %v3692, %v3691
    %v3694 = vmul.f32 %v3693, %v3692
    %v3695 = vmul.f32 0.5, %v3694
    %v3696 = vsub.f32 1.5, %v3695
    %v3697 = vmul.f32 %v3692, %v3696
    %vm3698 = vweird.f32 %v3691
    %vm3699 = vweird.f32 %v3692
    %vm3700 = vmor %vm3698, %vm3699
    %v3701 = vsel %vm3700, %v3692, %v3697
    %v3702 = vmul.f32 %v2946, %v3701
    %v3703 = vmul.f32 %v3050, %v3701
    %v3704 = vmul.f32 %v3154, %v3701
    %v3705 = vmul.f32 %v3258, %v3701
    %v3706 = vmul.f32 %v3362, %v3362
    %v3707 = vmul.f32 %v3466, %v3466
    %v3708 = vmul.f32 %v3570, %v3570
    %v3709 = vmul.f32 %v3674, %v3674
    %v3710 = vsel %vm3681, %v3706, 0.0
    %v3711 = vsel %vm3681, %v3707, 0.0
    %v3712 = vadd.f32 %v3710, %v3711
    %v3713 = vsel %vm3681, %v3708, 0.0
    %v3714 = vadd.f32 %v3712, %v3713
    %v3715 = vsel %vm3681, %v3709, 0.0
    %v3716 = vadd.f32 %v3714, %v3715
    %3717 = vadd.xlane.f32.xlu0 %v3716
    %v3718 = vpop.xlane.xlu0 %3717
    %v3719 = vmax.f32 %v3718, 1e-24
    %v3720 = vrsqrt.pop %v3719
    %v3721 = vmul.f32 %v3720, %v3719
    %v3722 = vmul.f32 %v3721, %v3720
    %v3723 = vmul.f32 0.5, %v3722
    %v3724 = vsub.f32 1.5, %v3723
    %v3725 = vmul.f32 %v3720, %v3724
    %vm3726 = vweird.f32 %v3719
    %vm3727 = vweird.f32 %v3720
    %vm3728 = vmor %vm3726, %vm3727
    %v3729 = vsel %vm3728, %v3720, %v3725
    %v3730 = vmul.f32 %v3362, %v3729
    %v3731 = vmul.f32 %v3466, %v3729
    %v3732 = vmul.f32 %v3570, %v3729
    %v3733 = vmul.f32 %v3674, %v3729
    %s3734 = scalar_lea.vmem %s4, 1
    %v3735 = vld [vmem:[%s3734] ss:$4 sm:$0x3]
    %v3736 = vpack.c.bf16 %v3702, %v3702
    %v3737 = vpack.c.bf16 %v3703, %v3703
    %v3738 = vpack.c.bf16 %v3704, %v3704
    %v3739 = vpack.c.bf16 %v3705, %v3705
    %v3740 = vld [vmem:[#allocation5] sm:$0xff]
    %v3741 = vld [vmem:[#allocation5 + $0x8] sm:$0xff]
    %v3742 = vld [vmem:[#allocation5 + $0x10] sm:$0xff]
    %v3743 = vld [vmem:[#allocation5 + $0x18] sm:$0xff]
    %v3744 = vld [vmem:[#allocation5 + $0x20] sm:$0xff]
    %v3745 = vld [vmem:[#allocation5 + $0x28] sm:$0xff]
    %v3746 = vld [vmem:[#allocation5 + $0x30] sm:$0xff]
    %v3747 = vld [vmem:[#allocation5 + $0x38] sm:$0xff]
    %v3748 = vld [vmem:[#allocation5 + $0x40] sm:$0xff]
    %v3749 = vld [vmem:[#allocation5 + $0x48] sm:$0xff]
    %v3750 = vld [vmem:[#allocation5 + $0x50] sm:$0xff]
    %v3751 = vld [vmem:[#allocation5 + $0x58] sm:$0xff]
    %v3752 = vld [vmem:[#allocation5 + $0x60] sm:$0xff]
    %v3753 = vld [vmem:[#allocation5 + $0x68] sm:$0xff]
    %v3754 = vld [vmem:[#allocation5 + $0x70] sm:$0xff]
    %v3755 = vld [vmem:[#allocation5 + $0x78] sm:$0xff]
    %v3756 = vld [vmem:[#allocation5 + $0x80] sm:$0xff]
    %v3757 = vld [vmem:[#allocation5 + $0x88] sm:$0xff]
    %v3758 = vld [vmem:[#allocation5 + $0x90] sm:$0xff]
    %v3759 = vld [vmem:[#allocation5 + $0x98] sm:$0xff]
    %v3760 = vld [vmem:[#allocation5 + $0xa0] sm:$0xff]
    %v3761 = vld [vmem:[#allocation5 + $0xa8] sm:$0xff]
    %v3762 = vld [vmem:[#allocation5 + $0xb0] sm:$0xff]
    %v3763 = vld [vmem:[#allocation5 + $0xb8] sm:$0xff]
    %v3764 = vld [vmem:[#allocation5 + $0xc0] sm:$0xff]
    %v3765 = vld [vmem:[#allocation5 + $0xc8] sm:$0xff]
    %v3766 = vld [vmem:[#allocation5 + $0xd0] sm:$0xff]
    %v3767 = vld [vmem:[#allocation5 + $0xd8] sm:$0xff]
    %v3768 = vld [vmem:[#allocation5 + $0xe0] sm:$0xff]
    %v3769 = vld [vmem:[#allocation5 + $0xe8] sm:$0xff]
    %v3770 = vld [vmem:[#allocation5 + $0xf0] sm:$0xff]
    %v3771 = vld [vmem:[#allocation5 + $0xf8] sm:$0xff]
    %v3772 = vld [vmem:[#allocation5 + $0x100] sm:$0xff]
    %v3773 = vld [vmem:[#allocation5 + $0x108] sm:$0xff]
    %v3774 = vld [vmem:[#allocation5 + $0x110] sm:$0xff]
    %v3775 = vld [vmem:[#allocation5 + $0x118] sm:$0xff]
    %v3776 = vld [vmem:[#allocation5 + $0x120] sm:$0xff]
    %v3777 = vld [vmem:[#allocation5 + $0x128] sm:$0xff]
    %v3778 = vld [vmem:[#allocation5 + $0x130] sm:$0xff]
    %v3779 = vld [vmem:[#allocation5 + $0x138] sm:$0xff]
    %v3780 = vld [vmem:[#allocation5 + $0x140] sm:$0xff]
    %v3781 = vld [vmem:[#allocation5 + $0x148] sm:$0xff]
    %v3782 = vld [vmem:[#allocation5 + $0x150] sm:$0xff]
    %v3783 = vld [vmem:[#allocation5 + $0x158] sm:$0xff]
    %v3784 = vld [vmem:[#allocation5 + $0x160] sm:$0xff]
    %v3785 = vld [vmem:[#allocation5 + $0x168] sm:$0xff]
    %v3786 = vld [vmem:[#allocation5 + $0x170] sm:$0xff]
    %v3787 = vld [vmem:[#allocation5 + $0x178] sm:$0xff]
    %v3788 = vld [vmem:[#allocation5 + $0x180] sm:$0xff]
    %v3789 = vld [vmem:[#allocation5 + $0x188] sm:$0xff]
    %v3790 = vld [vmem:[#allocation5 + $0x190] sm:$0xff]
    %v3791 = vld [vmem:[#allocation5 + $0x198] sm:$0xff]
    %v3792 = vld [vmem:[#allocation5 + $0x1a0] sm:$0xff]
    %v3793 = vld [vmem:[#allocation5 + $0x1a8] sm:$0xff]
    %v3794 = vld [vmem:[#allocation5 + $0x1b0] sm:$0xff]
    %v3795 = vld [vmem:[#allocation5 + $0x1b8] sm:$0xff]
    %v3796 = vld [vmem:[#allocation5 + $0x1c0] sm:$0xff]
    %v3797 = vld [vmem:[#allocation5 + $0x1c8] sm:$0xff]
    %v3798 = vld [vmem:[#allocation5 + $0x1d0] sm:$0xff]
    %v3799 = vld [vmem:[#allocation5 + $0x1d8] sm:$0xff]
    %v3800 = vld [vmem:[#allocation5 + $0x1e0] sm:$0xff]
    %v3801 = vld [vmem:[#allocation5 + $0x1e8] sm:$0xff]
    %v3802 = vld [vmem:[#allocation5 + $0x1f0] sm:$0xff]
    %v3803 = vld [vmem:[#allocation5 + $0x1f8] sm:$0xff]
    %v3804 = vpack.c.bf16 %v3730, %v3730
    %v3805 = vpack.c.bf16 %v3731, %v3731
    %v3806 = vpack.c.bf16 %v3732, %v3732
    %v3807 = vpack.c.bf16 %v3733, %v3733
    %v3808 = vld [vmem:[#allocation5 + $0x200] sm:$0xff]
    %v3809 = vld [vmem:[#allocation5 + $0x208] sm:$0xff]
    %v3810 = vld [vmem:[#allocation5 + $0x210] sm:$0xff]
    %v3811 = vld [vmem:[#allocation5 + $0x218] sm:$0xff]
    %v3812 = vld [vmem:[#allocation5 + $0x220] sm:$0xff]
    %v3813 = vld [vmem:[#allocation5 + $0x228] sm:$0xff]
    %v3814 = vld [vmem:[#allocation5 + $0x230] sm:$0xff]
    %v3815 = vld [vmem:[#allocation5 + $0x238] sm:$0xff]
    %v3816 = vld [vmem:[#allocation5 + $0x240] sm:$0xff]
    %v3817 = vld [vmem:[#allocation5 + $0x248] sm:$0xff]
    %v3818 = vld [vmem:[#allocation5 + $0x250] sm:$0xff]
    %v3819 = vld [vmem:[#allocation5 + $0x258] sm:$0xff]
    %v3820 = vld [vmem:[#allocation5 + $0x260] sm:$0xff]
    %v3821 = vld [vmem:[#allocation5 + $0x268] sm:$0xff]
    %v3822 = vld [vmem:[#allocation5 + $0x270] sm:$0xff]
    %v3823 = vld [vmem:[#allocation5 + $0x278] sm:$0xff]
    %v3824 = vld [vmem:[#allocation5 + $0x280] sm:$0xff]
    %v3825 = vld [vmem:[#allocation5 + $0x288] sm:$0xff]
    %v3826 = vld [vmem:[#allocation5 + $0x290] sm:$0xff]
    %v3827 = vld [vmem:[#allocation5 + $0x298] sm:$0xff]
    %v3828 = vld [vmem:[#allocation5 + $0x2a0] sm:$0xff]
    %v3829 = vld [vmem:[#allocation5 + $0x2a8] sm:$0xff]
    %v3830 = vld [vmem:[#allocation5 + $0x2b0] sm:$0xff]
    %v3831 = vld [vmem:[#allocation5 + $0x2b8] sm:$0xff]
    %v3832 = vld [vmem:[#allocation5 + $0x2c0] sm:$0xff]
    %v3833 = vld [vmem:[#allocation5 + $0x2c8] sm:$0xff]
    %v3834 = vld [vmem:[#allocation5 + $0x2d0] sm:$0xff]
    %v3835 = vld [vmem:[#allocation5 + $0x2d8] sm:$0xff]
    %v3836 = vld [vmem:[#allocation5 + $0x2e0] sm:$0xff]
    %v3837 = vld [vmem:[#allocation5 + $0x2e8] sm:$0xff]
    %v3838 = vld [vmem:[#allocation5 + $0x2f0] sm:$0xff]
    %v3839 = vld [vmem:[#allocation5 + $0x2f8] sm:$0xff]
    %v3840 = vld [vmem:[#allocation5 + $0x300] sm:$0xff]
    %v3841 = vld [vmem:[#allocation5 + $0x308] sm:$0xff]
    %v3842 = vld [vmem:[#allocation5 + $0x310] sm:$0xff]
    %v3843 = vld [vmem:[#allocation5 + $0x318] sm:$0xff]
    %v3844 = vld [vmem:[#allocation5 + $0x320] sm:$0xff]
    %v3845 = vld [vmem:[#allocation5 + $0x328] sm:$0xff]
    %v3846 = vld [vmem:[#allocation5 + $0x330] sm:$0xff]
    %v3847 = vld [vmem:[#allocation5 + $0x338] sm:$0xff]
    %v3848 = vld [vmem:[#allocation5 + $0x340] sm:$0xff]
    %v3849 = vld [vmem:[#allocation5 + $0x348] sm:$0xff]
    %v3850 = vld [vmem:[#allocation5 + $0x350] sm:$0xff]
    %v3851 = vld [vmem:[#allocation5 + $0x358] sm:$0xff]
    %v3852 = vld [vmem:[#allocation5 + $0x360] sm:$0xff]
    %v3853 = vld [vmem:[#allocation5 + $0x368] sm:$0xff]
    %v3854 = vld [vmem:[#allocation5 + $0x370] sm:$0xff]
    %v3855 = vld [vmem:[#allocation5 + $0x378] sm:$0xff]
    %v3856 = vld [vmem:[#allocation5 + $0x380] sm:$0xff]
    %v3857 = vld [vmem:[#allocation5 + $0x388] sm:$0xff]
    %v3858 = vld [vmem:[#allocation5 + $0x390] sm:$0xff]
    %v3859 = vld [vmem:[#allocation5 + $0x398] sm:$0xff]
    %v3860 = vld [vmem:[#allocation5 + $0x3a0] sm:$0xff]
    %v3861 = vld [vmem:[#allocation5 + $0x3a8] sm:$0xff]
    %v3862 = vld [vmem:[#allocation5 + $0x3b0] sm:$0xff]
    %v3863 = vld [vmem:[#allocation5 + $0x3b8] sm:$0xff]
    %v3864 = vld [vmem:[#allocation5 + $0x3c0] sm:$0xff]
    %v3865 = vld [vmem:[#allocation5 + $0x3c8] sm:$0xff]
    %v3866 = vld [vmem:[#allocation5 + $0x3d0] sm:$0xff]
    %v3867 = vld [vmem:[#allocation5 + $0x3d8] sm:$0xff]
    %v3868 = vld [vmem:[#allocation5 + $0x3e0] sm:$0xff]
    %v3869 = vld [vmem:[#allocation5 + $0x3e8] sm:$0xff]
    %v3870 = vld [vmem:[#allocation5 + $0x3f0] sm:$0xff]
    %v3871 = vld [vmem:[#allocation5 + $0x3f8] sm:$0xff]
    %v3936 = vunpack.c.l.b16 %v3808
    %v3937 = vunpack.c.h.b16 %v3808
    %v3938 = vunpack.c.l.b16 %v3809
    %v3939 = vunpack.c.h.b16 %v3809
    %v3940 = vunpack.c.l.b16 %v3810
    %v3941 = vunpack.c.h.b16 %v3810
    %v3942 = vunpack.c.l.b16 %v3811
    %v3943 = vunpack.c.h.b16 %v3811
    %v3944 = vunpack.c.l.b16 %v3812
    %v3945 = vunpack.c.h.b16 %v3812
    %v3946 = vunpack.c.l.b16 %v3813
    %v3947 = vunpack.c.h.b16 %v3813
    %v3948 = vunpack.c.l.b16 %v3814
    %v3949 = vunpack.c.h.b16 %v3814
    %v3950 = vunpack.c.l.b16 %v3815
    %v3951 = vunpack.c.h.b16 %v3815
    %v3952 = vunpack.c.l.b16 %v3816
    %v3953 = vunpack.c.h.b16 %v3816
    %v3954 = vunpack.c.l.b16 %v3817
    %v3955 = vunpack.c.h.b16 %v3817
    %v3956 = vunpack.c.l.b16 %v3818
    %v3957 = vunpack.c.h.b16 %v3818
    %v3958 = vunpack.c.l.b16 %v3819
    %v3959 = vunpack.c.h.b16 %v3819
    %v3960 = vunpack.c.l.b16 %v3820
    %v3961 = vunpack.c.h.b16 %v3820
    %v3962 = vunpack.c.l.b16 %v3821
    %v3963 = vunpack.c.h.b16 %v3821
    %v3964 = vunpack.c.l.b16 %v3822
    %v3965 = vunpack.c.h.b16 %v3822
    %v3966 = vunpack.c.l.b16 %v3823
    %v3967 = vunpack.c.h.b16 %v3823
    %v3968 = vunpack.c.l.b16 %v3824
    %v3969 = vunpack.c.h.b16 %v3824
    %v3970 = vunpack.c.l.b16 %v3825
    %v3971 = vunpack.c.h.b16 %v3825
    %v3972 = vunpack.c.l.b16 %v3826
    %v3973 = vunpack.c.h.b16 %v3826
    %v3974 = vunpack.c.l.b16 %v3827
    %v3975 = vunpack.c.h.b16 %v3827
    %v3976 = vunpack.c.l.b16 %v3828
    %v3977 = vunpack.c.h.b16 %v3828
    %v3978 = vunpack.c.l.b16 %v3829
    %v3979 = vunpack.c.h.b16 %v3829
    %v3980 = vunpack.c.l.b16 %v3830
    %v3981 = vunpack.c.h.b16 %v3830
    %v3982 = vunpack.c.l.b16 %v3831
    %v3983 = vunpack.c.h.b16 %v3831
    %v3984 = vunpack.c.l.b16 %v3832
    %v3985 = vunpack.c.h.b16 %v3832
    %v3986 = vunpack.c.l.b16 %v3833
    %v3987 = vunpack.c.h.b16 %v3833
    %v3988 = vunpack.c.l.b16 %v3834
    %v3989 = vunpack.c.h.b16 %v3834
    %v3990 = vunpack.c.l.b16 %v3835
    %v3991 = vunpack.c.h.b16 %v3835
    %v3992 = vunpack.c.l.b16 %v3836
    %v3993 = vunpack.c.h.b16 %v3836
    %v3994 = vunpack.c.l.b16 %v3837
    %v3995 = vunpack.c.h.b16 %v3837
    %v3996 = vunpack.c.l.b16 %v3838
    %v3997 = vunpack.c.h.b16 %v3838
    %v3998 = vunpack.c.l.b16 %v3839
    %v3999 = vunpack.c.h.b16 %v3839
    %v4000 = vunpack.c.l.b16 %v3840
    %v4001 = vunpack.c.h.b16 %v3840
    %v4002 = vunpack.c.l.b16 %v3841
    %v4003 = vunpack.c.h.b16 %v3841
    %v4004 = vunpack.c.l.b16 %v3842
    %v4005 = vunpack.c.h.b16 %v3842
    %v4006 = vunpack.c.l.b16 %v3843
    %v4007 = vunpack.c.h.b16 %v3843
    %v4008 = vunpack.c.l.b16 %v3844
    %v4009 = vunpack.c.h.b16 %v3844
    %v4010 = vunpack.c.l.b16 %v3845
    %v4011 = vunpack.c.h.b16 %v3845
    %v4012 = vunpack.c.l.b16 %v3846
    %v4013 = vunpack.c.h.b16 %v3846
    %v4014 = vunpack.c.l.b16 %v3847
    %v4015 = vunpack.c.h.b16 %v3847
    %v4016 = vunpack.c.l.b16 %v3848
    %v4017 = vunpack.c.h.b16 %v3848
    %v4018 = vunpack.c.l.b16 %v3849
    %v4019 = vunpack.c.h.b16 %v3849
    %v4020 = vunpack.c.l.b16 %v3850
    %v4021 = vunpack.c.h.b16 %v3850
    %v4022 = vunpack.c.l.b16 %v3851
    %v4023 = vunpack.c.h.b16 %v3851
    %v4024 = vunpack.c.l.b16 %v3852
    %v4025 = vunpack.c.h.b16 %v3852
    %v4026 = vunpack.c.l.b16 %v3853
    %v4027 = vunpack.c.h.b16 %v3853
    %v4028 = vunpack.c.l.b16 %v3854
    %v4029 = vunpack.c.h.b16 %v3854
    %v4030 = vunpack.c.l.b16 %v3855
    %v4031 = vunpack.c.h.b16 %v3855
    %v4032 = vunpack.c.l.b16 %v3856
    %v4033 = vunpack.c.h.b16 %v3856
    %v4034 = vunpack.c.l.b16 %v3857
    %v4035 = vunpack.c.h.b16 %v3857
    %v4036 = vunpack.c.l.b16 %v3858
    %v4037 = vunpack.c.h.b16 %v3858
    %v4038 = vunpack.c.l.b16 %v3859
    %v4039 = vunpack.c.h.b16 %v3859
    %v4040 = vunpack.c.l.b16 %v3860
    %v4041 = vunpack.c.h.b16 %v3860
    %v4042 = vunpack.c.l.b16 %v3861
    %v4043 = vunpack.c.h.b16 %v3861
    %v4044 = vunpack.c.l.b16 %v3862
    %v4045 = vunpack.c.h.b16 %v3862
    %v4046 = vunpack.c.l.b16 %v3863
    %v4047 = vunpack.c.h.b16 %v3863
    %v4048 = vunpack.c.l.b16 %v3864
    %v4049 = vunpack.c.h.b16 %v3864
    %v4050 = vunpack.c.l.b16 %v3865
    %v4051 = vunpack.c.h.b16 %v3865
    %v4052 = vunpack.c.l.b16 %v3866
    %v4053 = vunpack.c.h.b16 %v3866
    %v4054 = vunpack.c.l.b16 %v3867
    %v4055 = vunpack.c.h.b16 %v3867
    %v4056 = vunpack.c.l.b16 %v3868
    %v4057 = vunpack.c.h.b16 %v3868
    %v4058 = vunpack.c.l.b16 %v3869
    %v4059 = vunpack.c.h.b16 %v3869
    %v4060 = vunpack.c.l.b16 %v3870
    %v4061 = vunpack.c.h.b16 %v3870
    %v4062 = vunpack.c.l.b16 %v3871
    %v4063 = vunpack.c.h.b16 %v3871
    %v4064 = vpack.c.b16 %v3938, %v3936
    %v4065 = vpack.c.b16 %v3939, %v3937
    %v4066 = vpack.c.b16 %v3942, %v3940
    %v4067 = vpack.c.b16 %v3943, %v3941
    %v4068 = vpack.c.b16 %v3946, %v3944
    %v4069 = vpack.c.b16 %v3947, %v3945
    %v4070 = vpack.c.b16 %v3950, %v3948
    %v4071 = vpack.c.b16 %v3951, %v3949
    %v4072 = vpack.c.b16 %v3954, %v3952
    %v4073 = vpack.c.b16 %v3955, %v3953
    %v4074 = vpack.c.b16 %v3958, %v3956
    %v4075 = vpack.c.b16 %v3959, %v3957
    %v4076 = vpack.c.b16 %v3962, %v3960
    %v4077 = vpack.c.b16 %v3963, %v3961
    %v4078 = vpack.c.b16 %v3966, %v3964
    %v4079 = vpack.c.b16 %v3967, %v3965
    %v4080 = vpack.c.b16 %v3970, %v3968
    %v4081 = vpack.c.b16 %v3971, %v3969
    %v4082 = vpack.c.b16 %v3974, %v3972
    %v4083 = vpack.c.b16 %v3975, %v3973
    %v4084 = vpack.c.b16 %v3978, %v3976
    %v4085 = vpack.c.b16 %v3979, %v3977
    %v4086 = vpack.c.b16 %v3982, %v3980
    %v4087 = vpack.c.b16 %v3983, %v3981
    %v4088 = vpack.c.b16 %v3986, %v3984
    %v4089 = vpack.c.b16 %v3987, %v3985
    %v4090 = vpack.c.b16 %v3990, %v3988
    %v4091 = vpack.c.b16 %v3991, %v3989
    %v4092 = vpack.c.b16 %v3994, %v3992
    %v4093 = vpack.c.b16 %v3995, %v3993
    %v4094 = vpack.c.b16 %v3998, %v3996
    %v4095 = vpack.c.b16 %v3999, %v3997
    %v4096 = vpack.c.b16 %v4002, %v4000
    %v4097 = vpack.c.b16 %v4003, %v4001
    %v4098 = vpack.c.b16 %v4006, %v4004
    %v4099 = vpack.c.b16 %v4007, %v4005
    %v4100 = vpack.c.b16 %v4010, %v4008
    %v4101 = vpack.c.b16 %v4011, %v4009
    %v4102 = vpack.c.b16 %v4014, %v4012
    %v4103 = vpack.c.b16 %v4015, %v4013
    %v4104 = vpack.c.b16 %v4018, %v4016
    %v4105 = vpack.c.b16 %v4019, %v4017
    %v4106 = vpack.c.b16 %v4022, %v4020
    %v4107 = vpack.c.b16 %v4023, %v4021
    %v4108 = vpack.c.b16 %v4026, %v4024
    %v4109 = vpack.c.b16 %v4027, %v4025
    %v4110 = vpack.c.b16 %v4030, %v4028
    %v4111 = vpack.c.b16 %v4031, %v4029
    %v4112 = vpack.c.b16 %v4034, %v4032
    %v4113 = vpack.c.b16 %v4035, %v4033
    %v4114 = vpack.c.b16 %v4038, %v4036
    %v4115 = vpack.c.b16 %v4039, %v4037
    %v4116 = vpack.c.b16 %v4042, %v4040
    %v4117 = vpack.c.b16 %v4043, %v4041
    %v4118 = vpack.c.b16 %v4046, %v4044
    %v4119 = vpack.c.b16 %v4047, %v4045
    %v4120 = vpack.c.b16 %v4050, %v4048
    %v4121 = vpack.c.b16 %v4051, %v4049
    %v4122 = vpack.c.b16 %v4054, %v4052
    %v4123 = vpack.c.b16 %v4055, %v4053
    %v4124 = vpack.c.b16 %v4058, %v4056
    %v4125 = vpack.c.b16 %v4059, %v4057
    %v4126 = vpack.c.b16 %v4062, %v4060
    %v4127 = vpack.c.b16 %v4063, %v4061
    %4192 = vmatpush.bf16.msra.mxu0 %v4078
    %4193 = vmatpush.bf16.msra.mxu0 %v4076
    %4194 = vmatpush.bf16.msra.mxu0 %v4074
    %4195 = vmatpush.bf16.msra.mxu0 %v4072
    %4196 = vmatpush.bf16.msra.mxu0 %v4070
    %4197 = vmatpush.bf16.msra.mxu0 %v4068
    %4198 = vmatpush.bf16.msra.mxu0 %v4066
    %4199 = vmatpush.bf16.msra.mxu0 %v4064
    %4200 = vmatmul.bf16.gmra.mxu0 %v3804
    %v4201 = vpop.f32.mrf.mxu0
    %v4202 = vadd.f32 0.0, %v4201
    %v4203 = vpop.f32.mrf.mxu0
    %4204 = vdwg.mxu0
    %4205 = vmatpush.bf16.msra.mxu0 %v4094
    %4206 = vmatpush.bf16.msra.mxu0 %v4092
    %4207 = vmatpush.bf16.msra.mxu0 %v4090
    %4208 = vmatpush.bf16.msra.mxu0 %v4088
    %4209 = vmatpush.bf16.msra.mxu0 %v4086
    %4210 = vmatpush.bf16.msra.mxu0 %v4084
    %4211 = vmatpush.bf16.msra.mxu0 %v4082
    %4212 = vmatpush.bf16.msra.mxu0 %v4080
    %4213 = vmatmul.bf16.gmra.mxu0 %v3805
    %v4214 = vpop.f32.mrf.mxu0
    %v4215 = vadd.f32 %v4202, %v4214
    %v4216 = vpop.f32.mrf.mxu0
    %4217 = vdwg.mxu0
    %4218 = vmatpush.bf16.msra.mxu0 %v4110
    %4219 = vmatpush.bf16.msra.mxu0 %v4108
    %4220 = vmatpush.bf16.msra.mxu0 %v4106
    %4221 = vmatpush.bf16.msra.mxu0 %v4104
    %4222 = vmatpush.bf16.msra.mxu0 %v4102
    %4223 = vmatpush.bf16.msra.mxu0 %v4100
    %4224 = vmatpush.bf16.msra.mxu0 %v4098
    %4225 = vmatpush.bf16.msra.mxu0 %v4096
    %4226 = vmatmul.bf16.gmra.mxu0 %v3806
    %v4227 = vpop.f32.mrf.mxu0
    %v4228 = vadd.f32 %v4215, %v4227
    %v4229 = vpop.f32.mrf.mxu0
    %4230 = vdwg.mxu0
    %4231 = vmatpush.bf16.msra.mxu0 %v4126
    %4232 = vmatpush.bf16.msra.mxu0 %v4124
    %4233 = vmatpush.bf16.msra.mxu0 %v4122
    %4234 = vmatpush.bf16.msra.mxu0 %v4120
    %4235 = vmatpush.bf16.msra.mxu0 %v4118
    %4236 = vmatpush.bf16.msra.mxu0 %v4116
    %4237 = vmatpush.bf16.msra.mxu0 %v4114
    %4238 = vmatpush.bf16.msra.mxu0 %v4112
    %4239 = vmatmul.bf16.gmra.mxu0 %v3807
    %v4240 = vpop.f32.mrf.mxu0
    %v4241 = vadd.f32 %v4228, %v4240
    %v4242 = vpop.f32.mrf.mxu0
    %4243 = vdwg.mxu0
    %4244 = vmatpush.bf16.msra.mxu0 %v4079
    %4245 = vmatpush.bf16.msra.mxu0 %v4077
    %4246 = vmatpush.bf16.msra.mxu0 %v4075
    %4247 = vmatpush.bf16.msra.mxu0 %v4073
    %4248 = vmatpush.bf16.msra.mxu0 %v4071
    %4249 = vmatpush.bf16.msra.mxu0 %v4069
    %4250 = vmatpush.bf16.msra.mxu0 %v4067
    %4251 = vmatpush.bf16.msra.mxu0 %v4065
    %4252 = vmatmul.bf16.gmra.mxu0 %v3804
    %v4253 = vpop.f32.mrf.mxu0
    %v4254 = vadd.f32 0.0, %v4253
    %v4255 = vpop.f32.mrf.mxu0
    %4256 = vdwg.mxu0
    %4257 = vmatpush.bf16.msra.mxu0 %v4095
    %4258 = vmatpush.bf16.msra.mxu0 %v4093
    %4259 = vmatpush.bf16.msra.mxu0 %v4091
    %4260 = vmatpush.bf16.msra.mxu0 %v4089
    %4261 = vmatpush.bf16.msra.mxu0 %v4087
    %4262 = vmatpush.bf16.msra.mxu0 %v4085
    %4263 = vmatpush.bf16.msra.mxu0 %v4083
    %4264 = vmatpush.bf16.msra.mxu0 %v4081
    %4265 = vmatmul.bf16.gmra.mxu0 %v3805
    %v4266 = vpop.f32.mrf.mxu0
    %v4267 = vadd.f32 %v4254, %v4266
    %v4268 = vpop.f32.mrf.mxu0
    %4269 = vdwg.mxu0
    %4270 = vmatpush.bf16.msra.mxu0 %v4111
    %4271 = vmatpush.bf16.msra.mxu0 %v4109
    %4272 = vmatpush.bf16.msra.mxu0 %v4107
    %4273 = vmatpush.bf16.msra.mxu0 %v4105
    %4274 = vmatpush.bf16.msra.mxu0 %v4103
    %4275 = vmatpush.bf16.msra.mxu0 %v4101
    %4276 = vmatpush.bf16.msra.mxu0 %v4099
    %4277 = vmatpush.bf16.msra.mxu0 %v4097
    %4278 = vmatmul.bf16.gmra.mxu0 %v3806
    %v4279 = vpop.f32.mrf.mxu0
    %v4280 = vadd.f32 %v4267, %v4279
    %v4281 = vpop.f32.mrf.mxu0
    %4282 = vdwg.mxu0
    %4283 = vmatpush.bf16.msra.mxu0 %v4127
    %4284 = vmatpush.bf16.msra.mxu0 %v4125
    %4285 = vmatpush.bf16.msra.mxu0 %v4123
    %4286 = vmatpush.bf16.msra.mxu0 %v4121
    %4287 = vmatpush.bf16.msra.mxu0 %v4119
    %4288 = vmatpush.bf16.msra.mxu0 %v4117
    %4289 = vmatpush.bf16.msra.mxu0 %v4115
    %4290 = vmatpush.bf16.msra.mxu0 %v4113
    %4291 = vmatmul.bf16.gmra.mxu0 %v3807
    %v4292 = vpop.f32.mrf.mxu0
    %v4293 = vadd.f32 %v4280, %v4292
    %v4294 = vpop.f32.mrf.mxu0
    %4295 = vdwg.mxu0
    %v4360 = vunpack.c.l.b16 %v3740
    %v4361 = vunpack.c.h.b16 %v3740
    %v4362 = vunpack.c.l.b16 %v3741
    %v4363 = vunpack.c.h.b16 %v3741
    %v4364 = vunpack.c.l.b16 %v3742
    %v4365 = vunpack.c.h.b16 %v3742
    %v4366 = vunpack.c.l.b16 %v3743
    %v4367 = vunpack.c.h.b16 %v3743
    %v4368 = vunpack.c.l.b16 %v3744
    %v4369 = vunpack.c.h.b16 %v3744
    %v4370 = vunpack.c.l.b16 %v3745
    %v4371 = vunpack.c.h.b16 %v3745
    %v4372 = vunpack.c.l.b16 %v3746
    %v4373 = vunpack.c.h.b16 %v3746
    %v4374 = vunpack.c.l.b16 %v3747
    %v4375 = vunpack.c.h.b16 %v3747
    %v4376 = vunpack.c.l.b16 %v3748
    %v4377 = vunpack.c.h.b16 %v3748
    %v4378 = vunpack.c.l.b16 %v3749
    %v4379 = vunpack.c.h.b16 %v3749
    %v4380 = vunpack.c.l.b16 %v3750
    %v4381 = vunpack.c.h.b16 %v3750
    %v4382 = vunpack.c.l.b16 %v3751
    %v4383 = vunpack.c.h.b16 %v3751
    %v4384 = vunpack.c.l.b16 %v3752
    %v4385 = vunpack.c.h.b16 %v3752
    %v4386 = vunpack.c.l.b16 %v3753
    %v4387 = vunpack.c.h.b16 %v3753
    %v4388 = vunpack.c.l.b16 %v3754
    %v4389 = vunpack.c.h.b16 %v3754
    %v4390 = vunpack.c.l.b16 %v3755
    %v4391 = vunpack.c.h.b16 %v3755
    %v4392 = vunpack.c.l.b16 %v3756
    %v4393 = vunpack.c.h.b16 %v3756
    %v4394 = vunpack.c.l.b16 %v3757
    %v4395 = vunpack.c.h.b16 %v3757
    %v4396 = vunpack.c.l.b16 %v3758
    %v4397 = vunpack.c.h.b16 %v3758
    %v4398 = vunpack.c.l.b16 %v3759
    %v4399 = vunpack.c.h.b16 %v3759
    %v4400 = vunpack.c.l.b16 %v3760
    %v4401 = vunpack.c.h.b16 %v3760
    %v4402 = vunpack.c.l.b16 %v3761
    %v4403 = vunpack.c.h.b16 %v3761
    %v4404 = vunpack.c.l.b16 %v3762
    %v4405 = vunpack.c.h.b16 %v3762
    %v4406 = vunpack.c.l.b16 %v3763
    %v4407 = vunpack.c.h.b16 %v3763
    %v4408 = vunpack.c.l.b16 %v3764
    %v4409 = vunpack.c.h.b16 %v3764
    %v4410 = vunpack.c.l.b16 %v3765
    %v4411 = vunpack.c.h.b16 %v3765
    %v4412 = vunpack.c.l.b16 %v3766
    %v4413 = vunpack.c.h.b16 %v3766
    %v4414 = vunpack.c.l.b16 %v3767
    %v4415 = vunpack.c.h.b16 %v3767
    %v4416 = vunpack.c.l.b16 %v3768
    %v4417 = vunpack.c.h.b16 %v3768
    %v4418 = vunpack.c.l.b16 %v3769
    %v4419 = vunpack.c.h.b16 %v3769
    %v4420 = vunpack.c.l.b16 %v3770
    %v4421 = vunpack.c.h.b16 %v3770
    %v4422 = vunpack.c.l.b16 %v3771
    %v4423 = vunpack.c.h.b16 %v3771
    %v4424 = vunpack.c.l.b16 %v3772
    %v4425 = vunpack.c.h.b16 %v3772
    %v4426 = vunpack.c.l.b16 %v3773
    %v4427 = vunpack.c.h.b16 %v3773
    %v4428 = vunpack.c.l.b16 %v3774
    %v4429 = vunpack.c.h.b16 %v3774
    %v4430 = vunpack.c.l.b16 %v3775
    %v4431 = vunpack.c.h.b16 %v3775
    %v4432 = vunpack.c.l.b16 %v3776
    %v4433 = vunpack.c.h.b16 %v3776
    %v4434 = vunpack.c.l.b16 %v3777
    %v4435 = vunpack.c.h.b16 %v3777
    %v4436 = vunpack.c.l.b16 %v3778
    %v4437 = vunpack.c.h.b16 %v3778
    %v4438 = vunpack.c.l.b16 %v3779
    %v4439 = vunpack.c.h.b16 %v3779
    %v4440 = vunpack.c.l.b16 %v3780
    %v4441 = vunpack.c.h.b16 %v3780
    %v4442 = vunpack.c.l.b16 %v3781
    %v4443 = vunpack.c.h.b16 %v3781
    %v4444 = vunpack.c.l.b16 %v3782
    %v4445 = vunpack.c.h.b16 %v3782
    %v4446 = vunpack.c.l.b16 %v3783
    %v4447 = vunpack.c.h.b16 %v3783
    %v4448 = vunpack.c.l.b16 %v3784
    %v4449 = vunpack.c.h.b16 %v3784
    %v4450 = vunpack.c.l.b16 %v3785
    %v4451 = vunpack.c.h.b16 %v3785
    %v4452 = vunpack.c.l.b16 %v3786
    %v4453 = vunpack.c.h.b16 %v3786
    %v4454 = vunpack.c.l.b16 %v3787
    %v4455 = vunpack.c.h.b16 %v3787
    %v4456 = vunpack.c.l.b16 %v3788
    %v4457 = vunpack.c.h.b16 %v3788
    %v4458 = vunpack.c.l.b16 %v3789
    %v4459 = vunpack.c.h.b16 %v3789
    %v4460 = vunpack.c.l.b16 %v3790
    %v4461 = vunpack.c.h.b16 %v3790
    %v4462 = vunpack.c.l.b16 %v3791
    %v4463 = vunpack.c.h.b16 %v3791
    %v4464 = vunpack.c.l.b16 %v3792
    %v4465 = vunpack.c.h.b16 %v3792
    %v4466 = vunpack.c.l.b16 %v3793
    %v4467 = vunpack.c.h.b16 %v3793
    %v4468 = vunpack.c.l.b16 %v3794
    %v4469 = vunpack.c.h.b16 %v3794
    %v4470 = vunpack.c.l.b16 %v3795
    %v4471 = vunpack.c.h.b16 %v3795
    %v4472 = vunpack.c.l.b16 %v3796
    %v4473 = vunpack.c.h.b16 %v3796
    %v4474 = vunpack.c.l.b16 %v3797
    %v4475 = vunpack.c.h.b16 %v3797
    %v4476 = vunpack.c.l.b16 %v3798
    %v4477 = vunpack.c.h.b16 %v3798
    %v4478 = vunpack.c.l.b16 %v3799
    %v4479 = vunpack.c.h.b16 %v3799
    %v4480 = vunpack.c.l.b16 %v3800
    %v4481 = vunpack.c.h.b16 %v3800
    %v4482 = vunpack.c.l.b16 %v3801
    %v4483 = vunpack.c.h.b16 %v3801
    %v4484 = vunpack.c.l.b16 %v3802
    %v4485 = vunpack.c.h.b16 %v3802
    %v4486 = vunpack.c.l.b16 %v3803
    %v4487 = vunpack.c.h.b16 %v3803
    %v4488 = vpack.c.b16 %v4362, %v4360
    %v4489 = vpack.c.b16 %v4363, %v4361
    %v4490 = vpack.c.b16 %v4366, %v4364
    %v4491 = vpack.c.b16 %v4367, %v4365
    %v4492 = vpack.c.b16 %v4370, %v4368
    %v4493 = vpack.c.b16 %v4371, %v4369
    %v4494 = vpack.c.b16 %v4374, %v4372
    %v4495 = vpack.c.b16 %v4375, %v4373
    %v4496 = vpack.c.b16 %v4378, %v4376
    %v4497 = vpack.c.b16 %v4379, %v4377
    %v4498 = vpack.c.b16 %v4382, %v4380
    %v4499 = vpack.c.b16 %v4383, %v4381
    %v4500 = vpack.c.b16 %v4386, %v4384
    %v4501 = vpack.c.b16 %v4387, %v4385
    %v4502 = vpack.c.b16 %v4390, %v4388
    %v4503 = vpack.c.b16 %v4391, %v4389
    %v4504 = vpack.c.b16 %v4394, %v4392
    %v4505 = vpack.c.b16 %v4395, %v4393
    %v4506 = vpack.c.b16 %v4398, %v4396
    %v4507 = vpack.c.b16 %v4399, %v4397
    %v4508 = vpack.c.b16 %v4402, %v4400
    %v4509 = vpack.c.b16 %v4403, %v4401
    %v4510 = vpack.c.b16 %v4406, %v4404
    %v4511 = vpack.c.b16 %v4407, %v4405
    %v4512 = vpack.c.b16 %v4410, %v4408
    %v4513 = vpack.c.b16 %v4411, %v4409
    %v4514 = vpack.c.b16 %v4414, %v4412
    %v4515 = vpack.c.b16 %v4415, %v4413
    %v4516 = vpack.c.b16 %v4418, %v4416
    %v4517 = vpack.c.b16 %v4419, %v4417
    %v4518 = vpack.c.b16 %v4422, %v4420
    %v4519 = vpack.c.b16 %v4423, %v4421
    %v4520 = vpack.c.b16 %v4426, %v4424
    %v4521 = vpack.c.b16 %v4427, %v4425
    %v4522 = vpack.c.b16 %v4430, %v4428
    %v4523 = vpack.c.b16 %v4431, %v4429
    %v4524 = vpack.c.b16 %v4434, %v4432
    %v4525 = vpack.c.b16 %v4435, %v4433
    %v4526 = vpack.c.b16 %v4438, %v4436
    %v4527 = vpack.c.b16 %v4439, %v4437
    %v4528 = vpack.c.b16 %v4442, %v4440
    %v4529 = vpack.c.b16 %v4443, %v4441
    %v4530 = vpack.c.b16 %v4446, %v4444
    %v4531 = vpack.c.b16 %v4447, %v4445
    %v4532 = vpack.c.b16 %v4450, %v4448
    %v4533 = vpack.c.b16 %v4451, %v4449
    %v4534 = vpack.c.b16 %v4454, %v4452
    %v4535 = vpack.c.b16 %v4455, %v4453
    %v4536 = vpack.c.b16 %v4458, %v4456
    %v4537 = vpack.c.b16 %v4459, %v4457
    %v4538 = vpack.c.b16 %v4462, %v4460
    %v4539 = vpack.c.b16 %v4463, %v4461
    %v4540 = vpack.c.b16 %v4466, %v4464
    %v4541 = vpack.c.b16 %v4467, %v4465
    %v4542 = vpack.c.b16 %v4470, %v4468
    %v4543 = vpack.c.b16 %v4471, %v4469
    %v4544 = vpack.c.b16 %v4474, %v4472
    %v4545 = vpack.c.b16 %v4475, %v4473
    %v4546 = vpack.c.b16 %v4478, %v4476
    %v4547 = vpack.c.b16 %v4479, %v4477
    %v4548 = vpack.c.b16 %v4482, %v4480
    %v4549 = vpack.c.b16 %v4483, %v4481
    %v4550 = vpack.c.b16 %v4486, %v4484
    %v4551 = vpack.c.b16 %v4487, %v4485
    %4616 = vmatpush.bf16.msra.mxu0 %v4502
    %4617 = vmatpush.bf16.msra.mxu0 %v4500
    %4618 = vmatpush.bf16.msra.mxu0 %v4498
    %4619 = vmatpush.bf16.msra.mxu0 %v4496
    %4620 = vmatpush.bf16.msra.mxu0 %v4494
    %4621 = vmatpush.bf16.msra.mxu0 %v4492
    %4622 = vmatpush.bf16.msra.mxu0 %v4490
    %4623 = vmatpush.bf16.msra.mxu0 %v4488
    %4624 = vmatmul.bf16.gmra.mxu0 %v3736
    %v4625 = vpop.f32.mrf.mxu0
    %v4626 = vadd.f32 %v4241, %v4625
    %v4627 = vpop.f32.mrf.mxu0
    %4628 = vdwg.mxu0
    %4629 = vmatpush.bf16.msra.mxu0 %v4518
    %4630 = vmatpush.bf16.msra.mxu0 %v4516
    %4631 = vmatpush.bf16.msra.mxu0 %v4514
    %4632 = vmatpush.bf16.msra.mxu0 %v4512
    %4633 = vmatpush.bf16.msra.mxu0 %v4510
    %4634 = vmatpush.bf16.msra.mxu0 %v4508
    %4635 = vmatpush.bf16.msra.mxu0 %v4506
    %4636 = vmatpush.bf16.msra.mxu0 %v4504
    %4637 = vmatmul.bf16.gmra.mxu0 %v3737
    %v4638 = vpop.f32.mrf.mxu0
    %v4639 = vadd.f32 %v4626, %v4638
    %v4640 = vpop.f32.mrf.mxu0
    %4641 = vdwg.mxu0
    %4642 = vmatpush.bf16.msra.mxu0 %v4534
    %4643 = vmatpush.bf16.msra.mxu0 %v4532
    %4644 = vmatpush.bf16.msra.mxu0 %v4530
    %4645 = vmatpush.bf16.msra.mxu0 %v4528
    %4646 = vmatpush.bf16.msra.mxu0 %v4526
    %4647 = vmatpush.bf16.msra.mxu0 %v4524
    %4648 = vmatpush.bf16.msra.mxu0 %v4522
    %4649 = vmatpush.bf16.msra.mxu0 %v4520
    %4650 = vmatmul.bf16.gmra.mxu0 %v3738
    %v4651 = vpop.f32.mrf.mxu0
    %v4652 = vadd.f32 %v4639, %v4651
    %v4653 = vpop.f32.mrf.mxu0
    %4654 = vdwg.mxu0
    %4655 = vmatpush.bf16.msra.mxu0 %v4550
    %4656 = vmatpush.bf16.msra.mxu0 %v4548
    %4657 = vmatpush.bf16.msra.mxu0 %v4546
    %4658 = vmatpush.bf16.msra.mxu0 %v4544
    %4659 = vmatpush.bf16.msra.mxu0 %v4542
    %4660 = vmatpush.bf16.msra.mxu0 %v4540
    %4661 = vmatpush.bf16.msra.mxu0 %v4538
    %4662 = vmatpush.bf16.msra.mxu0 %v4536
    %4663 = vmatmul.bf16.gmra.mxu0 %v3739
    %v4664 = vpop.f32.mrf.mxu0
    %v4665 = vadd.f32 %v4652, %v4664
    %v4666 = vpop.f32.mrf.mxu0
    %4667 = vdwg.mxu0
    %4668 = vmatpush.bf16.msra.mxu0 %v4503
    %4669 = vmatpush.bf16.msra.mxu0 %v4501
    %4670 = vmatpush.bf16.msra.mxu0 %v4499
    %4671 = vmatpush.bf16.msra.mxu0 %v4497
    %4672 = vmatpush.bf16.msra.mxu0 %v4495
    %4673 = vmatpush.bf16.msra.mxu0 %v4493
    %4674 = vmatpush.bf16.msra.mxu0 %v4491
    %4675 = vmatpush.bf16.msra.mxu0 %v4489
    %4676 = vmatmul.bf16.gmra.mxu0 %v3736
    %v4677 = vpop.f32.mrf.mxu0
    %v4678 = vadd.f32 %v4293, %v4677
    %v4679 = vpop.f32.mrf.mxu0
    %4680 = vdwg.mxu0
    %4681 = vmatpush.bf16.msra.mxu0 %v4519
    %4682 = vmatpush.bf16.msra.mxu0 %v4517
    %4683 = vmatpush.bf16.msra.mxu0 %v4515
    %4684 = vmatpush.bf16.msra.mxu0 %v4513
    %4685 = vmatpush.bf16.msra.mxu0 %v4511
    %4686 = vmatpush.bf16.msra.mxu0 %v4509
    %4687 = vmatpush.bf16.msra.mxu0 %v4507
    %4688 = vmatpush.bf16.msra.mxu0 %v4505
    %4689 = vmatmul.bf16.gmra.mxu0 %v3737
    %v4690 = vpop.f32.mrf.mxu0
    %v4691 = vadd.f32 %v4678, %v4690
    %v4692 = vpop.f32.mrf.mxu0
    %4693 = vdwg.mxu0
    %4694 = vmatpush.bf16.msra.mxu0 %v4535
    %4695 = vmatpush.bf16.msra.mxu0 %v4533
    %4696 = vmatpush.bf16.msra.mxu0 %v4531
    %4697 = vmatpush.bf16.msra.mxu0 %v4529
    %4698 = vmatpush.bf16.msra.mxu0 %v4527
    %4699 = vmatpush.bf16.msra.mxu0 %v4525
    %4700 = vmatpush.bf16.msra.mxu0 %v4523
    %4701 = vmatpush.bf16.msra.mxu0 %v4521
    %4702 = vmatmul.bf16.gmra.mxu0 %v3738
    %v4703 = vpop.f32.mrf.mxu0
    %v4704 = vadd.f32 %v4691, %v4703
    %v4705 = vpop.f32.mrf.mxu0
    %4706 = vdwg.mxu0
    %4707 = vmatpush.bf16.msra.mxu0 %v4551
    %4708 = vmatpush.bf16.msra.mxu0 %v4549
    %4709 = vmatpush.bf16.msra.mxu0 %v4547
    %4710 = vmatpush.bf16.msra.mxu0 %v4545
    %4711 = vmatpush.bf16.msra.mxu0 %v4543
    %4712 = vmatpush.bf16.msra.mxu0 %v4541
    %4713 = vmatpush.bf16.msra.mxu0 %v4539
    %4714 = vmatpush.bf16.msra.mxu0 %v4537
    %4715 = vmatmul.bf16.gmra.mxu0 %v3739
    %v4716 = vpop.f32.mrf.mxu0
    %v4717 = vadd.f32 %v4704, %v4716
    %v4718 = vpop.f32.mrf.mxu0
    %4719 = vdwg.mxu0
    %v4721 = vperm.slane %v3735, 0
    %v4722 = vperm.slane %v3735, 1
    %v4725 = vadd.f32 %v4665, %v4721
    %v4726 = vadd.f32 %v4717, %v4722
    %v4727 = vmax.f32 %v4725, 0.0
    %v4728 = vmax.f32 %v4726, 0.0
    %s4729 = scalar_lea.vmem %s4, 9
    %v4730 = vld [vmem:[%s4729] ss:$4 sm:$0x3]
    %v4731 = vld [vmem:[%s4 + $0x2] sm:$0x1]
    %v4733 = vperm.slane %v4730, 0
    %v4734 = vperm.slane %v4730, 1
    %v4737 = vmul.f32 %v4727, %v4733
    %v4738 = vmul.f32 %v4728, %v4734
    %v4739 = vsel %vm3681, %v4737, 0.0
    %v4740 = vsel %vm3681, %v4738, 0.0
    %v4741 = vadd.f32 %v4739, %v4740
    %4742 = vadd.xlane.f32.xlu0 %v4741
    %v4743 = vpop.xlane.xlu0 %4742
    %v4744 = vperm.slane %v4731, 0
    %v4745 = vadd.f32 %v4743, %v4744
    %v4746 = vxor.u32 %v4745, 2147483648
    %v4747 = vmul.f32 %v4746, 1.442695
    %v4748 = vpow.pop %v4747
    %v4749 = vadd.f32 %v4748, 1.0
    %v4750 = vrcp.pop %v4749
    %v4751 = vmul.f32 %v4749, %v4750
    %v4752 = vsub.f32 1.0, %v4751
    %v4753 = vmul.f32 %v4750, %v4752
    %v4754 = vadd.f32 %v4750, %v4753
    %vm4755 = vweird.f32 %v4749
    %vm4756 = vweird.f32 %v4750
    %vm4757 = vmor %vm4755, %vm4756
    %v4758 = vsel %vm4757, %v4750, %v4754
    %v4759 = vand.u32 2147483647, %v4749
    %vm4760 = vcmp.eq.f32.partialorder %v4759, 8.507059e+37
    %v4761 = vand.u32 %v4749, 2147483648
    %v4762 = vor.u32 1.1754944e-38, %v4761
    %v4763 = vsel %vm4760, %v4762, %v4758
    %v4764 = vmul.f32 1.0, %v4763
    %4766 = vset.pattern.permute.xlu0 0
    %4767 = vperm.xlu0 %4766, %v4764
    %v4768 = vpop.permute.xlu0 %4767
    %4770 = vst [vmem:[#allocation7] sm:$0x3] %v4768
    // Predicated region
    $region30: #{siamese_forward_slab.1} parent=1 // pred_check
      _
    $region31: #{siamese_forward_slab.1} parent=1 // pred_check_branch
      %4772 = sbr.rel (0) target = $region33
    $region32: #{siamese_forward_slab.1} parent=1 // pred_region
      %4774 = vsyncadd [#allocation4], 0
      %s4776 = sshll.u32 [#allocation7], 4
      %s4777 = int_to_ptr.vmem [resolvable:$true] %s4776
      %s4778 = sshll.u32 %s5, 4
      %s4779 = int_to_ptr.hbm [resolvable:$true] %s4778
      %4781 = dma.vmem_to_hbm [thread:$0]  %s4777, 32, %s4779, [#allocation4]
    $region33: #{siamese_forward_slab.1} parent=1 // pred_fallthru
      _
    // Predicated region
    $region34: #{siamese_forward_slab.1} parent=1 // pred_check
      _
    $region35: #{siamese_forward_slab.1} parent=1 // pred_check_branch
      %4783 = sbr.rel (0) target = $region37
    $region36: #{siamese_forward_slab.1} parent=1 // pred_region
      %4785 = dma.done [#allocation4], 32
    $region37: #{siamese_forward_slab.1} parent=1 // pred_fallthru
      _
    %4786 = vsyncpa [#allocation3], 1
    %4787 = vsyncpa [#allocation6], 1
    %4788 = vsyncpa [#allocation4], 1

</llo_original>
